<compile_context>
chip_gen: v6e
topology: v6e:2x2x1
jax: 0.10.0
libtpu: 0.0.40
codegen_flags: <defaults>
</compile_context>

<pallas_src>
import jax
import jax.numpy as jnp
from jax.experimental import pallas as pl
from jax.experimental.pallas import tpu as pltpu

# ----------------------------- config (small) --------------------------------
B, S = 2, 8
N = B * S               # flattened token axis
VOCAB = 64 + 2          # "resize_token_embeddings(vocab_size + 2)"
D = 64                  # scaled-down stand-in for hidden=768
H = 4                   # attention heads
DH = D // H
F = 128                 # scaled-down FFN dim
L = 2                   # encoder layers
NUM_TAGS = 5            # stand-in for len(TAG2IDX[sentiment])
PAD_ID = 1              # xlm-roberta pad token id (mask = input_ids != 1)
LANE = 128              # lane-dense classifier output width

LAYER_KEYS = ('wq', 'bq', 'wk', 'bk', 'wv', 'bv', 'wo', 'bo',
              'ln1g', 'ln1b', 'w1', 'b1', 'w2', 'b2', 'ln2g', 'ln2b')
N_LAYER_W = len(LAYER_KEYS)


def _layernorm(h, g, b):
    mu = jnp.mean(h, axis=-1, keepdims=True)
    var = jnp.mean((h - mu) ** 2, axis=-1, keepdims=True)
    return (h - mu) * jax.lax.rsqrt(var + 1e-5) * g + b


# --------------------------- fused Pallas kernel ------------------------------
def fused_absa_kernel(*refs):
    """L encoder layers + classifier head in one invocation, weights in VMEM."""
    x_ref, bias_ref = refs[0], refs[1]
    cls_w_ref, cls_b_ref = refs[-3], refs[-2]
    out_ref = refs[-1]
    layer_refs = refs[2:2 + L * N_LAYER_W]

    x = x_ref[...]                     # (N, D) f32, batch flattened into rows
    neg_bias = bias_ref[...]           # (N, N) f32: 0 keep / -1e9 pad or cross-batch
    scale = 1.0 / (DH ** 0.5)

    for l in range(L):                 # static unroll over layers
        (wq, bq, wk, bk, wv, bv, wo, bo,
         ln1g, ln1b, w1, b1, w2, b2, ln2g, ln2b) = \
            layer_refs[l * N_LAYER_W:(l + 1) * N_LAYER_W]

        xb = x.astype(jnp.bfloat16)

        # multi-head self-attention; per-head weights are pre-split so every op
        # is a clean 2-D matmul (no lane slicing / concat / transpose).
        attn = jnp.zeros((N, D), jnp.float32)
        for h in range(H):             # static unroll over heads
            qh = jnp.dot(xb, wq[h], preferred_element_type=jnp.float32) + bq[h]
            kh = jnp.dot(xb, wk[h], preferred_element_type=jnp.float32) + bk[h]
            vh = jnp.dot(xb, wv[h], preferred_element_type=jnp.float32) + bv[h]
            s = jax.lax.dot_general(
                qh.astype(jnp.bfloat16), kh.astype(jnp.bfloat16),
                (((1,), (1,)), ((), ())),
                preferred_element_type=jnp.float32) * scale
            s = s + neg_bias           # masks padding keys and cross-batch pairs
            s = s - jnp.max(s, axis=-1, keepdims=True)
            p = jnp.exp(s)             # f32 softmax on VPU/EUP
            p = p * pl.reciprocal(jnp.sum(p, axis=-1, keepdims=True), approx=True)
            ctx = jnp.dot(p.astype(jnp.bfloat16), vh.astype(jnp.bfloat16),
                          preferred_element_type=jnp.float32)
            # summed per-head output projection replaces concat + big matmul
            attn = attn + jnp.dot(ctx.astype(jnp.bfloat16), wo[h],
                                  preferred_element_type=jnp.float32)
        attn = attn + bo[0]

        # residual + post-LN #1 (roberta-style), f32
        h1 = _layernorm(x + attn, ln1g[0], ln1b[0])

        # FFN (bf16 MXU, f32 accumulate / activation)
        f = jnp.dot(h1.astype(jnp.bfloat16), w1[...],
                    preferred_element_type=jnp.float32) + b1[0]
        # TODO(synk): HF xlm-roberta uses exact (erf) GELU; tanh approx used here.
        f = jax.nn.gelu(f, approximate=True)
        f = jnp.dot(f.astype(jnp.bfloat16), w2[...],
                    preferred_element_type=jnp.float32) + b2[0]

        # residual + post-LN #2
        x = _layernorm(h1 + f, ln2g[0], ln2b[0])

    # nn.Dropout(0.1) is identity at inference.
    # classifier head, lane-dense (N, 128); real tags are columns [:NUM_TAGS].
    out_ref[...] = (jnp.dot(x.astype(jnp.bfloat16), cls_w_ref[...],
                            preferred_element_type=jnp.float32) + cls_b_ref[0])


# --------------------------- wrapper ------------------------------------------
def run_fused(x_tokens, attn_bias, params):
    flat = [x_tokens, attn_bias]
    for lp in params['layers']:
        flat.extend(lp[k] for k in LAYER_KEYS)
    flat.extend([params['cls_w'], params['cls_b']])
    return pl.pallas_call(
        fused_absa_kernel,
        out_shape=jax.ShapeDtypeStruct((N, LANE), jnp.float32),
        compiler_params=pltpu.CompilerParams(vmem_limit_bytes=32 * 1024 * 1024),
    )(*flat)


# --------------------------- params & forward ---------------------------------
def init_params(key):
    def nrm(k, shape, scale=0.02):
        return scale * jax.random.normal(k, shape, dtype=jnp.float32)

    keys = jax.random.split(key, 2 + L)
    params = {
        'emb': nrm(keys[0], (VOCAB, D)),
        'emb_ln_g': jnp.ones((D,), jnp.float32),
        'emb_ln_b': jnp.zeros((D,), jnp.float32),
        'layers': [],
    }
    cls_w = nrm(keys[1], (D, NUM_TAGS))
    # zero-padded to a full 128-lane output slab; bf16 MXU operand
    params['cls_w'] = (jnp.zeros((D, LANE), jnp.float32)
                       .at[:, :NUM_TAGS].set(cls_w).astype(jnp.bfloat16))
    params['cls_b'] = jnp.zeros((1, LANE), jnp.float32)

    for l in range(L):
        lk = jax.random.split(keys[2 + l], 6)
        wq = nrm(lk[0], (D, D))
        wk = nrm(lk[1], (D, D))
        wv = nrm(lk[2], (D, D))
        wo = nrm(lk[3], (D, D))
        params['layers'].append({
            # pre-split per-head projections: (H, D, DH), bf16 MXU operands
            'wq': wq.reshape(D, H, DH).transpose(1, 0, 2).astype(jnp.bfloat16),
            'bq': jnp.zeros((H, 1, DH), jnp.float32),
            'wk': wk.reshape(D, H, DH).transpose(1, 0, 2).astype(jnp.bfloat16),
            'bk': jnp.zeros((H, 1, DH), jnp.float32),
            'wv': wv.reshape(D, H, DH).transpose(1, 0, 2).astype(jnp.bfloat16),
            'bv': jnp.zeros((H, 1, DH), jnp.float32),
            # output projection pre-split by head rows: (H, DH, D)
            'wo': wo.reshape(H, DH, D).astype(jnp.bfloat16),
            'bo': jnp.zeros((1, D), jnp.float32),
            'ln1g': jnp.ones((1, D), jnp.float32),
            'ln1b': jnp.zeros((1, D), jnp.float32),
            'w1': nrm(lk[4], (D, F)).astype(jnp.bfloat16),
            'b1': jnp.zeros((1, F), jnp.float32),
            'w2': nrm(lk[5], (F, D)).astype(jnp.bfloat16),
            'b2': jnp.zeros((1, D), jnp.float32),
            'ln2g': jnp.ones((1, D), jnp.float32),
            'ln2b': jnp.zeros((1, D), jnp.float32),
        })
    return params


def absa_forward(input_ids, params):
    # attention_mask = (input_ids != 1), as in the xlm-roberta branch.
    # Flattened tokens -> block-diagonal (same-batch) + key-padding additive bias,
    # computed once and reused by both encoder layers.
    key_valid = (input_ids != PAD_ID).reshape(N)
    batch_ids = jnp.repeat(jnp.arange(B, dtype=jnp.int32), S)
    allowed = (batch_ids[:, None] == batch_ids[None, :]) & key_valid[None, :]
    attn_bias = jnp.where(allowed, 0.0, -1e9).astype(jnp.float32)    # (N, N)

    # glue: embedding lookup + embedding LayerNorm (plain JAX)
    x = jnp.take(params['emb'], input_ids.reshape(N), axis=0)        # (N, D)
    x = _layernorm(x, params['emb_ln_g'], params['emb_ln_b'])

    # fused Pallas hot path: 2 encoder layers + classifier head
    logits = run_fused(x, attn_bias, params)                         # (N, 128)
    return logits.reshape(B, S, LANE)[:, :, :NUM_TAGS]               # (B, S, NUM_TAGS)


# ------------------------------- main ------------------------------------------
if __name__ == "__main__":
    key = jax.random.PRNGKey(0)
    pkey, ikey = jax.random.split(key)
    params = init_params(pkey)

    input_ids = jax.random.randint(ikey, (B, S), 2, VOCAB, dtype=jnp.int32)
    input_ids = input_ids.at[1, -3:].set(PAD_ID)   # a few padding tokens

    fwd = jax.jit(absa_forward)
    out = fwd(input_ids, params)
    out = jax.block_until_ready(out)

    assert out.shape == (B, S, NUM_TAGS), out.shape
    assert out.dtype == jnp.float32
    assert bool(jnp.all(jnp.isfinite(out)))
    print("KERNEL_OK")
</pallas_src>

<mosaic_0001>
module attributes {stable_mosaic.version = 11 : i64} {
  func.func @fused_absa_kernel(%arg0: memref<16x64xf32, #tpu.memory_space<vmem>>, %arg1: memref<16x16xf32, #tpu.memory_space<vmem>>, %arg2: memref<4x64x16xbf16, #tpu.memory_space<vmem>>, %arg3: memref<4x1x16xf32, #tpu.memory_space<vmem>>, %arg4: memref<4x64x16xbf16, #tpu.memory_space<vmem>>, %arg5: memref<4x1x16xf32, #tpu.memory_space<vmem>>, %arg6: memref<4x64x16xbf16, #tpu.memory_space<vmem>>, %arg7: memref<4x1x16xf32, #tpu.memory_space<vmem>>, %arg8: memref<4x16x64xbf16, #tpu.memory_space<vmem>>, %arg9: memref<1x64xf32, #tpu.memory_space<vmem>>, %arg10: memref<1x64xf32, #tpu.memory_space<vmem>>, %arg11: memref<1x64xf32, #tpu.memory_space<vmem>>, %arg12: memref<64x128xbf16, #tpu.memory_space<vmem>>, %arg13: memref<1x128xf32, #tpu.memory_space<vmem>>, %arg14: memref<128x64xbf16, #tpu.memory_space<vmem>>, %arg15: memref<1x64xf32, #tpu.memory_space<vmem>>, %arg16: memref<1x64xf32, #tpu.memory_space<vmem>>, %arg17: memref<1x64xf32, #tpu.memory_space<vmem>>, %arg18: memref<4x64x16xbf16, #tpu.memory_space<vmem>>, %arg19: memref<4x1x16xf32, #tpu.memory_space<vmem>>, %arg20: memref<4x64x16xbf16, #tpu.memory_space<vmem>>, %arg21: memref<4x1x16xf32, #tpu.memory_space<vmem>>, %arg22: memref<4x64x16xbf16, #tpu.memory_space<vmem>>, %arg23: memref<4x1x16xf32, #tpu.memory_space<vmem>>, %arg24: memref<4x16x64xbf16, #tpu.memory_space<vmem>>, %arg25: memref<1x64xf32, #tpu.memory_space<vmem>>, %arg26: memref<1x64xf32, #tpu.memory_space<vmem>>, %arg27: memref<1x64xf32, #tpu.memory_space<vmem>>, %arg28: memref<64x128xbf16, #tpu.memory_space<vmem>>, %arg29: memref<1x128xf32, #tpu.memory_space<vmem>>, %arg30: memref<128x64xbf16, #tpu.memory_space<vmem>>, %arg31: memref<1x64xf32, #tpu.memory_space<vmem>>, %arg32: memref<1x64xf32, #tpu.memory_space<vmem>>, %arg33: memref<1x64xf32, #tpu.memory_space<vmem>>, %arg34: memref<64x128xbf16, #tpu.memory_space<vmem>>, %arg35: memref<1x128xf32, #tpu.memory_space<vmem>>, %arg36: memref<16x128xf32, #tpu.memory_space<vmem>>) attributes {dimension_semantics = [], scalar_prefetch = 0 : i64, scratch_operands = 0 : i64, tpu.core_type = #tpu.core_type<tc>} {
    %c0 = arith.constant 0 : index
    %c0_0 = arith.constant 0 : index
    %0 = vector.load %arg0[%c0, %c0_0] : memref<16x64xf32, #tpu.memory_space<vmem>>, vector<16x64xf32>
    %c0_1 = arith.constant 0 : index
    %c0_2 = arith.constant 0 : index
    %1 = vector.load %arg1[%c0_1, %c0_2] : memref<16x16xf32, #tpu.memory_space<vmem>>, vector<16x16xf32>
    %2 = arith.truncf %0 : vector<16x64xf32> to vector<16x64xbf16>
    %cst = arith.constant 0.000000e+00 : f32
    %3 = vector.broadcast %cst : f32 to vector<16x64xf32>
    %c0_3 = arith.constant 0 : index
    %c0_4 = arith.constant 0 : index
    %c0_5 = arith.constant 0 : index
    %4 = vector.load %arg2[%c0_3, %c0_4, %c0_5] : memref<4x64x16xbf16, #tpu.memory_space<vmem>>, vector<1x64x16xbf16>
    %5 = vector.shape_cast %4 : vector<1x64x16xbf16> to vector<64x16xbf16>
    %cst_6 = arith.constant dense<0.000000e+00> : vector<16x16xf32>
    %6 = tpu.matmul %2, %5, %cst_6 {dimension_numbers = #tpu.dot_dimension_numbers<[1], [0], [0], [1], [0, 0, 1, 1], [], []>} : vector<16x64xbf16>, vector<64x16xbf16>, vector<16x16xf32> -> vector<16x16xf32>
    %c0_7 = arith.constant 0 : index
    %c0_8 = arith.constant 0 : index
    %c0_9 = arith.constant 0 : index
    %7 = vector.load %arg3[%c0_7, %c0_8, %c0_9] : memref<4x1x16xf32, #tpu.memory_space<vmem>>, vector<1x1x16xf32>
    %8 = vector.shape_cast %7 : vector<1x1x16xf32> to vector<1x16xf32>
    %9 = vector.broadcast %8 : vector<1x16xf32> to vector<16x16xf32>
    %10 = arith.addf %6, %9 : vector<16x16xf32>
    %c0_10 = arith.constant 0 : index
    %c0_11 = arith.constant 0 : index
    %c0_12 = arith.constant 0 : index
    %11 = vector.load %arg4[%c0_10, %c0_11, %c0_12] : memref<4x64x16xbf16, #tpu.memory_space<vmem>>, vector<1x64x16xbf16>
    %12 = vector.shape_cast %11 : vector<1x64x16xbf16> to vector<64x16xbf16>
    %cst_13 = arith.constant dense<0.000000e+00> : vector<16x16xf32>
    %13 = tpu.matmul %2, %12, %cst_13 {dimension_numbers = #tpu.dot_dimension_numbers<[1], [0], [0], [1], [0, 0, 1, 1], [], []>} : vector<16x64xbf16>, vector<64x16xbf16>, vector<16x16xf32> -> vector<16x16xf32>
    %c0_14 = arith.constant 0 : index
    %c0_15 = arith.constant 0 : index
    %c0_16 = arith.constant 0 : index
    %14 = vector.load %arg5[%c0_14, %c0_15, %c0_16] : memref<4x1x16xf32, #tpu.memory_space<vmem>>, vector<1x1x16xf32>
    %15 = vector.shape_cast %14 : vector<1x1x16xf32> to vector<1x16xf32>
    %16 = vector.broadcast %15 : vector<1x16xf32> to vector<16x16xf32>
    %17 = arith.addf %13, %16 : vector<16x16xf32>
    %c0_17 = arith.constant 0 : index
    %c0_18 = arith.constant 0 : index
    %c0_19 = arith.constant 0 : index
    %18 = vector.load %arg6[%c0_17, %c0_18, %c0_19] : memref<4x64x16xbf16, #tpu.memory_space<vmem>>, vector<1x64x16xbf16>
    %19 = vector.shape_cast %18 : vector<1x64x16xbf16> to vector<64x16xbf16>
    %cst_20 = arith.constant dense<0.000000e+00> : vector<16x16xf32>
    %20 = tpu.matmul %2, %19, %cst_20 {dimension_numbers = #tpu.dot_dimension_numbers<[1], [0], [0], [1], [0, 0, 1, 1], [], []>} : vector<16x64xbf16>, vector<64x16xbf16>, vector<16x16xf32> -> vector<16x16xf32>
    %c0_21 = arith.constant 0 : index
    %c0_22 = arith.constant 0 : index
    %c0_23 = arith.constant 0 : index
    %21 = vector.load %arg7[%c0_21, %c0_22, %c0_23] : memref<4x1x16xf32, #tpu.memory_space<vmem>>, vector<1x1x16xf32>
    %22 = vector.shape_cast %21 : vector<1x1x16xf32> to vector<1x16xf32>
    %23 = vector.broadcast %22 : vector<1x16xf32> to vector<16x16xf32>
    %24 = arith.addf %20, %23 : vector<16x16xf32>
    %25 = arith.truncf %10 : vector<16x16xf32> to vector<16x16xbf16>
    %26 = arith.truncf %17 : vector<16x16xf32> to vector<16x16xbf16>
    %cst_24 = arith.constant dense<0.000000e+00> : vector<16x16xf32>
    %27 = tpu.matmul %25, %26, %cst_24 {dimension_numbers = #tpu.dot_dimension_numbers<[1], [1], [0], [0], [0, 0, 1, 0], [], []>} : vector<16x16xbf16>, vector<16x16xbf16>, vector<16x16xf32> -> vector<16x16xf32>
    %cst_25 = arith.constant 2.500000e-01 : f32
    %28 = vector.broadcast %cst_25 : f32 to vector<16x16xf32>
    %29 = arith.mulf %27, %28 : vector<16x16xf32>
    %30 = arith.addf %29, %1 : vector<16x16xf32>
    %cst_26 = arith.constant dense<0xFF800000> : vector<16xf32>
    %31 = vector.multi_reduction <maximumf>, %30, %cst_26 [1] : vector<16x16xf32> to vector<16xf32>
    %32 = vector.shape_cast %31 : vector<16xf32> to vector<16x1xf32>
    %33 = vector.broadcast %32 : vector<16x1xf32> to vector<16x16xf32>
    %34 = arith.subf %30, %33 : vector<16x16xf32>
    %35 = math.exp %34 : vector<16x16xf32>
    %cst_27 = arith.constant dense<0.000000e+00> : vector<16xf32>
    %36 = vector.multi_reduction <add>, %35, %cst_27 [1] : vector<16x16xf32> to vector<16xf32>
    %37 = vector.shape_cast %36 : vector<16xf32> to vector<16x1xf32>
    %38 = tpu.reciprocal %37 {approx = true} : vector<16x1xf32> -> vector<16x1xf32>
    %39 = vector.broadcast %38 : vector<16x1xf32> to vector<16x16xf32>
    %40 = arith.mulf %35, %39 : vector<16x16xf32>
    %41 = arith.truncf %40 : vector<16x16xf32> to vector<16x16xbf16>
    %42 = arith.truncf %24 : vector<16x16xf32> to vector<16x16xbf16>
    %cst_28 = arith.constant dense<0.000000e+00> : vector<16x16xf32>
    %43 = tpu.matmul %41, %42, %cst_28 {dimension_numbers = #tpu.dot_dimension_numbers<[1], [0], [0], [1], [0, 0, 1, 1], [], []>} : vector<16x16xbf16>, vector<16x16xbf16>, vector<16x16xf32> -> vector<16x16xf32>
    %44 = arith.truncf %43 : vector<16x16xf32> to vector<16x16xbf16>
    %c0_29 = arith.constant 0 : index
    %c0_30 = arith.constant 0 : index
    %c0_31 = arith.constant 0 : index
    %45 = vector.load %arg8[%c0_29, %c0_30, %c0_31] : memref<4x16x64xbf16, #tpu.memory_space<vmem>>, vector<1x16x64xbf16>
    %46 = vector.shape_cast %45 : vector<1x16x64xbf16> to vector<16x64xbf16>
    %cst_32 = arith.constant dense<0.000000e+00> : vector<16x64xf32>
    %47 = tpu.matmul %44, %46, %cst_32 {dimension_numbers = #tpu.dot_dimension_numbers<[1], [0], [0], [1], [0, 0, 1, 1], [], []>} : vector<16x16xbf16>, vector<16x64xbf16>, vector<16x64xf32> -> vector<16x64xf32>
    %48 = arith.addf %3, %47 : vector<16x64xf32>
    %c1 = arith.constant 1 : index
    %c0_33 = arith.constant 0 : index
    %c0_34 = arith.constant 0 : index
    %49 = vector.load %arg2[%c1, %c0_33, %c0_34] : memref<4x64x16xbf16, #tpu.memory_space<vmem>>, vector<1x64x16xbf16>
    %50 = vector.shape_cast %49 : vector<1x64x16xbf16> to vector<64x16xbf16>
    %cst_35 = arith.constant dense<0.000000e+00> : vector<16x16xf32>
    %51 = tpu.matmul %2, %50, %cst_35 {dimension_numbers = #tpu.dot_dimension_numbers<[1], [0], [0], [1], [0, 0, 1, 1], [], []>} : vector<16x64xbf16>, vector<64x16xbf16>, vector<16x16xf32> -> vector<16x16xf32>
    %c1_36 = arith.constant 1 : index
    %c0_37 = arith.constant 0 : index
    %c0_38 = arith.constant 0 : index
    %52 = vector.load %arg3[%c1_36, %c0_37, %c0_38] : memref<4x1x16xf32, #tpu.memory_space<vmem>>, vector<1x1x16xf32>
    %53 = vector.shape_cast %52 : vector<1x1x16xf32> to vector<1x16xf32>
    %54 = vector.broadcast %53 : vector<1x16xf32> to vector<16x16xf32>
    %55 = arith.addf %51, %54 : vector<16x16xf32>
    %c1_39 = arith.constant 1 : index
    %c0_40 = arith.constant 0 : index
    %c0_41 = arith.constant 0 : index
    %56 = vector.load %arg4[%c1_39, %c0_40, %c0_41] : memref<4x64x16xbf16, #tpu.memory_space<vmem>>, vector<1x64x16xbf16>
    %57 = vector.shape_cast %56 : vector<1x64x16xbf16> to vector<64x16xbf16>
    %cst_42 = arith.constant dense<0.000000e+00> : vector<16x16xf32>
    %58 = tpu.matmul %2, %57, %cst_42 {dimension_numbers = #tpu.dot_dimension_numbers<[1], [0], [0], [1], [0, 0, 1, 1], [], []>} : vector<16x64xbf16>, vector<64x16xbf16>, vector<16x16xf32> -> vector<16x16xf32>
    %c1_43 = arith.constant 1 : index
    %c0_44 = arith.constant 0 : index
    %c0_45 = arith.constant 0 : index
    %59 = vector.load %arg5[%c1_43, %c0_44, %c0_45] : memref<4x1x16xf32, #tpu.memory_space<vmem>>, vector<1x1x16xf32>
    %60 = vector.shape_cast %59 : vector<1x1x16xf32> to vector<1x16xf32>
    %61 = vector.broadcast %60 : vector<1x16xf32> to vector<16x16xf32>
    %62 = arith.addf %58, %61 : vector<16x16xf32>
    %c1_46 = arith.constant 1 : index
    %c0_47 = arith.constant 0 : index
    %c0_48 = arith.constant 0 : index
    %63 = vector.load %arg6[%c1_46, %c0_47, %c0_48] : memref<4x64x16xbf16, #tpu.memory_space<vmem>>, vector<1x64x16xbf16>
    %64 = vector.shape_cast %63 : vector<1x64x16xbf16> to vector<64x16xbf16>
    %cst_49 = arith.constant dense<0.000000e+00> : vector<16x16xf32>
    %65 = tpu.matmul %2, %64, %cst_49 {dimension_numbers = #tpu.dot_dimension_numbers<[1], [0], [0], [1], [0, 0, 1, 1], [], []>} : vector<16x64xbf16>, vector<64x16xbf16>, vector<16x16xf32> -> vector<16x16xf32>
    %c1_50 = arith.constant 1 : index
    %c0_51 = arith.constant 0 : index
    %c0_52 = arith.constant 0 : index
    %66 = vector.load %arg7[%c1_50, %c0_51, %c0_52] : memref<4x1x16xf32, #tpu.memory_space<vmem>>, vector<1x1x16xf32>
    %67 = vector.shape_cast %66 : vector<1x1x16xf32> to vector<1x16xf32>
    %68 = vector.broadcast %67 : vector<1x16xf32> to vector<16x16xf32>
    %69 = arith.addf %65, %68 : vector<16x16xf32>
    %70 = arith.truncf %55 : vector<16x16xf32> to vector<16x16xbf16>
    %71 = arith.truncf %62 : vector<16x16xf32> to vector<16x16xbf16>
    %cst_53 = arith.constant dense<0.000000e+00> : vector<16x16xf32>
    %72 = tpu.matmul %70, %71, %cst_53 {dimension_numbers = #tpu.dot_dimension_numbers<[1], [1], [0], [0], [0, 0, 1, 0], [], []>} : vector<16x16xbf16>, vector<16x16xbf16>, vector<16x16xf32> -> vector<16x16xf32>
    %cst_54 = arith.constant 2.500000e-01 : f32
    %73 = vector.broadcast %cst_54 : f32 to vector<16x16xf32>
    %74 = arith.mulf %72, %73 : vector<16x16xf32>
    %75 = arith.addf %74, %1 : vector<16x16xf32>
    %cst_55 = arith.constant dense<0xFF800000> : vector<16xf32>
    %76 = vector.multi_reduction <maximumf>, %75, %cst_55 [1] : vector<16x16xf32> to vector<16xf32>
    %77 = vector.shape_cast %76 : vector<16xf32> to vector<16x1xf32>
    %78 = vector.broadcast %77 : vector<16x1xf32> to vector<16x16xf32>
    %79 = arith.subf %75, %78 : vector<16x16xf32>
    %80 = math.exp %79 : vector<16x16xf32>
    %cst_56 = arith.constant dense<0.000000e+00> : vector<16xf32>
    %81 = vector.multi_reduction <add>, %80, %cst_56 [1] : vector<16x16xf32> to vector<16xf32>
    %82 = vector.shape_cast %81 : vector<16xf32> to vector<16x1xf32>
    %83 = tpu.reciprocal %82 {approx = true} : vector<16x1xf32> -> vector<16x1xf32>
    %84 = vector.broadcast %83 : vector<16x1xf32> to vector<16x16xf32>
    %85 = arith.mulf %80, %84 : vector<16x16xf32>
    %86 = arith.truncf %85 : vector<16x16xf32> to vector<16x16xbf16>
    %87 = arith.truncf %69 : vector<16x16xf32> to vector<16x16xbf16>
    %cst_57 = arith.constant dense<0.000000e+00> : vector<16x16xf32>
    %88 = tpu.matmul %86, %87, %cst_57 {dimension_numbers = #tpu.dot_dimension_numbers<[1], [0], [0], [1], [0, 0, 1, 1], [], []>} : vector<16x16xbf16>, vector<16x16xbf16>, vector<16x16xf32> -> vector<16x16xf32>
    %89 = arith.truncf %88 : vector<16x16xf32> to vector<16x16xbf16>
    %c1_58 = arith.constant 1 : index
    %c0_59 = arith.constant 0 : index
    %c0_60 = arith.constant 0 : index
    %90 = vector.load %arg8[%c1_58, %c0_59, %c0_60] : memref<4x16x64xbf16, #tpu.memory_space<vmem>>, vector<1x16x64xbf16>
    %91 = vector.shape_cast %90 : vector<1x16x64xbf16> to vector<16x64xbf16>
    %cst_61 = arith.constant dense<0.000000e+00> : vector<16x64xf32>
    %92 = tpu.matmul %89, %91, %cst_61 {dimension_numbers = #tpu.dot_dimension_numbers<[1], [0], [0], [1], [0, 0, 1, 1], [], []>} : vector<16x16xbf16>, vector<16x64xbf16>, vector<16x64xf32> -> vector<16x64xf32>
    %93 = arith.addf %48, %92 : vector<16x64xf32>
    %c2 = arith.constant 2 : index
    %c0_62 = arith.constant 0 : index
    %c0_63 = arith.constant 0 : index
    %94 = vector.load %arg2[%c2, %c0_62, %c0_63] : memref<4x64x16xbf16, #tpu.memory_space<vmem>>, vector<1x64x16xbf16>
    %95 = vector.shape_cast %94 : vector<1x64x16xbf16> to vector<64x16xbf16>
    %cst_64 = arith.constant dense<0.000000e+00> : vector<16x16xf32>
    %96 = tpu.matmul %2, %95, %cst_64 {dimension_numbers = #tpu.dot_dimension_numbers<[1], [0], [0], [1], [0, 0, 1, 1], [], []>} : vector<16x64xbf16>, vector<64x16xbf16>, vector<16x16xf32> -> vector<16x16xf32>
    %c2_65 = arith.constant 2 : index
    %c0_66 = arith.constant 0 : index
    %c0_67 = arith.constant 0 : index
    %97 = vector.load %arg3[%c2_65, %c0_66, %c0_67] : memref<4x1x16xf32, #tpu.memory_space<vmem>>, vector<1x1x16xf32>
    %98 = vector.shape_cast %97 : vector<1x1x16xf32> to vector<1x16xf32>
    %99 = vector.broadcast %98 : vector<1x16xf32> to vector<16x16xf32>
    %100 = arith.addf %96, %99 : vector<16x16xf32>
    %c2_68 = arith.constant 2 : index
    %c0_69 = arith.constant 0 : index
    %c0_70 = arith.constant 0 : index
    %101 = vector.load %arg4[%c2_68, %c0_69, %c0_70] : memref<4x64x16xbf16, #tpu.memory_space<vmem>>, vector<1x64x16xbf16>
    %102 = vector.shape_cast %101 : vector<1x64x16xbf16> to vector<64x16xbf16>
    %cst_71 = arith.constant dense<0.000000e+00> : vector<16x16xf32>
    %103 = tpu.matmul %2, %102, %cst_71 {dimension_numbers = #tpu.dot_dimension_numbers<[1], [0], [0], [1], [0, 0, 1, 1], [], []>} : vector<16x64xbf16>, vector<64x16xbf16>, vector<16x16xf32> -> vector<16x16xf32>
    %c2_72 = arith.constant 2 : index
    %c0_73 = arith.constant 0 : index
    %c0_74 = arith.constant 0 : index
    %104 = vector.load %arg5[%c2_72, %c0_73, %c0_74] : memref<4x1x16xf32, #tpu.memory_space<vmem>>, vector<1x1x16xf32>
    %105 = vector.shape_cast %104 : vector<1x1x16xf32> to vector<1x16xf32>
    %106 = vector.broadcast %105 : vector<1x16xf32> to vector<16x16xf32>
    %107 = arith.addf %103, %106 : vector<16x16xf32>
    %c2_75 = arith.constant 2 : index
    %c0_76 = arith.constant 0 : index
    %c0_77 = arith.constant 0 : index
    %108 = vector.load %arg6[%c2_75, %c0_76, %c0_77] : memref<4x64x16xbf16, #tpu.memory_space<vmem>>, vector<1x64x16xbf16>
    %109 = vector.shape_cast %108 : vector<1x64x16xbf16> to vector<64x16xbf16>
    %cst_78 = arith.constant dense<0.000000e+00> : vector<16x16xf32>
    %110 = tpu.matmul %2, %109, %cst_78 {dimension_numbers = #tpu.dot_dimension_numbers<[1], [0], [0], [1], [0, 0, 1, 1], [], []>} : vector<16x64xbf16>, vector<64x16xbf16>, vector<16x16xf32> -> vector<16x16xf32>
    %c2_79 = arith.constant 2 : index
    %c0_80 = arith.constant 0 : index
    %c0_81 = arith.constant 0 : index
    %111 = vector.load %arg7[%c2_79, %c0_80, %c0_81] : memref<4x1x16xf32, #tpu.memory_space<vmem>>, vector<1x1x16xf32>
    %112 = vector.shape_cast %111 : vector<1x1x16xf32> to vector<1x16xf32>
    %113 = vector.broadcast %112 : vector<1x16xf32> to vector<16x16xf32>
    %114 = arith.addf %110, %113 : vector<16x16xf32>
    %115 = arith.truncf %100 : vector<16x16xf32> to vector<16x16xbf16>
    %116 = arith.truncf %107 : vector<16x16xf32> to vector<16x16xbf16>
    %cst_82 = arith.constant dense<0.000000e+00> : vector<16x16xf32>
    %117 = tpu.matmul %115, %116, %cst_82 {dimension_numbers = #tpu.dot_dimension_numbers<[1], [1], [0], [0], [0, 0, 1, 0], [], []>} : vector<16x16xbf16>, vector<16x16xbf16>, vector<16x16xf32> -> vector<16x16xf32>
    %cst_83 = arith.constant 2.500000e-01 : f32
    %118 = vector.broadcast %cst_83 : f32 to vector<16x16xf32>
    %119 = arith.mulf %117, %118 : vector<16x16xf32>
    %120 = arith.addf %119, %1 : vector<16x16xf32>
    %cst_84 = arith.constant dense<0xFF800000> : vector<16xf32>
    %121 = vector.multi_reduction <maximumf>, %120, %cst_84 [1] : vector<16x16xf32> to vector<16xf32>
    %122 = vector.shape_cast %121 : vector<16xf32> to vector<16x1xf32>
    %123 = vector.broadcast %122 : vector<16x1xf32> to vector<16x16xf32>
    %124 = arith.subf %120, %123 : vector<16x16xf32>
    %125 = math.exp %124 : vector<16x16xf32>
    %cst_85 = arith.constant dense<0.000000e+00> : vector<16xf32>
    %126 = vector.multi_reduction <add>, %125, %cst_85 [1] : vector<16x16xf32> to vector<16xf32>
    %127 = vector.shape_cast %126 : vector<16xf32> to vector<16x1xf32>
    %128 = tpu.reciprocal %127 {approx = true} : vector<16x1xf32> -> vector<16x1xf32>
    %129 = vector.broadcast %128 : vector<16x1xf32> to vector<16x16xf32>
    %130 = arith.mulf %125, %129 : vector<16x16xf32>
    %131 = arith.truncf %130 : vector<16x16xf32> to vector<16x16xbf16>
    %132 = arith.truncf %114 : vector<16x16xf32> to vector<16x16xbf16>
    %cst_86 = arith.constant dense<0.000000e+00> : vector<16x16xf32>
    %133 = tpu.matmul %131, %132, %cst_86 {dimension_numbers = #tpu.dot_dimension_numbers<[1], [0], [0], [1], [0, 0, 1, 1], [], []>} : vector<16x16xbf16>, vector<16x16xbf16>, vector<16x16xf32> -> vector<16x16xf32>
    %134 = arith.truncf %133 : vector<16x16xf32> to vector<16x16xbf16>
    %c2_87 = arith.constant 2 : index
    %c0_88 = arith.constant 0 : index
    %c0_89 = arith.constant 0 : index
    %135 = vector.load %arg8[%c2_87, %c0_88, %c0_89] : memref<4x16x64xbf16, #tpu.memory_space<vmem>>, vector<1x16x64xbf16>
    %136 = vector.shape_cast %135 : vector<1x16x64xbf16> to vector<16x64xbf16>
    %cst_90 = arith.constant dense<0.000000e+00> : vector<16x64xf32>
    %137 = tpu.matmul %134, %136, %cst_90 {dimension_numbers = #tpu.dot_dimension_numbers<[1], [0], [0], [1], [0, 0, 1, 1], [], []>} : vector<16x16xbf16>, vector<16x64xbf16>, vector<16x64xf32> -> vector<16x64xf32>
    %138 = arith.addf %93, %137 : vector<16x64xf32>
    %c3 = arith.constant 3 : index
    %c0_91 = arith.constant 0 : index
    %c0_92 = arith.constant 0 : index
    %139 = vector.load %arg2[%c3, %c0_91, %c0_92] : memref<4x64x16xbf16, #tpu.memory_space<vmem>>, vector<1x64x16xbf16>
    %140 = vector.shape_cast %139 : vector<1x64x16xbf16> to vector<64x16xbf16>
    %cst_93 = arith.constant dense<0.000000e+00> : vector<16x16xf32>
    %141 = tpu.matmul %2, %140, %cst_93 {dimension_numbers = #tpu.dot_dimension_numbers<[1], [0], [0], [1], [0, 0, 1, 1], [], []>} : vector<16x64xbf16>, vector<64x16xbf16>, vector<16x16xf32> -> vector<16x16xf32>
    %c3_94 = arith.constant 3 : index
    %c0_95 = arith.constant 0 : index
    %c0_96 = arith.constant 0 : index
    %142 = vector.load %arg3[%c3_94, %c0_95, %c0_96] : memref<4x1x16xf32, #tpu.memory_space<vmem>>, vector<1x1x16xf32>
    %143 = vector.shape_cast %142 : vector<1x1x16xf32> to vector<1x16xf32>
    %144 = vector.broadcast %143 : vector<1x16xf32> to vector<16x16xf32>
    %145 = arith.addf %141, %144 : vector<16x16xf32>
    %c3_97 = arith.constant 3 : index
    %c0_98 = arith.constant 0 : index
    %c0_99 = arith.constant 0 : index
    %146 = vector.load %arg4[%c3_97, %c0_98, %c0_99] : memref<4x64x16xbf16, #tpu.memory_space<vmem>>, vector<1x64x16xbf16>
    %147 = vector.shape_cast %146 : vector<1x64x16xbf16> to vector<64x16xbf16>
    %cst_100 = arith.constant dense<0.000000e+00> : vector<16x16xf32>
    %148 = tpu.matmul %2, %147, %cst_100 {dimension_numbers = #tpu.dot_dimension_numbers<[1], [0], [0], [1], [0, 0, 1, 1], [], []>} : vector<16x64xbf16>, vector<64x16xbf16>, vector<16x16xf32> -> vector<16x16xf32>
    %c3_101 = arith.constant 3 : index
    %c0_102 = arith.constant 0 : index
    %c0_103 = arith.constant 0 : index
    %149 = vector.load %arg5[%c3_101, %c0_102, %c0_103] : memref<4x1x16xf32, #tpu.memory_space<vmem>>, vector<1x1x16xf32>
    %150 = vector.shape_cast %149 : vector<1x1x16xf32> to vector<1x16xf32>
    %151 = vector.broadcast %150 : vector<1x16xf32> to vector<16x16xf32>
    %152 = arith.addf %148, %151 : vector<16x16xf32>
    %c3_104 = arith.constant 3 : index
    %c0_105 = arith.constant 0 : index
    %c0_106 = arith.constant 0 : index
    %153 = vector.load %arg6[%c3_104, %c0_105, %c0_106] : memref<4x64x16xbf16, #tpu.memory_space<vmem>>, vector<1x64x16xbf16>
    %154 = vector.shape_cast %153 : vector<1x64x16xbf16> to vector<64x16xbf16>
    %cst_107 = arith.constant dense<0.000000e+00> : vector<16x16xf32>
    %155 = tpu.matmul %2, %154, %cst_107 {dimension_numbers = #tpu.dot_dimension_numbers<[1], [0], [0], [1], [0, 0, 1, 1], [], []>} : vector<16x64xbf16>, vector<64x16xbf16>, vector<16x16xf32> -> vector<16x16xf32>
    %c3_108 = arith.constant 3 : index
    %c0_109 = arith.constant 0 : index
    %c0_110 = arith.constant 0 : index
    %156 = vector.load %arg7[%c3_108, %c0_109, %c0_110] : memref<4x1x16xf32, #tpu.memory_space<vmem>>, vector<1x1x16xf32>
    %157 = vector.shape_cast %156 : vector<1x1x16xf32> to vector<1x16xf32>
    %158 = vector.broadcast %157 : vector<1x16xf32> to vector<16x16xf32>
    %159 = arith.addf %155, %158 : vector<16x16xf32>
    %160 = arith.truncf %145 : vector<16x16xf32> to vector<16x16xbf16>
    %161 = arith.truncf %152 : vector<16x16xf32> to vector<16x16xbf16>
    %cst_111 = arith.constant dense<0.000000e+00> : vector<16x16xf32>
    %162 = tpu.matmul %160, %161, %cst_111 {dimension_numbers = #tpu.dot_dimension_numbers<[1], [1], [0], [0], [0, 0, 1, 0], [], []>} : vector<16x16xbf16>, vector<16x16xbf16>, vector<16x16xf32> -> vector<16x16xf32>
    %cst_112 = arith.constant 2.500000e-01 : f32
    %163 = vector.broadcast %cst_112 : f32 to vector<16x16xf32>
    %164 = arith.mulf %162, %163 : vector<16x16xf32>
    %165 = arith.addf %164, %1 : vector<16x16xf32>
    %cst_113 = arith.constant dense<0xFF800000> : vector<16xf32>
    %166 = vector.multi_reduction <maximumf>, %165, %cst_113 [1] : vector<16x16xf32> to vector<16xf32>
    %167 = vector.shape_cast %166 : vector<16xf32> to vector<16x1xf32>
    %168 = vector.broadcast %167 : vector<16x1xf32> to vector<16x16xf32>
    %169 = arith.subf %165, %168 : vector<16x16xf32>
    %170 = math.exp %169 : vector<16x16xf32>
    %cst_114 = arith.constant dense<0.000000e+00> : vector<16xf32>
    %171 = vector.multi_reduction <add>, %170, %cst_114 [1] : vector<16x16xf32> to vector<16xf32>
    %172 = vector.shape_cast %171 : vector<16xf32> to vector<16x1xf32>
    %173 = tpu.reciprocal %172 {approx = true} : vector<16x1xf32> -> vector<16x1xf32>
    %174 = vector.broadcast %173 : vector<16x1xf32> to vector<16x16xf32>
    %175 = arith.mulf %170, %174 : vector<16x16xf32>
    %176 = arith.truncf %175 : vector<16x16xf32> to vector<16x16xbf16>
    %177 = arith.truncf %159 : vector<16x16xf32> to vector<16x16xbf16>
    %cst_115 = arith.constant dense<0.000000e+00> : vector<16x16xf32>
    %178 = tpu.matmul %176, %177, %cst_115 {dimension_numbers = #tpu.dot_dimension_numbers<[1], [0], [0], [1], [0, 0, 1, 1], [], []>} : vector<16x16xbf16>, vector<16x16xbf16>, vector<16x16xf32> -> vector<16x16xf32>
    %179 = arith.truncf %178 : vector<16x16xf32> to vector<16x16xbf16>
    %c3_116 = arith.constant 3 : index
    %c0_117 = arith.constant 0 : index
    %c0_118 = arith.constant 0 : index
    %180 = vector.load %arg8[%c3_116, %c0_117, %c0_118] : memref<4x16x64xbf16, #tpu.memory_space<vmem>>, vector<1x16x64xbf16>
    %181 = vector.shape_cast %180 : vector<1x16x64xbf16> to vector<16x64xbf16>
    %cst_119 = arith.constant dense<0.000000e+00> : vector<16x64xf32>
    %182 = tpu.matmul %179, %181, %cst_119 {dimension_numbers = #tpu.dot_dimension_numbers<[1], [0], [0], [1], [0, 0, 1, 1], [], []>} : vector<16x16xbf16>, vector<16x64xbf16>, vector<16x64xf32> -> vector<16x64xf32>
    %183 = arith.addf %138, %182 : vector<16x64xf32>
    %c0_120 = arith.constant 0 : index
    %c0_121 = arith.constant 0 : index
    %184 = vector.load %arg9[%c0_120, %c0_121] : memref<1x64xf32, #tpu.memory_space<vmem>>, vector<1x64xf32>
    %185 = vector.shape_cast %184 : vector<1x64xf32> to vector<64xf32>
    %186 = vector.shape_cast %185 : vector<64xf32> to vector<1x64xf32>
    %187 = vector.broadcast %186 : vector<1x64xf32> to vector<16x64xf32>
    %188 = arith.addf %183, %187 : vector<16x64xf32>
    %189 = arith.addf %0, %188 : vector<16x64xf32>
    %c0_122 = arith.constant 0 : index
    %c0_123 = arith.constant 0 : index
    %190 = vector.load %arg10[%c0_122, %c0_123] : memref<1x64xf32, #tpu.memory_space<vmem>>, vector<1x64xf32>
    %191 = vector.shape_cast %190 : vector<1x64xf32> to vector<64xf32>
    %c0_124 = arith.constant 0 : index
    %c0_125 = arith.constant 0 : index
    %192 = vector.load %arg11[%c0_124, %c0_125] : memref<1x64xf32, #tpu.memory_space<vmem>>, vector<1x64xf32>
    %193 = vector.shape_cast %192 : vector<1x64xf32> to vector<64xf32>
    %cst_126 = arith.constant dense<0.000000e+00> : vector<16xf32>
    %194 = vector.multi_reduction <add>, %189, %cst_126 [1] : vector<16x64xf32> to vector<16xf32>
    %195 = vector.shape_cast %194 : vector<16xf32> to vector<16x1xf32>
    %cst_127 = arith.constant 6.400000e+01 : f32
    %196 = vector.broadcast %cst_127 : f32 to vector<16x1xf32>
    %197 = arith.divf %195, %196 : vector<16x1xf32>
    %198 = vector.broadcast %197 : vector<16x1xf32> to vector<16x64xf32>
    %199 = arith.subf %189, %198 : vector<16x64xf32>
    %200 = arith.mulf %199, %199 : vector<16x64xf32>
    %cst_128 = arith.constant dense<0.000000e+00> : vector<16xf32>
    %201 = vector.multi_reduction <add>, %200, %cst_128 [1] : vector<16x64xf32> to vector<16xf32>
    %202 = vector.shape_cast %201 : vector<16xf32> to vector<16x1xf32>
    %cst_129 = arith.constant 6.400000e+01 : f32
    %203 = vector.broadcast %cst_129 : f32 to vector<16x1xf32>
    %204 = arith.divf %202, %203 : vector<16x1xf32>
    %205 = vector.broadcast %197 : vector<16x1xf32> to vector<16x64xf32>
    %206 = arith.subf %189, %205 : vector<16x64xf32>
    %cst_130 = arith.constant 9.99999974E-6 : f32
    %207 = vector.broadcast %cst_130 : f32 to vector<16x1xf32>
    %208 = arith.addf %204, %207 : vector<16x1xf32>
    %209 = math.rsqrt %208 : vector<16x1xf32>
    %210 = vector.broadcast %209 : vector<16x1xf32> to vector<16x64xf32>
    %211 = arith.mulf %206, %210 : vector<16x64xf32>
    %212 = vector.shape_cast %191 : vector<64xf32> to vector<1x64xf32>
    %213 = vector.broadcast %212 : vector<1x64xf32> to vector<16x64xf32>
    %214 = arith.mulf %211, %213 : vector<16x64xf32>
    %215 = vector.shape_cast %193 : vector<64xf32> to vector<1x64xf32>
    %216 = vector.broadcast %215 : vector<1x64xf32> to vector<16x64xf32>
    %217 = arith.addf %214, %216 : vector<16x64xf32>
    %218 = arith.truncf %217 : vector<16x64xf32> to vector<16x64xbf16>
    %c0_131 = arith.constant 0 : index
    %c0_132 = arith.constant 0 : index
    %219 = vector.load %arg12[%c0_131, %c0_132] : memref<64x128xbf16, #tpu.memory_space<vmem>>, vector<64x128xbf16>
    %cst_133 = arith.constant dense<0.000000e+00> : vector<16x128xf32>
    %220 = tpu.matmul %218, %219, %cst_133 {dimension_numbers = #tpu.dot_dimension_numbers<[1], [0], [0], [1], [0, 0, 1, 1], [], []>} : vector<16x64xbf16>, vector<64x128xbf16>, vector<16x128xf32> -> vector<16x128xf32>
    %c0_134 = arith.constant 0 : index
    %c0_135 = arith.constant 0 : index
    %221 = vector.load %arg13[%c0_134, %c0_135] : memref<1x128xf32, #tpu.memory_space<vmem>>, vector<1x128xf32>
    %222 = vector.shape_cast %221 : vector<1x128xf32> to vector<128xf32>
    %223 = vector.shape_cast %222 : vector<128xf32> to vector<1x128xf32>
    %224 = vector.broadcast %223 : vector<1x128xf32> to vector<16x128xf32>
    %225 = arith.addf %220, %224 : vector<16x128xf32>
    %226 = arith.mulf %225, %225 : vector<16x128xf32>
    %227 = arith.mulf %225, %226 : vector<16x128xf32>
    %cst_136 = arith.constant 4.471500e-02 : f32
    %228 = vector.broadcast %cst_136 : f32 to vector<16x128xf32>
    %229 = arith.mulf %228, %227 : vector<16x128xf32>
    %230 = arith.addf %225, %229 : vector<16x128xf32>
    %cst_137 = arith.constant 0.797884583 : f32
    %231 = vector.broadcast %cst_137 : f32 to vector<16x128xf32>
    %232 = arith.mulf %231, %230 : vector<16x128xf32>
    %233 = math.tanh %232 : vector<16x128xf32>
    %cst_138 = arith.constant 1.000000e+00 : f32
    %234 = vector.broadcast %cst_138 : f32 to vector<16x128xf32>
    %235 = arith.addf %234, %233 : vector<16x128xf32>
    %cst_139 = arith.constant 5.000000e-01 : f32
    %236 = vector.broadcast %cst_139 : f32 to vector<16x128xf32>
    %237 = arith.mulf %236, %235 : vector<16x128xf32>
    %238 = arith.mulf %225, %237 : vector<16x128xf32>
    %239 = arith.truncf %238 : vector<16x128xf32> to vector<16x128xbf16>
    %c0_140 = arith.constant 0 : index
    %c0_141 = arith.constant 0 : index
    %240 = vector.load %arg14[%c0_140, %c0_141] : memref<128x64xbf16, #tpu.memory_space<vmem>>, vector<128x64xbf16>
    %cst_142 = arith.constant dense<0.000000e+00> : vector<16x64xf32>
    %241 = tpu.matmul %239, %240, %cst_142 {dimension_numbers = #tpu.dot_dimension_numbers<[1], [0], [0], [1], [0, 0, 1, 1], [], []>} : vector<16x128xbf16>, vector<128x64xbf16>, vector<16x64xf32> -> vector<16x64xf32>
    %c0_143 = arith.constant 0 : index
    %c0_144 = arith.constant 0 : index
    %242 = vector.load %arg15[%c0_143, %c0_144] : memref<1x64xf32, #tpu.memory_space<vmem>>, vector<1x64xf32>
    %243 = vector.shape_cast %242 : vector<1x64xf32> to vector<64xf32>
    %244 = vector.shape_cast %243 : vector<64xf32> to vector<1x64xf32>
    %245 = vector.broadcast %244 : vector<1x64xf32> to vector<16x64xf32>
    %246 = arith.addf %241, %245 : vector<16x64xf32>
    %247 = arith.addf %217, %246 : vector<16x64xf32>
    %c0_145 = arith.constant 0 : index
    %c0_146 = arith.constant 0 : index
    %248 = vector.load %arg16[%c0_145, %c0_146] : memref<1x64xf32, #tpu.memory_space<vmem>>, vector<1x64xf32>
    %249 = vector.shape_cast %248 : vector<1x64xf32> to vector<64xf32>
    %c0_147 = arith.constant 0 : index
    %c0_148 = arith.constant 0 : index
    %250 = vector.load %arg17[%c0_147, %c0_148] : memref<1x64xf32, #tpu.memory_space<vmem>>, vector<1x64xf32>
    %251 = vector.shape_cast %250 : vector<1x64xf32> to vector<64xf32>
    %cst_149 = arith.constant dense<0.000000e+00> : vector<16xf32>
    %252 = vector.multi_reduction <add>, %247, %cst_149 [1] : vector<16x64xf32> to vector<16xf32>
    %253 = vector.shape_cast %252 : vector<16xf32> to vector<16x1xf32>
    %cst_150 = arith.constant 6.400000e+01 : f32
    %254 = vector.broadcast %cst_150 : f32 to vector<16x1xf32>
    %255 = arith.divf %253, %254 : vector<16x1xf32>
    %256 = vector.broadcast %255 : vector<16x1xf32> to vector<16x64xf32>
    %257 = arith.subf %247, %256 : vector<16x64xf32>
    %258 = arith.mulf %257, %257 : vector<16x64xf32>
    %cst_151 = arith.constant dense<0.000000e+00> : vector<16xf32>
    %259 = vector.multi_reduction <add>, %258, %cst_151 [1] : vector<16x64xf32> to vector<16xf32>
    %260 = vector.shape_cast %259 : vector<16xf32> to vector<16x1xf32>
    %cst_152 = arith.constant 6.400000e+01 : f32
    %261 = vector.broadcast %cst_152 : f32 to vector<16x1xf32>
    %262 = arith.divf %260, %261 : vector<16x1xf32>
    %263 = vector.broadcast %255 : vector<16x1xf32> to vector<16x64xf32>
    %264 = arith.subf %247, %263 : vector<16x64xf32>
    %cst_153 = arith.constant 9.99999974E-6 : f32
    %265 = vector.broadcast %cst_153 : f32 to vector<16x1xf32>
    %266 = arith.addf %262, %265 : vector<16x1xf32>
    %267 = math.rsqrt %266 : vector<16x1xf32>
    %268 = vector.broadcast %267 : vector<16x1xf32> to vector<16x64xf32>
    %269 = arith.mulf %264, %268 : vector<16x64xf32>
    %270 = vector.shape_cast %249 : vector<64xf32> to vector<1x64xf32>
    %271 = vector.broadcast %270 : vector<1x64xf32> to vector<16x64xf32>
    %272 = arith.mulf %269, %271 : vector<16x64xf32>
    %273 = vector.shape_cast %251 : vector<64xf32> to vector<1x64xf32>
    %274 = vector.broadcast %273 : vector<1x64xf32> to vector<16x64xf32>
    %275 = arith.addf %272, %274 : vector<16x64xf32>
    %276 = arith.truncf %275 : vector<16x64xf32> to vector<16x64xbf16>
    %cst_154 = arith.constant 0.000000e+00 : f32
    %277 = vector.broadcast %cst_154 : f32 to vector<16x64xf32>
    %c0_155 = arith.constant 0 : index
    %c0_156 = arith.constant 0 : index
    %c0_157 = arith.constant 0 : index
    %278 = vector.load %arg18[%c0_155, %c0_156, %c0_157] : memref<4x64x16xbf16, #tpu.memory_space<vmem>>, vector<1x64x16xbf16>
    %279 = vector.shape_cast %278 : vector<1x64x16xbf16> to vector<64x16xbf16>
    %cst_158 = arith.constant dense<0.000000e+00> : vector<16x16xf32>
    %280 = tpu.matmul %276, %279, %cst_158 {dimension_numbers = #tpu.dot_dimension_numbers<[1], [0], [0], [1], [0, 0, 1, 1], [], []>} : vector<16x64xbf16>, vector<64x16xbf16>, vector<16x16xf32> -> vector<16x16xf32>
    %c0_159 = arith.constant 0 : index
    %c0_160 = arith.constant 0 : index
    %c0_161 = arith.constant 0 : index
    %281 = vector.load %arg19[%c0_159, %c0_160, %c0_161] : memref<4x1x16xf32, #tpu.memory_space<vmem>>, vector<1x1x16xf32>
    %282 = vector.shape_cast %281 : vector<1x1x16xf32> to vector<1x16xf32>
    %283 = vector.broadcast %282 : vector<1x16xf32> to vector<16x16xf32>
    %284 = arith.addf %280, %283 : vector<16x16xf32>
    %c0_162 = arith.constant 0 : index
    %c0_163 = arith.constant 0 : index
    %c0_164 = arith.constant 0 : index
    %285 = vector.load %arg20[%c0_162, %c0_163, %c0_164] : memref<4x64x16xbf16, #tpu.memory_space<vmem>>, vector<1x64x16xbf16>
    %286 = vector.shape_cast %285 : vector<1x64x16xbf16> to vector<64x16xbf16>
    %cst_165 = arith.constant dense<0.000000e+00> : vector<16x16xf32>
    %287 = tpu.matmul %276, %286, %cst_165 {dimension_numbers = #tpu.dot_dimension_numbers<[1], [0], [0], [1], [0, 0, 1, 1], [], []>} : vector<16x64xbf16>, vector<64x16xbf16>, vector<16x16xf32> -> vector<16x16xf32>
    %c0_166 = arith.constant 0 : index
    %c0_167 = arith.constant 0 : index
    %c0_168 = arith.constant 0 : index
    %288 = vector.load %arg21[%c0_166, %c0_167, %c0_168] : memref<4x1x16xf32, #tpu.memory_space<vmem>>, vector<1x1x16xf32>
    %289 = vector.shape_cast %288 : vector<1x1x16xf32> to vector<1x16xf32>
    %290 = vector.broadcast %289 : vector<1x16xf32> to vector<16x16xf32>
    %291 = arith.addf %287, %290 : vector<16x16xf32>
    %c0_169 = arith.constant 0 : index
    %c0_170 = arith.constant 0 : index
    %c0_171 = arith.constant 0 : index
    %292 = vector.load %arg22[%c0_169, %c0_170, %c0_171] : memref<4x64x16xbf16, #tpu.memory_space<vmem>>, vector<1x64x16xbf16>
    %293 = vector.shape_cast %292 : vector<1x64x16xbf16> to vector<64x16xbf16>
    %cst_172 = arith.constant dense<0.000000e+00> : vector<16x16xf32>
    %294 = tpu.matmul %276, %293, %cst_172 {dimension_numbers = #tpu.dot_dimension_numbers<[1], [0], [0], [1], [0, 0, 1, 1], [], []>} : vector<16x64xbf16>, vector<64x16xbf16>, vector<16x16xf32> -> vector<16x16xf32>
    %c0_173 = arith.constant 0 : index
    %c0_174 = arith.constant 0 : index
    %c0_175 = arith.constant 0 : index
    %295 = vector.load %arg23[%c0_173, %c0_174, %c0_175] : memref<4x1x16xf32, #tpu.memory_space<vmem>>, vector<1x1x16xf32>
    %296 = vector.shape_cast %295 : vector<1x1x16xf32> to vector<1x16xf32>
    %297 = vector.broadcast %296 : vector<1x16xf32> to vector<16x16xf32>
    %298 = arith.addf %294, %297 : vector<16x16xf32>
    %299 = arith.truncf %284 : vector<16x16xf32> to vector<16x16xbf16>
    %300 = arith.truncf %291 : vector<16x16xf32> to vector<16x16xbf16>
    %cst_176 = arith.constant dense<0.000000e+00> : vector<16x16xf32>
    %301 = tpu.matmul %299, %300, %cst_176 {dimension_numbers = #tpu.dot_dimension_numbers<[1], [1], [0], [0], [0, 0, 1, 0], [], []>} : vector<16x16xbf16>, vector<16x16xbf16>, vector<16x16xf32> -> vector<16x16xf32>
    %cst_177 = arith.constant 2.500000e-01 : f32
    %302 = vector.broadcast %cst_177 : f32 to vector<16x16xf32>
    %303 = arith.mulf %301, %302 : vector<16x16xf32>
    %304 = arith.addf %303, %1 : vector<16x16xf32>
    %cst_178 = arith.constant dense<0xFF800000> : vector<16xf32>
    %305 = vector.multi_reduction <maximumf>, %304, %cst_178 [1] : vector<16x16xf32> to vector<16xf32>
    %306 = vector.shape_cast %305 : vector<16xf32> to vector<16x1xf32>
    %307 = vector.broadcast %306 : vector<16x1xf32> to vector<16x16xf32>
    %308 = arith.subf %304, %307 : vector<16x16xf32>
    %309 = math.exp %308 : vector<16x16xf32>
    %cst_179 = arith.constant dense<0.000000e+00> : vector<16xf32>
    %310 = vector.multi_reduction <add>, %309, %cst_179 [1] : vector<16x16xf32> to vector<16xf32>
    %311 = vector.shape_cast %310 : vector<16xf32> to vector<16x1xf32>
    %312 = tpu.reciprocal %311 {approx = true} : vector<16x1xf32> -> vector<16x1xf32>
    %313 = vector.broadcast %312 : vector<16x1xf32> to vector<16x16xf32>
    %314 = arith.mulf %309, %313 : vector<16x16xf32>
    %315 = arith.truncf %314 : vector<16x16xf32> to vector<16x16xbf16>
    %316 = arith.truncf %298 : vector<16x16xf32> to vector<16x16xbf16>
    %cst_180 = arith.constant dense<0.000000e+00> : vector<16x16xf32>
    %317 = tpu.matmul %315, %316, %cst_180 {dimension_numbers = #tpu.dot_dimension_numbers<[1], [0], [0], [1], [0, 0, 1, 1], [], []>} : vector<16x16xbf16>, vector<16x16xbf16>, vector<16x16xf32> -> vector<16x16xf32>
    %318 = arith.truncf %317 : vector<16x16xf32> to vector<16x16xbf16>
    %c0_181 = arith.constant 0 : index
    %c0_182 = arith.constant 0 : index
    %c0_183 = arith.constant 0 : index
    %319 = vector.load %arg24[%c0_181, %c0_182, %c0_183] : memref<4x16x64xbf16, #tpu.memory_space<vmem>>, vector<1x16x64xbf16>
    %320 = vector.shape_cast %319 : vector<1x16x64xbf16> to vector<16x64xbf16>
    %cst_184 = arith.constant dense<0.000000e+00> : vector<16x64xf32>
    %321 = tpu.matmul %318, %320, %cst_184 {dimension_numbers = #tpu.dot_dimension_numbers<[1], [0], [0], [1], [0, 0, 1, 1], [], []>} : vector<16x16xbf16>, vector<16x64xbf16>, vector<16x64xf32> -> vector<16x64xf32>
    %322 = arith.addf %277, %321 : vector<16x64xf32>
    %c1_185 = arith.constant 1 : index
    %c0_186 = arith.constant 0 : index
    %c0_187 = arith.constant 0 : index
    %323 = vector.load %arg18[%c1_185, %c0_186, %c0_187] : memref<4x64x16xbf16, #tpu.memory_space<vmem>>, vector<1x64x16xbf16>
    %324 = vector.shape_cast %323 : vector<1x64x16xbf16> to vector<64x16xbf16>
    %cst_188 = arith.constant dense<0.000000e+00> : vector<16x16xf32>
    %325 = tpu.matmul %276, %324, %cst_188 {dimension_numbers = #tpu.dot_dimension_numbers<[1], [0], [0], [1], [0, 0, 1, 1], [], []>} : vector<16x64xbf16>, vector<64x16xbf16>, vector<16x16xf32> -> vector<16x16xf32>
    %c1_189 = arith.constant 1 : index
    %c0_190 = arith.constant 0 : index
    %c0_191 = arith.constant 0 : index
    %326 = vector.load %arg19[%c1_189, %c0_190, %c0_191] : memref<4x1x16xf32, #tpu.memory_space<vmem>>, vector<1x1x16xf32>
    %327 = vector.shape_cast %326 : vector<1x1x16xf32> to vector<1x16xf32>
    %328 = vector.broadcast %327 : vector<1x16xf32> to vector<16x16xf32>
    %329 = arith.addf %325, %328 : vector<16x16xf32>
    %c1_192 = arith.constant 1 : index
    %c0_193 = arith.constant 0 : index
    %c0_194 = arith.constant 0 : index
    %330 = vector.load %arg20[%c1_192, %c0_193, %c0_194] : memref<4x64x16xbf16, #tpu.memory_space<vmem>>, vector<1x64x16xbf16>
    %331 = vector.shape_cast %330 : vector<1x64x16xbf16> to vector<64x16xbf16>
    %cst_195 = arith.constant dense<0.000000e+00> : vector<16x16xf32>
    %332 = tpu.matmul %276, %331, %cst_195 {dimension_numbers = #tpu.dot_dimension_numbers<[1], [0], [0], [1], [0, 0, 1, 1], [], []>} : vector<16x64xbf16>, vector<64x16xbf16>, vector<16x16xf32> -> vector<16x16xf32>
    %c1_196 = arith.constant 1 : index
    %c0_197 = arith.constant 0 : index
    %c0_198 = arith.constant 0 : index
    %333 = vector.load %arg21[%c1_196, %c0_197, %c0_198] : memref<4x1x16xf32, #tpu.memory_space<vmem>>, vector<1x1x16xf32>
    %334 = vector.shape_cast %333 : vector<1x1x16xf32> to vector<1x16xf32>
    %335 = vector.broadcast %334 : vector<1x16xf32> to vector<16x16xf32>
    %336 = arith.addf %332, %335 : vector<16x16xf32>
    %c1_199 = arith.constant 1 : index
    %c0_200 = arith.constant 0 : index
    %c0_201 = arith.constant 0 : index
    %337 = vector.load %arg22[%c1_199, %c0_200, %c0_201] : memref<4x64x16xbf16, #tpu.memory_space<vmem>>, vector<1x64x16xbf16>
    %338 = vector.shape_cast %337 : vector<1x64x16xbf16> to vector<64x16xbf16>
    %cst_202 = arith.constant dense<0.000000e+00> : vector<16x16xf32>
    %339 = tpu.matmul %276, %338, %cst_202 {dimension_numbers = #tpu.dot_dimension_numbers<[1], [0], [0], [1], [0, 0, 1, 1], [], []>} : vector<16x64xbf16>, vector<64x16xbf16>, vector<16x16xf32> -> vector<16x16xf32>
    %c1_203 = arith.constant 1 : index
    %c0_204 = arith.constant 0 : index
    %c0_205 = arith.constant 0 : index
    %340 = vector.load %arg23[%c1_203, %c0_204, %c0_205] : memref<4x1x16xf32, #tpu.memory_space<vmem>>, vector<1x1x16xf32>
    %341 = vector.shape_cast %340 : vector<1x1x16xf32> to vector<1x16xf32>
    %342 = vector.broadcast %341 : vector<1x16xf32> to vector<16x16xf32>
    %343 = arith.addf %339, %342 : vector<16x16xf32>
    %344 = arith.truncf %329 : vector<16x16xf32> to vector<16x16xbf16>
    %345 = arith.truncf %336 : vector<16x16xf32> to vector<16x16xbf16>
    %cst_206 = arith.constant dense<0.000000e+00> : vector<16x16xf32>
    %346 = tpu.matmul %344, %345, %cst_206 {dimension_numbers = #tpu.dot_dimension_numbers<[1], [1], [0], [0], [0, 0, 1, 0], [], []>} : vector<16x16xbf16>, vector<16x16xbf16>, vector<16x16xf32> -> vector<16x16xf32>
    %cst_207 = arith.constant 2.500000e-01 : f32
    %347 = vector.broadcast %cst_207 : f32 to vector<16x16xf32>
    %348 = arith.mulf %346, %347 : vector<16x16xf32>
    %349 = arith.addf %348, %1 : vector<16x16xf32>
    %cst_208 = arith.constant dense<0xFF800000> : vector<16xf32>
    %350 = vector.multi_reduction <maximumf>, %349, %cst_208 [1] : vector<16x16xf32> to vector<16xf32>
    %351 = vector.shape_cast %350 : vector<16xf32> to vector<16x1xf32>
    %352 = vector.broadcast %351 : vector<16x1xf32> to vector<16x16xf32>
    %353 = arith.subf %349, %352 : vector<16x16xf32>
    %354 = math.exp %353 : vector<16x16xf32>
    %cst_209 = arith.constant dense<0.000000e+00> : vector<16xf32>
    %355 = vector.multi_reduction <add>, %354, %cst_209 [1] : vector<16x16xf32> to vector<16xf32>
    %356 = vector.shape_cast %355 : vector<16xf32> to vector<16x1xf32>
    %357 = tpu.reciprocal %356 {approx = true} : vector<16x1xf32> -> vector<16x1xf32>
    %358 = vector.broadcast %357 : vector<16x1xf32> to vector<16x16xf32>
    %359 = arith.mulf %354, %358 : vector<16x16xf32>
    %360 = arith.truncf %359 : vector<16x16xf32> to vector<16x16xbf16>
    %361 = arith.truncf %343 : vector<16x16xf32> to vector<16x16xbf16>
    %cst_210 = arith.constant dense<0.000000e+00> : vector<16x16xf32>
    %362 = tpu.matmul %360, %361, %cst_210 {dimension_numbers = #tpu.dot_dimension_numbers<[1], [0], [0], [1], [0, 0, 1, 1], [], []>} : vector<16x16xbf16>, vector<16x16xbf16>, vector<16x16xf32> -> vector<16x16xf32>
    %363 = arith.truncf %362 : vector<16x16xf32> to vector<16x16xbf16>
    %c1_211 = arith.constant 1 : index
    %c0_212 = arith.constant 0 : index
    %c0_213 = arith.constant 0 : index
    %364 = vector.load %arg24[%c1_211, %c0_212, %c0_213] : memref<4x16x64xbf16, #tpu.memory_space<vmem>>, vector<1x16x64xbf16>
    %365 = vector.shape_cast %364 : vector<1x16x64xbf16> to vector<16x64xbf16>
    %cst_214 = arith.constant dense<0.000000e+00> : vector<16x64xf32>
    %366 = tpu.matmul %363, %365, %cst_214 {dimension_numbers = #tpu.dot_dimension_numbers<[1], [0], [0], [1], [0, 0, 1, 1], [], []>} : vector<16x16xbf16>, vector<16x64xbf16>, vector<16x64xf32> -> vector<16x64xf32>
    %367 = arith.addf %322, %366 : vector<16x64xf32>
    %c2_215 = arith.constant 2 : index
    %c0_216 = arith.constant 0 : index
    %c0_217 = arith.constant 0 : index
    %368 = vector.load %arg18[%c2_215, %c0_216, %c0_217] : memref<4x64x16xbf16, #tpu.memory_space<vmem>>, vector<1x64x16xbf16>
    %369 = vector.shape_cast %368 : vector<1x64x16xbf16> to vector<64x16xbf16>
    %cst_218 = arith.constant dense<0.000000e+00> : vector<16x16xf32>
    %370 = tpu.matmul %276, %369, %cst_218 {dimension_numbers = #tpu.dot_dimension_numbers<[1], [0], [0], [1], [0, 0, 1, 1], [], []>} : vector<16x64xbf16>, vector<64x16xbf16>, vector<16x16xf32> -> vector<16x16xf32>
    %c2_219 = arith.constant 2 : index
    %c0_220 = arith.constant 0 : index
    %c0_221 = arith.constant 0 : index
    %371 = vector.load %arg19[%c2_219, %c0_220, %c0_221] : memref<4x1x16xf32, #tpu.memory_space<vmem>>, vector<1x1x16xf32>
    %372 = vector.shape_cast %371 : vector<1x1x16xf32> to vector<1x16xf32>
    %373 = vector.broadcast %372 : vector<1x16xf32> to vector<16x16xf32>
    %374 = arith.addf %370, %373 : vector<16x16xf32>
    %c2_222 = arith.constant 2 : index
    %c0_223 = arith.constant 0 : index
    %c0_224 = arith.constant 0 : index
    %375 = vector.load %arg20[%c2_222, %c0_223, %c0_224] : memref<4x64x16xbf16, #tpu.memory_space<vmem>>, vector<1x64x16xbf16>
    %376 = vector.shape_cast %375 : vector<1x64x16xbf16> to vector<64x16xbf16>
    %cst_225 = arith.constant dense<0.000000e+00> : vector<16x16xf32>
    %377 = tpu.matmul %276, %376, %cst_225 {dimension_numbers = #tpu.dot_dimension_numbers<[1], [0], [0], [1], [0, 0, 1, 1], [], []>} : vector<16x64xbf16>, vector<64x16xbf16>, vector<16x16xf32> -> vector<16x16xf32>
    %c2_226 = arith.constant 2 : index
    %c0_227 = arith.constant 0 : index
    %c0_228 = arith.constant 0 : index
    %378 = vector.load %arg21[%c2_226, %c0_227, %c0_228] : memref<4x1x16xf32, #tpu.memory_space<vmem>>, vector<1x1x16xf32>
    %379 = vector.shape_cast %378 : vector<1x1x16xf32> to vector<1x16xf32>
    %380 = vector.broadcast %379 : vector<1x16xf32> to vector<16x16xf32>
    %381 = arith.addf %377, %380 : vector<16x16xf32>
    %c2_229 = arith.constant 2 : index
    %c0_230 = arith.constant 0 : index
    %c0_231 = arith.constant 0 : index
    %382 = vector.load %arg22[%c2_229, %c0_230, %c0_231] : memref<4x64x16xbf16, #tpu.memory_space<vmem>>, vector<1x64x16xbf16>
    %383 = vector.shape_cast %382 : vector<1x64x16xbf16> to vector<64x16xbf16>
    %cst_232 = arith.constant dense<0.000000e+00> : vector<16x16xf32>
    %384 = tpu.matmul %276, %383, %cst_232 {dimension_numbers = #tpu.dot_dimension_numbers<[1], [0], [0], [1], [0, 0, 1, 1], [], []>} : vector<16x64xbf16>, vector<64x16xbf16>, vector<16x16xf32> -> vector<16x16xf32>
    %c2_233 = arith.constant 2 : index
    %c0_234 = arith.constant 0 : index
    %c0_235 = arith.constant 0 : index
    %385 = vector.load %arg23[%c2_233, %c0_234, %c0_235] : memref<4x1x16xf32, #tpu.memory_space<vmem>>, vector<1x1x16xf32>
    %386 = vector.shape_cast %385 : vector<1x1x16xf32> to vector<1x16xf32>
    %387 = vector.broadcast %386 : vector<1x16xf32> to vector<16x16xf32>
    %388 = arith.addf %384, %387 : vector<16x16xf32>
    %389 = arith.truncf %374 : vector<16x16xf32> to vector<16x16xbf16>
    %390 = arith.truncf %381 : vector<16x16xf32> to vector<16x16xbf16>
    %cst_236 = arith.constant dense<0.000000e+00> : vector<16x16xf32>
    %391 = tpu.matmul %389, %390, %cst_236 {dimension_numbers = #tpu.dot_dimension_numbers<[1], [1], [0], [0], [0, 0, 1, 0], [], []>} : vector<16x16xbf16>, vector<16x16xbf16>, vector<16x16xf32> -> vector<16x16xf32>
    %cst_237 = arith.constant 2.500000e-01 : f32
    %392 = vector.broadcast %cst_237 : f32 to vector<16x16xf32>
    %393 = arith.mulf %391, %392 : vector<16x16xf32>
    %394 = arith.addf %393, %1 : vector<16x16xf32>
    %cst_238 = arith.constant dense<0xFF800000> : vector<16xf32>
    %395 = vector.multi_reduction <maximumf>, %394, %cst_238 [1] : vector<16x16xf32> to vector<16xf32>
    %396 = vector.shape_cast %395 : vector<16xf32> to vector<16x1xf32>
    %397 = vector.broadcast %396 : vector<16x1xf32> to vector<16x16xf32>
    %398 = arith.subf %394, %397 : vector<16x16xf32>
    %399 = math.exp %398 : vector<16x16xf32>
    %cst_239 = arith.constant dense<0.000000e+00> : vector<16xf32>
    %400 = vector.multi_reduction <add>, %399, %cst_239 [1] : vector<16x16xf32> to vector<16xf32>
    %401 = vector.shape_cast %400 : vector<16xf32> to vector<16x1xf32>
    %402 = tpu.reciprocal %401 {approx = true} : vector<16x1xf32> -> vector<16x1xf32>
    %403 = vector.broadcast %402 : vector<16x1xf32> to vector<16x16xf32>
    %404 = arith.mulf %399, %403 : vector<16x16xf32>
    %405 = arith.truncf %404 : vector<16x16xf32> to vector<16x16xbf16>
    %406 = arith.truncf %388 : vector<16x16xf32> to vector<16x16xbf16>
    %cst_240 = arith.constant dense<0.000000e+00> : vector<16x16xf32>
    %407 = tpu.matmul %405, %406, %cst_240 {dimension_numbers = #tpu.dot_dimension_numbers<[1], [0], [0], [1], [0, 0, 1, 1], [], []>} : vector<16x16xbf16>, vector<16x16xbf16>, vector<16x16xf32> -> vector<16x16xf32>
    %408 = arith.truncf %407 : vector<16x16xf32> to vector<16x16xbf16>
    %c2_241 = arith.constant 2 : index
    %c0_242 = arith.constant 0 : index
    %c0_243 = arith.constant 0 : index
    %409 = vector.load %arg24[%c2_241, %c0_242, %c0_243] : memref<4x16x64xbf16, #tpu.memory_space<vmem>>, vector<1x16x64xbf16>
    %410 = vector.shape_cast %409 : vector<1x16x64xbf16> to vector<16x64xbf16>
    %cst_244 = arith.constant dense<0.000000e+00> : vector<16x64xf32>
    %411 = tpu.matmul %408, %410, %cst_244 {dimension_numbers = #tpu.dot_dimension_numbers<[1], [0], [0], [1], [0, 0, 1, 1], [], []>} : vector<16x16xbf16>, vector<16x64xbf16>, vector<16x64xf32> -> vector<16x64xf32>
    %412 = arith.addf %367, %411 : vector<16x64xf32>
    %c3_245 = arith.constant 3 : index
    %c0_246 = arith.constant 0 : index
    %c0_247 = arith.constant 0 : index
    %413 = vector.load %arg18[%c3_245, %c0_246, %c0_247] : memref<4x64x16xbf16, #tpu.memory_space<vmem>>, vector<1x64x16xbf16>
    %414 = vector.shape_cast %413 : vector<1x64x16xbf16> to vector<64x16xbf16>
    %cst_248 = arith.constant dense<0.000000e+00> : vector<16x16xf32>
    %415 = tpu.matmul %276, %414, %cst_248 {dimension_numbers = #tpu.dot_dimension_numbers<[1], [0], [0], [1], [0, 0, 1, 1], [], []>} : vector<16x64xbf16>, vector<64x16xbf16>, vector<16x16xf32> -> vector<16x16xf32>
    %c3_249 = arith.constant 3 : index
    %c0_250 = arith.constant 0 : index
    %c0_251 = arith.constant 0 : index
    %416 = vector.load %arg19[%c3_249, %c0_250, %c0_251] : memref<4x1x16xf32, #tpu.memory_space<vmem>>, vector<1x1x16xf32>
    %417 = vector.shape_cast %416 : vector<1x1x16xf32> to vector<1x16xf32>
    %418 = vector.broadcast %417 : vector<1x16xf32> to vector<16x16xf32>
    %419 = arith.addf %415, %418 : vector<16x16xf32>
    %c3_252 = arith.constant 3 : index
    %c0_253 = arith.constant 0 : index
    %c0_254 = arith.constant 0 : index
    %420 = vector.load %arg20[%c3_252, %c0_253, %c0_254] : memref<4x64x16xbf16, #tpu.memory_space<vmem>>, vector<1x64x16xbf16>
    %421 = vector.shape_cast %420 : vector<1x64x16xbf16> to vector<64x16xbf16>
    %cst_255 = arith.constant dense<0.000000e+00> : vector<16x16xf32>
    %422 = tpu.matmul %276, %421, %cst_255 {dimension_numbers = #tpu.dot_dimension_numbers<[1], [0], [0], [1], [0, 0, 1, 1], [], []>} : vector<16x64xbf16>, vector<64x16xbf16>, vector<16x16xf32> -> vector<16x16xf32>
    %c3_256 = arith.constant 3 : index
    %c0_257 = arith.constant 0 : index
    %c0_258 = arith.constant 0 : index
    %423 = vector.load %arg21[%c3_256, %c0_257, %c0_258] : memref<4x1x16xf32, #tpu.memory_space<vmem>>, vector<1x1x16xf32>
    %424 = vector.shape_cast %423 : vector<1x1x16xf32> to vector<1x16xf32>
    %425 = vector.broadcast %424 : vector<1x16xf32> to vector<16x16xf32>
    %426 = arith.addf %422, %425 : vector<16x16xf32>
    %c3_259 = arith.constant 3 : index
    %c0_260 = arith.constant 0 : index
    %c0_261 = arith.constant 0 : index
    %427 = vector.load %arg22[%c3_259, %c0_260, %c0_261] : memref<4x64x16xbf16, #tpu.memory_space<vmem>>, vector<1x64x16xbf16>
    %428 = vector.shape_cast %427 : vector<1x64x16xbf16> to vector<64x16xbf16>
    %cst_262 = arith.constant dense<0.000000e+00> : vector<16x16xf32>
    %429 = tpu.matmul %276, %428, %cst_262 {dimension_numbers = #tpu.dot_dimension_numbers<[1], [0], [0], [1], [0, 0, 1, 1], [], []>} : vector<16x64xbf16>, vector<64x16xbf16>, vector<16x16xf32> -> vector<16x16xf32>
    %c3_263 = arith.constant 3 : index
    %c0_264 = arith.constant 0 : index
    %c0_265 = arith.constant 0 : index
    %430 = vector.load %arg23[%c3_263, %c0_264, %c0_265] : memref<4x1x16xf32, #tpu.memory_space<vmem>>, vector<1x1x16xf32>
    %431 = vector.shape_cast %430 : vector<1x1x16xf32> to vector<1x16xf32>
    %432 = vector.broadcast %431 : vector<1x16xf32> to vector<16x16xf32>
    %433 = arith.addf %429, %432 : vector<16x16xf32>
    %434 = arith.truncf %419 : vector<16x16xf32> to vector<16x16xbf16>
    %435 = arith.truncf %426 : vector<16x16xf32> to vector<16x16xbf16>
    %cst_266 = arith.constant dense<0.000000e+00> : vector<16x16xf32>
    %436 = tpu.matmul %434, %435, %cst_266 {dimension_numbers = #tpu.dot_dimension_numbers<[1], [1], [0], [0], [0, 0, 1, 0], [], []>} : vector<16x16xbf16>, vector<16x16xbf16>, vector<16x16xf32> -> vector<16x16xf32>
    %cst_267 = arith.constant 2.500000e-01 : f32
    %437 = vector.broadcast %cst_267 : f32 to vector<16x16xf32>
    %438 = arith.mulf %436, %437 : vector<16x16xf32>
    %439 = arith.addf %438, %1 : vector<16x16xf32>
    %cst_268 = arith.constant dense<0xFF800000> : vector<16xf32>
    %440 = vector.multi_reduction <maximumf>, %439, %cst_268 [1] : vector<16x16xf32> to vector<16xf32>
    %441 = vector.shape_cast %440 : vector<16xf32> to vector<16x1xf32>
    %442 = vector.broadcast %441 : vector<16x1xf32> to vector<16x16xf32>
    %443 = arith.subf %439, %442 : vector<16x16xf32>
    %444 = math.exp %443 : vector<16x16xf32>
    %cst_269 = arith.constant dense<0.000000e+00> : vector<16xf32>
    %445 = vector.multi_reduction <add>, %444, %cst_269 [1] : vector<16x16xf32> to vector<16xf32>
    %446 = vector.shape_cast %445 : vector<16xf32> to vector<16x1xf32>
    %447 = tpu.reciprocal %446 {approx = true} : vector<16x1xf32> -> vector<16x1xf32>
    %448 = vector.broadcast %447 : vector<16x1xf32> to vector<16x16xf32>
    %449 = arith.mulf %444, %448 : vector<16x16xf32>
    %450 = arith.truncf %449 : vector<16x16xf32> to vector<16x16xbf16>
    %451 = arith.truncf %433 : vector<16x16xf32> to vector<16x16xbf16>
    %cst_270 = arith.constant dense<0.000000e+00> : vector<16x16xf32>
    %452 = tpu.matmul %450, %451, %cst_270 {dimension_numbers = #tpu.dot_dimension_numbers<[1], [0], [0], [1], [0, 0, 1, 1], [], []>} : vector<16x16xbf16>, vector<16x16xbf16>, vector<16x16xf32> -> vector<16x16xf32>
    %453 = arith.truncf %452 : vector<16x16xf32> to vector<16x16xbf16>
    %c3_271 = arith.constant 3 : index
    %c0_272 = arith.constant 0 : index
    %c0_273 = arith.constant 0 : index
    %454 = vector.load %arg24[%c3_271, %c0_272, %c0_273] : memref<4x16x64xbf16, #tpu.memory_space<vmem>>, vector<1x16x64xbf16>
    %455 = vector.shape_cast %454 : vector<1x16x64xbf16> to vector<16x64xbf16>
    %cst_274 = arith.constant dense<0.000000e+00> : vector<16x64xf32>
    %456 = tpu.matmul %453, %455, %cst_274 {dimension_numbers = #tpu.dot_dimension_numbers<[1], [0], [0], [1], [0, 0, 1, 1], [], []>} : vector<16x16xbf16>, vector<16x64xbf16>, vector<16x64xf32> -> vector<16x64xf32>
    %457 = arith.addf %412, %456 : vector<16x64xf32>
    %c0_275 = arith.constant 0 : index
    %c0_276 = arith.constant 0 : index
    %458 = vector.load %arg25[%c0_275, %c0_276] : memref<1x64xf32, #tpu.memory_space<vmem>>, vector<1x64xf32>
    %459 = vector.shape_cast %458 : vector<1x64xf32> to vector<64xf32>
    %460 = vector.shape_cast %459 : vector<64xf32> to vector<1x64xf32>
    %461 = vector.broadcast %460 : vector<1x64xf32> to vector<16x64xf32>
    %462 = arith.addf %457, %461 : vector<16x64xf32>
    %463 = arith.addf %275, %462 : vector<16x64xf32>
    %c0_277 = arith.constant 0 : index
    %c0_278 = arith.constant 0 : index
    %464 = vector.load %arg26[%c0_277, %c0_278] : memref<1x64xf32, #tpu.memory_space<vmem>>, vector<1x64xf32>
    %465 = vector.shape_cast %464 : vector<1x64xf32> to vector<64xf32>
    %c0_279 = arith.constant 0 : index
    %c0_280 = arith.constant 0 : index
    %466 = vector.load %arg27[%c0_279, %c0_280] : memref<1x64xf32, #tpu.memory_space<vmem>>, vector<1x64xf32>
    %467 = vector.shape_cast %466 : vector<1x64xf32> to vector<64xf32>
    %cst_281 = arith.constant dense<0.000000e+00> : vector<16xf32>
    %468 = vector.multi_reduction <add>, %463, %cst_281 [1] : vector<16x64xf32> to vector<16xf32>
    %469 = vector.shape_cast %468 : vector<16xf32> to vector<16x1xf32>
    %cst_282 = arith.constant 6.400000e+01 : f32
    %470 = vector.broadcast %cst_282 : f32 to vector<16x1xf32>
    %471 = arith.divf %469, %470 : vector<16x1xf32>
    %472 = vector.broadcast %471 : vector<16x1xf32> to vector<16x64xf32>
    %473 = arith.subf %463, %472 : vector<16x64xf32>
    %474 = arith.mulf %473, %473 : vector<16x64xf32>
    %cst_283 = arith.constant dense<0.000000e+00> : vector<16xf32>
    %475 = vector.multi_reduction <add>, %474, %cst_283 [1] : vector<16x64xf32> to vector<16xf32>
    %476 = vector.shape_cast %475 : vector<16xf32> to vector<16x1xf32>
    %cst_284 = arith.constant 6.400000e+01 : f32
    %477 = vector.broadcast %cst_284 : f32 to vector<16x1xf32>
    %478 = arith.divf %476, %477 : vector<16x1xf32>
    %479 = vector.broadcast %471 : vector<16x1xf32> to vector<16x64xf32>
    %480 = arith.subf %463, %479 : vector<16x64xf32>
    %cst_285 = arith.constant 9.99999974E-6 : f32
    %481 = vector.broadcast %cst_285 : f32 to vector<16x1xf32>
    %482 = arith.addf %478, %481 : vector<16x1xf32>
    %483 = math.rsqrt %482 : vector<16x1xf32>
    %484 = vector.broadcast %483 : vector<16x1xf32> to vector<16x64xf32>
    %485 = arith.mulf %480, %484 : vector<16x64xf32>
    %486 = vector.shape_cast %465 : vector<64xf32> to vector<1x64xf32>
    %487 = vector.broadcast %486 : vector<1x64xf32> to vector<16x64xf32>
    %488 = arith.mulf %485, %487 : vector<16x64xf32>
    %489 = vector.shape_cast %467 : vector<64xf32> to vector<1x64xf32>
    %490 = vector.broadcast %489 : vector<1x64xf32> to vector<16x64xf32>
    %491 = arith.addf %488, %490 : vector<16x64xf32>
    %492 = arith.truncf %491 : vector<16x64xf32> to vector<16x64xbf16>
    %c0_286 = arith.constant 0 : index
    %c0_287 = arith.constant 0 : index
    %493 = vector.load %arg28[%c0_286, %c0_287] : memref<64x128xbf16, #tpu.memory_space<vmem>>, vector<64x128xbf16>
    %cst_288 = arith.constant dense<0.000000e+00> : vector<16x128xf32>
    %494 = tpu.matmul %492, %493, %cst_288 {dimension_numbers = #tpu.dot_dimension_numbers<[1], [0], [0], [1], [0, 0, 1, 1], [], []>} : vector<16x64xbf16>, vector<64x128xbf16>, vector<16x128xf32> -> vector<16x128xf32>
    %c0_289 = arith.constant 0 : index
    %c0_290 = arith.constant 0 : index
    %495 = vector.load %arg29[%c0_289, %c0_290] : memref<1x128xf32, #tpu.memory_space<vmem>>, vector<1x128xf32>
    %496 = vector.shape_cast %495 : vector<1x128xf32> to vector<128xf32>
    %497 = vector.shape_cast %496 : vector<128xf32> to vector<1x128xf32>
    %498 = vector.broadcast %497 : vector<1x128xf32> to vector<16x128xf32>
    %499 = arith.addf %494, %498 : vector<16x128xf32>
    %500 = arith.mulf %499, %499 : vector<16x128xf32>
    %501 = arith.mulf %499, %500 : vector<16x128xf32>
    %cst_291 = arith.constant 4.471500e-02 : f32
    %502 = vector.broadcast %cst_291 : f32 to vector<16x128xf32>
    %503 = arith.mulf %502, %501 : vector<16x128xf32>
    %504 = arith.addf %499, %503 : vector<16x128xf32>
    %cst_292 = arith.constant 0.797884583 : f32
    %505 = vector.broadcast %cst_292 : f32 to vector<16x128xf32>
    %506 = arith.mulf %505, %504 : vector<16x128xf32>
    %507 = math.tanh %506 : vector<16x128xf32>
    %cst_293 = arith.constant 1.000000e+00 : f32
    %508 = vector.broadcast %cst_293 : f32 to vector<16x128xf32>
    %509 = arith.addf %508, %507 : vector<16x128xf32>
    %cst_294 = arith.constant 5.000000e-01 : f32
    %510 = vector.broadcast %cst_294 : f32 to vector<16x128xf32>
    %511 = arith.mulf %510, %509 : vector<16x128xf32>
    %512 = arith.mulf %499, %511 : vector<16x128xf32>
    %513 = arith.truncf %512 : vector<16x128xf32> to vector<16x128xbf16>
    %c0_295 = arith.constant 0 : index
    %c0_296 = arith.constant 0 : index
    %514 = vector.load %arg30[%c0_295, %c0_296] : memref<128x64xbf16, #tpu.memory_space<vmem>>, vector<128x64xbf16>
    %cst_297 = arith.constant dense<0.000000e+00> : vector<16x64xf32>
    %515 = tpu.matmul %513, %514, %cst_297 {dimension_numbers = #tpu.dot_dimension_numbers<[1], [0], [0], [1], [0, 0, 1, 1], [], []>} : vector<16x128xbf16>, vector<128x64xbf16>, vector<16x64xf32> -> vector<16x64xf32>
    %c0_298 = arith.constant 0 : index
    %c0_299 = arith.constant 0 : index
    %516 = vector.load %arg31[%c0_298, %c0_299] : memref<1x64xf32, #tpu.memory_space<vmem>>, vector<1x64xf32>
    %517 = vector.shape_cast %516 : vector<1x64xf32> to vector<64xf32>
    %518 = vector.shape_cast %517 : vector<64xf32> to vector<1x64xf32>
    %519 = vector.broadcast %518 : vector<1x64xf32> to vector<16x64xf32>
    %520 = arith.addf %515, %519 : vector<16x64xf32>
    %521 = arith.addf %491, %520 : vector<16x64xf32>
    %c0_300 = arith.constant 0 : index
    %c0_301 = arith.constant 0 : index
    %522 = vector.load %arg32[%c0_300, %c0_301] : memref<1x64xf32, #tpu.memory_space<vmem>>, vector<1x64xf32>
    %523 = vector.shape_cast %522 : vector<1x64xf32> to vector<64xf32>
    %c0_302 = arith.constant 0 : index
    %c0_303 = arith.constant 0 : index
    %524 = vector.load %arg33[%c0_302, %c0_303] : memref<1x64xf32, #tpu.memory_space<vmem>>, vector<1x64xf32>
    %525 = vector.shape_cast %524 : vector<1x64xf32> to vector<64xf32>
    %cst_304 = arith.constant dense<0.000000e+00> : vector<16xf32>
    %526 = vector.multi_reduction <add>, %521, %cst_304 [1] : vector<16x64xf32> to vector<16xf32>
    %527 = vector.shape_cast %526 : vector<16xf32> to vector<16x1xf32>
    %cst_305 = arith.constant 6.400000e+01 : f32
    %528 = vector.broadcast %cst_305 : f32 to vector<16x1xf32>
    %529 = arith.divf %527, %528 : vector<16x1xf32>
    %530 = vector.broadcast %529 : vector<16x1xf32> to vector<16x64xf32>
    %531 = arith.subf %521, %530 : vector<16x64xf32>
    %532 = arith.mulf %531, %531 : vector<16x64xf32>
    %cst_306 = arith.constant dense<0.000000e+00> : vector<16xf32>
    %533 = vector.multi_reduction <add>, %532, %cst_306 [1] : vector<16x64xf32> to vector<16xf32>
    %534 = vector.shape_cast %533 : vector<16xf32> to vector<16x1xf32>
    %cst_307 = arith.constant 6.400000e+01 : f32
    %535 = vector.broadcast %cst_307 : f32 to vector<16x1xf32>
    %536 = arith.divf %534, %535 : vector<16x1xf32>
    %537 = vector.broadcast %529 : vector<16x1xf32> to vector<16x64xf32>
    %538 = arith.subf %521, %537 : vector<16x64xf32>
    %cst_308 = arith.constant 9.99999974E-6 : f32
    %539 = vector.broadcast %cst_308 : f32 to vector<16x1xf32>
    %540 = arith.addf %536, %539 : vector<16x1xf32>
    %541 = math.rsqrt %540 : vector<16x1xf32>
    %542 = vector.broadcast %541 : vector<16x1xf32> to vector<16x64xf32>
    %543 = arith.mulf %538, %542 : vector<16x64xf32>
    %544 = vector.shape_cast %523 : vector<64xf32> to vector<1x64xf32>
    %545 = vector.broadcast %544 : vector<1x64xf32> to vector<16x64xf32>
    %546 = arith.mulf %543, %545 : vector<16x64xf32>
    %547 = vector.shape_cast %525 : vector<64xf32> to vector<1x64xf32>
    %548 = vector.broadcast %547 : vector<1x64xf32> to vector<16x64xf32>
    %549 = arith.addf %546, %548 : vector<16x64xf32>
    %550 = arith.truncf %549 : vector<16x64xf32> to vector<16x64xbf16>
    %c0_309 = arith.constant 0 : index
    %c0_310 = arith.constant 0 : index
    %551 = vector.load %arg34[%c0_309, %c0_310] : memref<64x128xbf16, #tpu.memory_space<vmem>>, vector<64x128xbf16>
    %cst_311 = arith.constant dense<0.000000e+00> : vector<16x128xf32>
    %552 = tpu.matmul %550, %551, %cst_311 {dimension_numbers = #tpu.dot_dimension_numbers<[1], [0], [0], [1], [0, 0, 1, 1], [], []>} : vector<16x64xbf16>, vector<64x128xbf16>, vector<16x128xf32> -> vector<16x128xf32>
    %c0_312 = arith.constant 0 : index
    %c0_313 = arith.constant 0 : index
    %553 = vector.load %arg35[%c0_312, %c0_313] : memref<1x128xf32, #tpu.memory_space<vmem>>, vector<1x128xf32>
    %554 = vector.shape_cast %553 : vector<1x128xf32> to vector<128xf32>
    %555 = vector.shape_cast %554 : vector<128xf32> to vector<1x128xf32>
    %556 = vector.broadcast %555 : vector<1x128xf32> to vector<16x128xf32>
    %557 = arith.addf %552, %556 : vector<16x128xf32>
    %c0_314 = arith.constant 0 : index
    %c0_315 = arith.constant 0 : index
    %558 = vector.load %arg36[%c0_314, %c0_315] : memref<16x128xf32, #tpu.memory_space<vmem>>, vector<16x128xf32>
    tpu.vector_store %arg36[%c0_314, %c0_315], %557 {strides = array<i32>} : memref<16x128xf32, #tpu.memory_space<vmem>>, vector<16x128xf32>,
    return
  }
}

</mosaic_0001>

<llo_original>
// kernel: absa_forward.1
$region0: #{absa_forward.1}
  #allocation0 [shape = 'u32[]', space=smem, size = 0x4, offset = 0x4, fixed_abs, tag = 'smem constant byte address 0x4 - core index']
  #allocation1 [shape = 'u32[144,128]{1,0:T(1,128)}', space=vmem, size = 0x12000, scoped, tag = 'internal scratch']
  %s0 = inlined_call_operand.smem [shape: u32[37], index: -1, kind: input, shape index: {}]
  %s1 = sld [smem:[%s0]]
  %s2 = scalar_lea.smem %s0, 1
  %s3 = sld [smem:[%s2]]
  %s4 = scalar_lea.smem %s0, 2
  %s5 = sld [smem:[%s4]]
  %s6 = scalar_lea.smem %s0, 3
  %s7 = sld [smem:[%s6]]
  %s8 = scalar_lea.smem %s0, 4
  %s9 = sld [smem:[%s8]]
  %s10 = scalar_lea.smem %s0, 5
  %s11 = sld [smem:[%s10]]
  %s12 = scalar_lea.smem %s0, 6
  %s13 = sld [smem:[%s12]]
  %s14 = scalar_lea.smem %s0, 7
  %s15 = sld [smem:[%s14]]
  %s16 = scalar_lea.smem %s0, 8
  %s17 = sld [smem:[%s16]]
  %s18 = scalar_lea.smem %s0, 9
  %s19 = sld [smem:[%s18]]
  %s20 = scalar_lea.smem %s0, 10
  %s21 = sld [smem:[%s20]]
  %s22 = scalar_lea.smem %s0, 11
  %s23 = sld [smem:[%s22]]
  %s24 = scalar_lea.smem %s0, 12
  %s25 = sld [smem:[%s24]]
  %s26 = scalar_lea.smem %s0, 13
  %s27 = sld [smem:[%s26]]
  %s28 = scalar_lea.smem %s0, 14
  %s29 = sld [smem:[%s28]]
  %s30 = scalar_lea.smem %s0, 15
  %s31 = sld [smem:[%s30]]
  %s32 = scalar_lea.smem %s0, 16
  %s33 = sld [smem:[%s32]]
  %s34 = scalar_lea.smem %s0, 17
  %s35 = sld [smem:[%s34]]
  %s36 = scalar_lea.smem %s0, 18
  %s37 = sld [smem:[%s36]]
  %s38 = scalar_lea.smem %s0, 19
  %s39 = sld [smem:[%s38]]
  %s40 = scalar_lea.smem %s0, 20
  %s41 = sld [smem:[%s40]]
  %s42 = scalar_lea.smem %s0, 21
  %s43 = sld [smem:[%s42]]
  %s44 = scalar_lea.smem %s0, 22
  %s45 = sld [smem:[%s44]]
  %s46 = scalar_lea.smem %s0, 23
  %s47 = sld [smem:[%s46]]
  %s48 = scalar_lea.smem %s0, 24
  %s49 = sld [smem:[%s48]]
  %s50 = scalar_lea.smem %s0, 25
  %s51 = sld [smem:[%s50]]
  %s52 = scalar_lea.smem %s0, 26
  %s53 = sld [smem:[%s52]]
  %s54 = scalar_lea.smem %s0, 27
  %s55 = sld [smem:[%s54]]
  %s56 = scalar_lea.smem %s0, 28
  %s57 = sld [smem:[%s56]]
  %s58 = scalar_lea.smem %s0, 29
  %s59 = sld [smem:[%s58]]
  %s60 = scalar_lea.smem %s0, 30
  %s61 = sld [smem:[%s60]]
  %s62 = scalar_lea.smem %s0, 31
  %s63 = sld [smem:[%s62]]
  %s64 = scalar_lea.smem %s0, 32
  %s65 = sld [smem:[%s64]]
  %s66 = scalar_lea.smem %s0, 33
  %s67 = sld [smem:[%s66]]
  %s68 = scalar_lea.smem %s0, 34
  %s69 = sld [smem:[%s68]]
  %s70 = scalar_lea.smem %s0, 35
  %s71 = sld [smem:[%s70]]
  %s72 = scalar_lea.smem %s0, 36
  %s73 = sld [smem:[%s72]]
  %s74 = sld [smem:[#allocation0]]
  $region154: #{absa_forward.1} parent=0
    _
  %s76 = ssub.s32 1, %s74
  %s77 = scalar_select 0, %s76, %s74
  // Predicated region
  $region2: #{absa_forward.1} parent=0 // pred_check
    _
  $region3: #{absa_forward.1} parent=0 // pred_check_branch
    %79 = sbr.rel (0) target = $region5
  $region4: #{absa_forward.1} parent=0 // pred_region
    _
  $region5: #{absa_forward.1} parent=0 // pred_fallthru
    _
  // Predicated region
  $region6: #{absa_forward.1} parent=0 // pred_check
    _
  $region7: #{absa_forward.1} parent=0 // pred_check_branch
    %81 = sbr.rel (0) target = $region9
  $region8: #{absa_forward.1} parent=0 // pred_region
    _
  $region9: #{absa_forward.1} parent=0 // pred_fallthru
    _
  // Predicated region
  $region10: #{absa_forward.1} parent=0 // pred_check
    _
  $region11: #{absa_forward.1} parent=0 // pred_check_branch
    %83 = sbr.rel (0) target = $region13
  $region12: #{absa_forward.1} parent=0 // pred_region
    _
  $region13: #{absa_forward.1} parent=0 // pred_fallthru
    _
  // Predicated region
  $region14: #{absa_forward.1} parent=0 // pred_check
    _
  $region15: #{absa_forward.1} parent=0 // pred_check_branch
    %85 = sbr.rel (0) target = $region17
  $region16: #{absa_forward.1} parent=0 // pred_region
    _
  $region17: #{absa_forward.1} parent=0 // pred_fallthru
    _
  // Predicated region
  $region18: #{absa_forward.1} parent=0 // pred_check
    _
  $region19: #{absa_forward.1} parent=0 // pred_check_branch
    %87 = sbr.rel (0) target = $region21
  $region20: #{absa_forward.1} parent=0 // pred_region
    _
  $region21: #{absa_forward.1} parent=0 // pred_fallthru
    _
  // Predicated region
  $region22: #{absa_forward.1} parent=0 // pred_check
    _
  $region23: #{absa_forward.1} parent=0 // pred_check_branch
    %89 = sbr.rel (0) target = $region25
  $region24: #{absa_forward.1} parent=0 // pred_region
    _
  $region25: #{absa_forward.1} parent=0 // pred_fallthru
    _
  // Predicated region
  $region26: #{absa_forward.1} parent=0 // pred_check
    _
  $region27: #{absa_forward.1} parent=0 // pred_check_branch
    %91 = sbr.rel (0) target = $region29
  $region28: #{absa_forward.1} parent=0 // pred_region
    _
  $region29: #{absa_forward.1} parent=0 // pred_fallthru
    _
  // Predicated region
  $region30: #{absa_forward.1} parent=0 // pred_check
    _
  $region31: #{absa_forward.1} parent=0 // pred_check_branch
    %93 = sbr.rel (0) target = $region33
  $region32: #{absa_forward.1} parent=0 // pred_region
    _
  $region33: #{absa_forward.1} parent=0 // pred_fallthru
    _
  // Predicated region
  $region34: #{absa_forward.1} parent=0 // pred_check
    _
  $region35: #{absa_forward.1} parent=0 // pred_check_branch
    %95 = sbr.rel (0) target = $region37
  $region36: #{absa_forward.1} parent=0 // pred_region
    _
  $region37: #{absa_forward.1} parent=0 // pred_fallthru
    _
  // Predicated region
  $region38: #{absa_forward.1} parent=0 // pred_check
    _
  $region39: #{absa_forward.1} parent=0 // pred_check_branch
    %97 = sbr.rel (0) target = $region41
  $region40: #{absa_forward.1} parent=0 // pred_region
    _
  $region41: #{absa_forward.1} parent=0 // pred_fallthru
    _
  // Predicated region
  $region42: #{absa_forward.1} parent=0 // pred_check
    _
  $region43: #{absa_forward.1} parent=0 // pred_check_branch
    %99 = sbr.rel (0) target = $region45
  $region44: #{absa_forward.1} parent=0 // pred_region
    _
  $region45: #{absa_forward.1} parent=0 // pred_fallthru
    _
  // Predicated region
  $region46: #{absa_forward.1} parent=0 // pred_check
    _
  $region47: #{absa_forward.1} parent=0 // pred_check_branch
    %101 = sbr.rel (0) target = $region49
  $region48: #{absa_forward.1} parent=0 // pred_region
    _
  $region49: #{absa_forward.1} parent=0 // pred_fallthru
    _
  // Predicated region
  $region50: #{absa_forward.1} parent=0 // pred_check
    _
  $region51: #{absa_forward.1} parent=0 // pred_check_branch
    %103 = sbr.rel (0) target = $region53
  $region52: #{absa_forward.1} parent=0 // pred_region
    _
  $region53: #{absa_forward.1} parent=0 // pred_fallthru
    _
  // Predicated region
  $region54: #{absa_forward.1} parent=0 // pred_check
    _
  $region55: #{absa_forward.1} parent=0 // pred_check_branch
    %105 = sbr.rel (0) target = $region57
  $region56: #{absa_forward.1} parent=0 // pred_region
    _
  $region57: #{absa_forward.1} parent=0 // pred_fallthru
    _
  // Predicated region
  $region58: #{absa_forward.1} parent=0 // pred_check
    _
  $region59: #{absa_forward.1} parent=0 // pred_check_branch
    %107 = sbr.rel (0) target = $region61
  $region60: #{absa_forward.1} parent=0 // pred_region
    _
  $region61: #{absa_forward.1} parent=0 // pred_fallthru
    _
  // Predicated region
  $region62: #{absa_forward.1} parent=0 // pred_check
    _
  $region63: #{absa_forward.1} parent=0 // pred_check_branch
    %109 = sbr.rel (0) target = $region65
  $region64: #{absa_forward.1} parent=0 // pred_region
    _
  $region65: #{absa_forward.1} parent=0 // pred_fallthru
    _
  // Predicated region
  $region66: #{absa_forward.1} parent=0 // pred_check
    _
  $region67: #{absa_forward.1} parent=0 // pred_check_branch
    %111 = sbr.rel (0) target = $region69
  $region68: #{absa_forward.1} parent=0 // pred_region
    _
  $region69: #{absa_forward.1} parent=0 // pred_fallthru
    _
  // Predicated region
  $region70: #{absa_forward.1} parent=0 // pred_check
    _
  $region71: #{absa_forward.1} parent=0 // pred_check_branch
    %113 = sbr.rel (0) target = $region73
  $region72: #{absa_forward.1} parent=0 // pred_region
    _
  $region73: #{absa_forward.1} parent=0 // pred_fallthru
    _
  // Predicated region
  $region74: #{absa_forward.1} parent=0 // pred_check
    _
  $region75: #{absa_forward.1} parent=0 // pred_check_branch
    %115 = sbr.rel (0) target = $region77
  $region76: #{absa_forward.1} parent=0 // pred_region
    _
  $region77: #{absa_forward.1} parent=0 // pred_fallthru
    _
  // Predicated region
  $region78: #{absa_forward.1} parent=0 // pred_check
    _
  $region79: #{absa_forward.1} parent=0 // pred_check_branch
    %117 = sbr.rel (0) target = $region81
  $region80: #{absa_forward.1} parent=0 // pred_region
    _
  $region81: #{absa_forward.1} parent=0 // pred_fallthru
    _
  // Predicated region
  $region82: #{absa_forward.1} parent=0 // pred_check
    _
  $region83: #{absa_forward.1} parent=0 // pred_check_branch
    %119 = sbr.rel (0) target = $region85
  $region84: #{absa_forward.1} parent=0 // pred_region
    _
  $region85: #{absa_forward.1} parent=0 // pred_fallthru
    _
  // Predicated region
  $region86: #{absa_forward.1} parent=0 // pred_check
    _
  $region87: #{absa_forward.1} parent=0 // pred_check_branch
    %121 = sbr.rel (0) target = $region89
  $region88: #{absa_forward.1} parent=0 // pred_region
    _
  $region89: #{absa_forward.1} parent=0 // pred_fallthru
    _
  // Predicated region
  $region90: #{absa_forward.1} parent=0 // pred_check
    _
  $region91: #{absa_forward.1} parent=0 // pred_check_branch
    %123 = sbr.rel (0) target = $region93
  $region92: #{absa_forward.1} parent=0 // pred_region
    _
  $region93: #{absa_forward.1} parent=0 // pred_fallthru
    _
  // Predicated region
  $region94: #{absa_forward.1} parent=0 // pred_check
    _
  $region95: #{absa_forward.1} parent=0 // pred_check_branch
    %125 = sbr.rel (0) target = $region97
  $region96: #{absa_forward.1} parent=0 // pred_region
    _
  $region97: #{absa_forward.1} parent=0 // pred_fallthru
    _
  // Predicated region
  $region98: #{absa_forward.1} parent=0 // pred_check
    _
  $region99: #{absa_forward.1} parent=0 // pred_check_branch
    %127 = sbr.rel (0) target = $region101
  $region100: #{absa_forward.1} parent=0 // pred_region
    _
  $region101: #{absa_forward.1} parent=0 // pred_fallthru
    _
  // Predicated region
  $region102: #{absa_forward.1} parent=0 // pred_check
    _
  $region103: #{absa_forward.1} parent=0 // pred_check_branch
    %129 = sbr.rel (0) target = $region105
  $region104: #{absa_forward.1} parent=0 // pred_region
    _
  $region105: #{absa_forward.1} parent=0 // pred_fallthru
    _
  // Predicated region
  $region106: #{absa_forward.1} parent=0 // pred_check
    _
  $region107: #{absa_forward.1} parent=0 // pred_check_branch
    %131 = sbr.rel (0) target = $region109
  $region108: #{absa_forward.1} parent=0 // pred_region
    _
  $region109: #{absa_forward.1} parent=0 // pred_fallthru
    _
  // Predicated region
  $region110: #{absa_forward.1} parent=0 // pred_check
    _
  $region111: #{absa_forward.1} parent=0 // pred_check_branch
    %133 = sbr.rel (0) target = $region113
  $region112: #{absa_forward.1} parent=0 // pred_region
    _
  $region113: #{absa_forward.1} parent=0 // pred_fallthru
    _
  // Predicated region
  $region114: #{absa_forward.1} parent=0 // pred_check
    _
  $region115: #{absa_forward.1} parent=0 // pred_check_branch
    %135 = sbr.rel (0) target = $region117
  $region116: #{absa_forward.1} parent=0 // pred_region
    _
  $region117: #{absa_forward.1} parent=0 // pred_fallthru
    _
  // Predicated region
  $region118: #{absa_forward.1} parent=0 // pred_check
    _
  $region119: #{absa_forward.1} parent=0 // pred_check_branch
    %137 = sbr.rel (0) target = $region121
  $region120: #{absa_forward.1} parent=0 // pred_region
    _
  $region121: #{absa_forward.1} parent=0 // pred_fallthru
    _
  // Predicated region
  $region122: #{absa_forward.1} parent=0 // pred_check
    _
  $region123: #{absa_forward.1} parent=0 // pred_check_branch
    %139 = sbr.rel (0) target = $region125
  $region124: #{absa_forward.1} parent=0 // pred_region
    _
  $region125: #{absa_forward.1} parent=0 // pred_fallthru
    _
  // Predicated region
  $region126: #{absa_forward.1} parent=0 // pred_check
    _
  $region127: #{absa_forward.1} parent=0 // pred_check_branch
    %141 = sbr.rel (0) target = $region129
  $region128: #{absa_forward.1} parent=0 // pred_region
    _
  $region129: #{absa_forward.1} parent=0 // pred_fallthru
    _
  // Predicated region
  $region130: #{absa_forward.1} parent=0 // pred_check
    _
  $region131: #{absa_forward.1} parent=0 // pred_check_branch
    %143 = sbr.rel (0) target = $region133
  $region132: #{absa_forward.1} parent=0 // pred_region
    _
  $region133: #{absa_forward.1} parent=0 // pred_fallthru
    _
  // Predicated region
  $region134: #{absa_forward.1} parent=0 // pred_check
    _
  $region135: #{absa_forward.1} parent=0 // pred_check_branch
    %145 = sbr.rel (0) target = $region137
  $region136: #{absa_forward.1} parent=0 // pred_region
    _
  $region137: #{absa_forward.1} parent=0 // pred_fallthru
    _
  // Predicated region
  $region138: #{absa_forward.1} parent=0 // pred_check
    _
  $region139: #{absa_forward.1} parent=0 // pred_check_branch
    %147 = sbr.rel (0) target = $region141
  $region140: #{absa_forward.1} parent=0 // pred_region
    _
  $region141: #{absa_forward.1} parent=0 // pred_fallthru
    _
  // Predicated region
  $region142: #{absa_forward.1} parent=0 // pred_check
    _
  $region143: #{absa_forward.1} parent=0 // pred_check_branch
    %149 = sbr.rel (0) target = $region145
  $region144: #{absa_forward.1} parent=0 // pred_region
    _
  $region145: #{absa_forward.1} parent=0 // pred_fallthru
    _
  %v151 = vld [vmem:[%s1] sm:$0xff]
  %v152 = vld [vmem:[%s1 + $0x8] sm:$0xff]
  %v153 = vld [vmem:[%s3] sm:$0xff]
  %v154 = vld [vmem:[%s3 + $0x8] sm:$0xff]
  %v155 = vpack.c.bf16 %v152, %v151
  %v156 = vld [vmem:[%s5] sm:$0xf]
  %v157 = vld [vmem:[%s5 + $0x4] sm:$0xf]
  %v158 = vld [vmem:[%s5 + $0x8] sm:$0xf]
  %v159 = vld [vmem:[%s5 + $0xc] sm:$0xf]
  %v160 = vld [vmem:[%s5 + $0x10] sm:$0xf]
  %v161 = vld [vmem:[%s5 + $0x14] sm:$0xf]
  %v162 = vld [vmem:[%s5 + $0x18] sm:$0xf]
  %v163 = vld [vmem:[%s5 + $0x1c] sm:$0xf]
  %v164 = vld [vmem:[%s7] sm:$0x1]
  %v166 = vlaneseq
  %v167 = vshrl.u32 %v166, 7
  %v168 = vsub.s32 0, %v167
  %v169 = vrot.slane %v164, %v168
  %v179 = vunpack.c.l.b16 %v156
  %v180 = vunpack.c.l.b16 %v157
  %v181 = vunpack.c.l.b16 %v158
  %v182 = vunpack.c.l.b16 %v159
  %v183 = vunpack.c.l.b16 %v160
  %v184 = vunpack.c.l.b16 %v161
  %v185 = vunpack.c.l.b16 %v162
  %v186 = vunpack.c.l.b16 %v163
  %v187 = vpack.c.b16 %v180, %v179
  %v188 = vpack.c.b16 %v182, %v181
  %v189 = vpack.c.b16 %v184, %v183
  %v190 = vpack.c.b16 %v186, %v185
  %vm195 = vcmask 523264
  %v197 = vsel %vm195, %v155, 0
  %199 = vmatprep.subr.bf16.mxu0 0
  %200 = vmatpush1.bf16.msra.mxu0 0
  %201 = vmatprep.subr.bf16.mxu0 0
  %202 = vmatpush1.bf16.msra.mxu0 0
  %203 = vmatprep.subr.bf16.mxu0 0
  %204 = vmatpush1.bf16.msra.mxu0 0
  %205 = vmatprep.subr.bf16.mxu0 0
  %206 = vmatpush1.bf16.msra.mxu0 0
  %207 = vmatprep.subr.bf16.mxu0 0
  %208 = vmatpush1.bf16.msra.mxu0 %v190
  %209 = vmatprep.subr.bf16.mxu0 0
  %210 = vmatpush1.bf16.msra.mxu0 %v189
  %211 = vmatprep.subr.bf16.mxu0 0
  %212 = vmatpush1.bf16.msra.mxu0 %v188
  %213 = vmatprep.subr.bf16.mxu0 0
  %214 = vmatpush1.bf16.msra.mxu0 %v187
  %215 = vmatprep.subr.bf16.mxu0 0
  %216 = vmatpush2.bf16.msra.mxu0 0
  %217 = vmatprep.subr.bf16.mxu0 0
  %218 = vmatpush2.bf16.msra.mxu0 0
  %219 = vmatprep.subr.bf16.mxu0 0
  %220 = vmatpush2.bf16.msra.mxu0 0
  %221 = vmatprep.subr.bf16.mxu0 0
  %222 = vmatpush2.bf16.msra.mxu0 0
  %223 = vmatprep.subr.bf16.mxu0 0
  %224 = vmatpush2.bf16.msra.mxu0 0
  %225 = vmatprep.subr.bf16.mxu0 0
  %226 = vmatpush2.bf16.msra.mxu0 0
  %227 = vmatprep.subr.bf16.mxu0 0
  %228 = vmatpush2.bf16.msra.mxu0 0
  %229 = vmatprep.subr.bf16.mxu0 0
  %230 = vmatpush2.bf16.msra.mxu0 0
  %231 = vmatprep.mubr.bf16.mxu0 0
  %232 = vmatmul.mubr.bf16.gmra.mxu0 %v197
  %v233 = vpop.f32.mrf.mxu0
  %v234 = vadd.f32 %v169, %v233
  %v235 = vpop.f32.mrf.mxu0
  %v236 = vpop.f32.mrf.mxu0
  %v237 = vadd.f32 %v169, %v236
  %v238 = vpop.f32.mrf.mxu0
  %239 = vdwg.mxu0
  %v240 = vld [vmem:[%s9] sm:$0xf]
  %v241 = vld [vmem:[%s9 + $0x4] sm:$0xf]
  %v242 = vld [vmem:[%s9 + $0x8] sm:$0xf]
  %v243 = vld [vmem:[%s9 + $0xc] sm:$0xf]
  %v244 = vld [vmem:[%s9 + $0x10] sm:$0xf]
  %v245 = vld [vmem:[%s9 + $0x14] sm:$0xf]
  %v246 = vld [vmem:[%s9 + $0x18] sm:$0xf]
  %v247 = vld [vmem:[%s9 + $0x1c] sm:$0xf]
  %v248 = vld [vmem:[%s11] sm:$0x1]
  %v250 = vlaneseq
  %v251 = vshrl.u32 %v250, 7
  %v252 = vsub.s32 0, %v251
  %v253 = vrot.slane %v248, %v252
  %v263 = vunpack.c.l.b16 %v240
  %v264 = vunpack.c.l.b16 %v241
  %v265 = vunpack.c.l.b16 %v242
  %v266 = vunpack.c.l.b16 %v243
  %v267 = vunpack.c.l.b16 %v244
  %v268 = vunpack.c.l.b16 %v245
  %v269 = vunpack.c.l.b16 %v246
  %v270 = vunpack.c.l.b16 %v247
  %v271 = vpack.c.b16 %v264, %v263
  %v272 = vpack.c.b16 %v266, %v265
  %v273 = vpack.c.b16 %v268, %v267
  %v274 = vpack.c.b16 %v270, %v269
  %279 = vmatprep.subr.bf16.mxu0 0
  %280 = vmatpush1.bf16.msra.mxu0 0
  %281 = vmatprep.subr.bf16.mxu0 0
  %282 = vmatpush1.bf16.msra.mxu0 0
  %283 = vmatprep.subr.bf16.mxu0 0
  %284 = vmatpush1.bf16.msra.mxu0 0
  %285 = vmatprep.subr.bf16.mxu0 0
  %286 = vmatpush1.bf16.msra.mxu0 0
  %287 = vmatprep.subr.bf16.mxu0 0
  %288 = vmatpush1.bf16.msra.mxu0 %v274
  %289 = vmatprep.subr.bf16.mxu0 0
  %290 = vmatpush1.bf16.msra.mxu0 %v273
  %291 = vmatprep.subr.bf16.mxu0 0
  %292 = vmatpush1.bf16.msra.mxu0 %v272
  %293 = vmatprep.subr.bf16.mxu0 0
  %294 = vmatpush1.bf16.msra.mxu0 %v271
  %295 = vmatprep.subr.bf16.mxu0 0
  %296 = vmatpush2.bf16.msra.mxu0 0
  %297 = vmatprep.subr.bf16.mxu0 0
  %298 = vmatpush2.bf16.msra.mxu0 0
  %299 = vmatprep.subr.bf16.mxu0 0
  %300 = vmatpush2.bf16.msra.mxu0 0
  %301 = vmatprep.subr.bf16.mxu0 0
  %302 = vmatpush2.bf16.msra.mxu0 0
  %303 = vmatprep.subr.bf16.mxu0 0
  %304 = vmatpush2.bf16.msra.mxu0 0
  %305 = vmatprep.subr.bf16.mxu0 0
  %306 = vmatpush2.bf16.msra.mxu0 0
  %307 = vmatprep.subr.bf16.mxu0 0
  %308 = vmatpush2.bf16.msra.mxu0 0
  %309 = vmatprep.subr.bf16.mxu0 0
  %310 = vmatpush2.bf16.msra.mxu0 0
  %311 = vmatprep.mubr.bf16.mxu0 0
  %312 = vmatmul.mubr.bf16.gmra.mxu0 %v197
  %v313 = vpop.f32.mrf.mxu0
  %v314 = vadd.f32 %v253, %v313
  %v315 = vpop.f32.mrf.mxu0
  %v316 = vpop.f32.mrf.mxu0
  %v317 = vadd.f32 %v253, %v316
  %v318 = vpop.f32.mrf.mxu0
  %319 = vdwg.mxu0
  %v320 = vld [vmem:[%s13] sm:$0xf]
  %v321 = vld [vmem:[%s13 + $0x4] sm:$0xf]
  %v322 = vld [vmem:[%s13 + $0x8] sm:$0xf]
  %v323 = vld [vmem:[%s13 + $0xc] sm:$0xf]
  %v324 = vld [vmem:[%s13 + $0x10] sm:$0xf]
  %v325 = vld [vmem:[%s13 + $0x14] sm:$0xf]
  %v326 = vld [vmem:[%s13 + $0x18] sm:$0xf]
  %v327 = vld [vmem:[%s13 + $0x1c] sm:$0xf]
  %v328 = vld [vmem:[%s15] sm:$0x1]
  %v330 = vlaneseq
  %v331 = vshrl.u32 %v330, 7
  %v332 = vsub.s32 0, %v331
  %v333 = vrot.slane %v328, %v332
  %v343 = vunpack.c.l.b16 %v320
  %v344 = vunpack.c.l.b16 %v321
  %v345 = vunpack.c.l.b16 %v322
  %v346 = vunpack.c.l.b16 %v323
  %v347 = vunpack.c.l.b16 %v324
  %v348 = vunpack.c.l.b16 %v325
  %v349 = vunpack.c.l.b16 %v326
  %v350 = vunpack.c.l.b16 %v327
  %v351 = vpack.c.b16 %v344, %v343
  %v352 = vpack.c.b16 %v346, %v345
  %v353 = vpack.c.b16 %v348, %v347
  %v354 = vpack.c.b16 %v350, %v349
  %359 = vmatprep.subr.bf16.mxu0 0
  %360 = vmatpush1.bf16.msra.mxu0 0
  %361 = vmatprep.subr.bf16.mxu0 0
  %362 = vmatpush1.bf16.msra.mxu0 0
  %363 = vmatprep.subr.bf16.mxu0 0
  %364 = vmatpush1.bf16.msra.mxu0 0
  %365 = vmatprep.subr.bf16.mxu0 0
  %366 = vmatpush1.bf16.msra.mxu0 0
  %367 = vmatprep.subr.bf16.mxu0 0
  %368 = vmatpush1.bf16.msra.mxu0 %v354
  %369 = vmatprep.subr.bf16.mxu0 0
  %370 = vmatpush1.bf16.msra.mxu0 %v353
  %371 = vmatprep.subr.bf16.mxu0 0
  %372 = vmatpush1.bf16.msra.mxu0 %v352
  %373 = vmatprep.subr.bf16.mxu0 0
  %374 = vmatpush1.bf16.msra.mxu0 %v351
  %375 = vmatprep.subr.bf16.mxu0 0
  %376 = vmatpush2.bf16.msra.mxu0 0
  %377 = vmatprep.subr.bf16.mxu0 0
  %378 = vmatpush2.bf16.msra.mxu0 0
  %379 = vmatprep.subr.bf16.mxu0 0
  %380 = vmatpush2.bf16.msra.mxu0 0
  %381 = vmatprep.subr.bf16.mxu0 0
  %382 = vmatpush2.bf16.msra.mxu0 0
  %383 = vmatprep.subr.bf16.mxu0 0
  %384 = vmatpush2.bf16.msra.mxu0 0
  %385 = vmatprep.subr.bf16.mxu0 0
  %386 = vmatpush2.bf16.msra.mxu0 0
  %387 = vmatprep.subr.bf16.mxu0 0
  %388 = vmatpush2.bf16.msra.mxu0 0
  %389 = vmatprep.subr.bf16.mxu0 0
  %390 = vmatpush2.bf16.msra.mxu0 0
  %391 = vmatprep.mubr.bf16.mxu0 0
  %392 = vmatmul.mubr.bf16.gmra.mxu0 %v197
  %v393 = vpop.f32.mrf.mxu0
  %v394 = vadd.f32 %v333, %v393
  %v395 = vpop.f32.mrf.mxu0
  %v396 = vpop.f32.mrf.mxu0
  %v397 = vadd.f32 %v333, %v396
  %v398 = vpop.f32.mrf.mxu0
  %399 = vdwg.mxu0
  %v400 = vpack.c.bf16 %v237, %v234
  %v401 = vpack.c.bf16 %v317, %v314
  %vm402 = vcmask 130048
  %v404 = vsel %vm402, %v400, 0
  %v407 = vsel %vm402, %v401, 0
  %409 = vmatprep.subr.bf16.mxu0 0
  %410 = vmatpush1.bf16.xpose.msra.mxu0 0
  %411 = vmatprep.subr.bf16.mxu0 0
  %412 = vmatpush1.bf16.xpose.msra.mxu0 0
  %413 = vmatprep.subr.bf16.mxu0 0
  %414 = vmatpush1.bf16.xpose.msra.mxu0 0
  %415 = vmatprep.subr.bf16.mxu0 0
  %416 = vmatpush1.bf16.xpose.msra.mxu0 0
  %417 = vmatprep.subr.bf16.mxu0 0
  %418 = vmatpush1.bf16.xpose.msra.mxu0 0
  %419 = vmatprep.subr.bf16.mxu0 0
  %420 = vmatpush1.bf16.xpose.msra.mxu0 0
  %421 = vmatprep.subr.bf16.mxu0 0
  %422 = vmatpush1.bf16.xpose.msra.mxu0 0
  %423 = vmatprep.subr.bf16.mxu0 0
  %424 = vmatpush1.bf16.xpose.msra.mxu0 %v407
  %425 = vmatprep.subr.bf16.mxu0 0
  %426 = vmatpush2.bf16.xpose.msra.mxu0 0
  %427 = vmatprep.subr.bf16.mxu0 0
  %428 = vmatpush2.bf16.xpose.msra.mxu0 0
  %429 = vmatprep.subr.bf16.mxu0 0
  %430 = vmatpush2.bf16.xpose.msra.mxu0 0
  %431 = vmatprep.subr.bf16.mxu0 0
  %432 = vmatpush2.bf16.xpose.msra.mxu0 0
  %433 = vmatprep.subr.bf16.mxu0 0
  %434 = vmatpush2.bf16.xpose.msra.mxu0 0
  %435 = vmatprep.subr.bf16.mxu0 0
  %436 = vmatpush2.bf16.xpose.msra.mxu0 0
  %437 = vmatprep.subr.bf16.mxu0 0
  %438 = vmatpush2.bf16.xpose.msra.mxu0 0
  %439 = vmatprep.subr.bf16.mxu0 0
  %440 = vmatpush2.bf16.xpose.msra.mxu0 0
  %441 = vmatprep.mubr.bf16.mxu0 0
  %442 = vmatmul.mubr.bf16.gmra.mxu0 %v404
  %v443 = vpop.f32.mrf.mxu0
  %v444 = vadd.f32 0.0, %v443
  %v445 = vpop.f32.mrf.mxu0
  %v446 = vpop.f32.mrf.mxu0
  %v447 = vadd.f32 0.0, %v446
  %v448 = vpop.f32.mrf.mxu0
  %449 = vdwg.mxu0
  %v450 = vmul.f32 %v444, 0.25
  %v451 = vmul.f32 %v447, 0.25
  %v452 = vadd.f32 %v450, %v153
  %v453 = vadd.f32 %v451, %v154
  %v454 = vsel %vm402, %v452, -inf
  %455 = vmax.xlane.f32.xlu0 %v454
  %v456 = vpop.xlane.xlu0 %455
  %v457 = vsel %vm402, %v453, -inf
  %458 = vmax.xlane.f32.xlu0 %v457
  %v459 = vpop.xlane.xlu0 %458
  %v460 = vsub.f32 %v452, %v456
  %v461 = vsub.f32 %v453, %v459
  %v462 = vmul.f32 %v460, 1.442695
  %v463 = vpow.pop %v462
  %v464 = vmul.f32 %v461, 1.442695
  %v465 = vpow.pop %v464
  %v466 = vsel %vm402, %v463, 0.0
  %467 = vadd.xlane.f32.xlu0 %v466
  %v468 = vpop.xlane.xlu0 %467
  %v469 = vsel %vm402, %v465, 0.0
  %470 = vadd.xlane.f32.xlu0 %v469
  %v471 = vpop.xlane.xlu0 %470
  %v472 = vrcp.pop %v468
  %v473 = vrcp.pop %v471
  %v474 = vmul.f32 %v463, %v472
  %v475 = vmul.f32 %v465, %v473
  %v476 = vpack.c.bf16 %v475, %v474
  %v477 = vpack.c.bf16 %v397, %v394
  %v479 = vsel %vm402, %v476, 0
  %481 = vmatprep.subr.bf16.mxu0 0
  %482 = vmatpush1.bf16.msra.mxu0 0
  %483 = vmatprep.subr.bf16.mxu0 0
  %484 = vmatpush1.bf16.msra.mxu0 0
  %485 = vmatprep.subr.bf16.mxu0 0
  %486 = vmatpush1.bf16.msra.mxu0 0
  %487 = vmatprep.subr.bf16.mxu0 0
  %488 = vmatpush1.bf16.msra.mxu0 0
  %489 = vmatprep.subr.bf16.mxu0 0
  %490 = vmatpush1.bf16.msra.mxu0 0
  %491 = vmatprep.subr.bf16.mxu0 0
  %492 = vmatpush1.bf16.msra.mxu0 0
  %493 = vmatprep.subr.bf16.mxu0 0
  %494 = vmatpush1.bf16.msra.mxu0 0
  %495 = vmatprep.subr.bf16.mxu0 0
  %496 = vmatpush1.bf16.msra.mxu0 %v477
  %497 = vmatprep.subr.bf16.mxu0 0
  %498 = vmatpush2.bf16.msra.mxu0 0
  %499 = vmatprep.subr.bf16.mxu0 0
  %500 = vmatpush2.bf16.msra.mxu0 0
  %501 = vmatprep.subr.bf16.mxu0 0
  %502 = vmatpush2.bf16.msra.mxu0 0
  %503 = vmatprep.subr.bf16.mxu0 0
  %504 = vmatpush2.bf16.msra.mxu0 0
  %505 = vmatprep.subr.bf16.mxu0 0
  %506 = vmatpush2.bf16.msra.mxu0 0
  %507 = vmatprep.subr.bf16.mxu0 0
  %508 = vmatpush2.bf16.msra.mxu0 0
  %509 = vmatprep.subr.bf16.mxu0 0
  %510 = vmatpush2.bf16.msra.mxu0 0
  %511 = vmatprep.subr.bf16.mxu0 0
  %512 = vmatpush2.bf16.msra.mxu0 0
  %513 = vmatprep.mubr.bf16.mxu0 0
  %514 = vmatmul.mubr.bf16.gmra.mxu0 %v479
  %v515 = vpop.f32.mrf.mxu0
  %v516 = vadd.f32 0.0, %v515
  %v517 = vpop.f32.mrf.mxu0
  %v518 = vpop.f32.mrf.mxu0
  %v519 = vadd.f32 0.0, %v518
  %v520 = vpop.f32.mrf.mxu0
  %521 = vdwg.mxu0
  %v522 = vpack.c.bf16 %v519, %v516
  %v523 = vld [vmem:[%s17] sm:$0xf]
  %v524 = vld [vmem:[%s17 + $0x4] sm:$0xf]
  %s525 = scalar_lea.vmem %s5, 32
  %v526 = vld [vmem:[%s525] sm:$0xf]
  %v527 = vld [vmem:[%s525 + $0x4] sm:$0xf]
  %v528 = vld [vmem:[%s525 + $0x8] sm:$0xf]
  %v529 = vld [vmem:[%s525 + $0xc] sm:$0xf]
  %v530 = vld [vmem:[%s525 + $0x10] sm:$0xf]
  %v531 = vld [vmem:[%s525 + $0x14] sm:$0xf]
  %v532 = vld [vmem:[%s525 + $0x18] sm:$0xf]
  %v533 = vld [vmem:[%s525 + $0x1c] sm:$0xf]
  %s534 = scalar_lea.vmem %s7, 1
  %v535 = vld [vmem:[%s534] sm:$0x1]
  %v537 = vlaneseq
  %v538 = vshrl.u32 %v537, 7
  %v539 = vsub.s32 0, %v538
  %v540 = vrot.slane %v535, %v539
  %v550 = vunpack.c.l.b16 %v526
  %v551 = vunpack.c.l.b16 %v527
  %v552 = vunpack.c.l.b16 %v528
  %v553 = vunpack.c.l.b16 %v529
  %v554 = vunpack.c.l.b16 %v530
  %v555 = vunpack.c.l.b16 %v531
  %v556 = vunpack.c.l.b16 %v532
  %v557 = vunpack.c.l.b16 %v533
  %v558 = vpack.c.b16 %v551, %v550
  %v559 = vpack.c.b16 %v553, %v552
  %v560 = vpack.c.b16 %v555, %v554
  %v561 = vpack.c.b16 %v557, %v556
  %566 = vmatprep.subr.bf16.mxu0 0
  %567 = vmatpush1.bf16.msra.mxu0 0
  %568 = vmatprep.subr.bf16.mxu0 0
  %569 = vmatpush1.bf16.msra.mxu0 0
  %570 = vmatprep.subr.bf16.mxu0 0
  %571 = vmatpush1.bf16.msra.mxu0 0
  %572 = vmatprep.subr.bf16.mxu0 0
  %573 = vmatpush1.bf16.msra.mxu0 0
  %574 = vmatprep.subr.bf16.mxu0 0
  %575 = vmatpush1.bf16.msra.mxu0 %v561
  %576 = vmatprep.subr.bf16.mxu0 0
  %577 = vmatpush1.bf16.msra.mxu0 %v560
  %578 = vmatprep.subr.bf16.mxu0 0
  %579 = vmatpush1.bf16.msra.mxu0 %v559
  %580 = vmatprep.subr.bf16.mxu0 0
  %581 = vmatpush1.bf16.msra.mxu0 %v558
  %582 = vmatprep.subr.bf16.mxu0 0
  %583 = vmatpush2.bf16.msra.mxu0 0
  %584 = vmatprep.subr.bf16.mxu0 0
  %585 = vmatpush2.bf16.msra.mxu0 0
  %586 = vmatprep.subr.bf16.mxu0 0
  %587 = vmatpush2.bf16.msra.mxu0 0
  %588 = vmatprep.subr.bf16.mxu0 0
  %589 = vmatpush2.bf16.msra.mxu0 0
  %590 = vmatprep.subr.bf16.mxu0 0
  %591 = vmatpush2.bf16.msra.mxu0 0
  %592 = vmatprep.subr.bf16.mxu0 0
  %593 = vmatpush2.bf16.msra.mxu0 0
  %594 = vmatprep.subr.bf16.mxu0 0
  %595 = vmatpush2.bf16.msra.mxu0 0
  %596 = vmatprep.subr.bf16.mxu0 0
  %597 = vmatpush2.bf16.msra.mxu0 0
  %598 = vmatprep.mubr.bf16.mxu0 0
  %599 = vmatmul.mubr.bf16.gmra.mxu0 %v197
  %v600 = vpop.f32.mrf.mxu0
  %v601 = vadd.f32 %v540, %v600
  %v602 = vpop.f32.mrf.mxu0
  %v603 = vpop.f32.mrf.mxu0
  %v604 = vadd.f32 %v540, %v603
  %v605 = vpop.f32.mrf.mxu0
  %606 = vdwg.mxu0
  %s607 = scalar_lea.vmem %s9, 32
  %v608 = vld [vmem:[%s607] sm:$0xf]
  %v609 = vld [vmem:[%s607 + $0x4] sm:$0xf]
  %v610 = vld [vmem:[%s607 + $0x8] sm:$0xf]
  %v611 = vld [vmem:[%s607 + $0xc] sm:$0xf]
  %v612 = vld [vmem:[%s607 + $0x10] sm:$0xf]
  %v613 = vld [vmem:[%s607 + $0x14] sm:$0xf]
  %v614 = vld [vmem:[%s607 + $0x18] sm:$0xf]
  %v615 = vld [vmem:[%s607 + $0x1c] sm:$0xf]
  %s616 = scalar_lea.vmem %s11, 1
  %v617 = vld [vmem:[%s616] sm:$0x1]
  %v619 = vlaneseq
  %v620 = vshrl.u32 %v619, 7
  %v621 = vsub.s32 0, %v620
  %v622 = vrot.slane %v617, %v621
  %v632 = vunpack.c.l.b16 %v608
  %v633 = vunpack.c.l.b16 %v609
  %v634 = vunpack.c.l.b16 %v610
  %v635 = vunpack.c.l.b16 %v611
  %v636 = vunpack.c.l.b16 %v612
  %v637 = vunpack.c.l.b16 %v613
  %v638 = vunpack.c.l.b16 %v614
  %v639 = vunpack.c.l.b16 %v615
  %v640 = vpack.c.b16 %v633, %v632
  %v641 = vpack.c.b16 %v635, %v634
  %v642 = vpack.c.b16 %v637, %v636
  %v643 = vpack.c.b16 %v639, %v638
  %648 = vmatprep.subr.bf16.mxu0 0
  %649 = vmatpush1.bf16.msra.mxu0 0
  %650 = vmatprep.subr.bf16.mxu0 0
  %651 = vmatpush1.bf16.msra.mxu0 0
  %652 = vmatprep.subr.bf16.mxu0 0
  %653 = vmatpush1.bf16.msra.mxu0 0
  %654 = vmatprep.subr.bf16.mxu0 0
  %655 = vmatpush1.bf16.msra.mxu0 0
  %656 = vmatprep.subr.bf16.mxu0 0
  %657 = vmatpush1.bf16.msra.mxu0 %v643
  %658 = vmatprep.subr.bf16.mxu0 0
  %659 = vmatpush1.bf16.msra.mxu0 %v642
  %660 = vmatprep.subr.bf16.mxu0 0
  %661 = vmatpush1.bf16.msra.mxu0 %v641
  %662 = vmatprep.subr.bf16.mxu0 0
  %663 = vmatpush1.bf16.msra.mxu0 %v640
  %664 = vmatprep.subr.bf16.mxu0 0
  %665 = vmatpush2.bf16.msra.mxu0 0
  %666 = vmatprep.subr.bf16.mxu0 0
  %667 = vmatpush2.bf16.msra.mxu0 0
  %668 = vmatprep.subr.bf16.mxu0 0
  %669 = vmatpush2.bf16.msra.mxu0 0
  %670 = vmatprep.subr.bf16.mxu0 0
  %671 = vmatpush2.bf16.msra.mxu0 0
  %672 = vmatprep.subr.bf16.mxu0 0
  %673 = vmatpush2.bf16.msra.mxu0 0
  %674 = vmatprep.subr.bf16.mxu0 0
  %675 = vmatpush2.bf16.msra.mxu0 0
  %676 = vmatprep.subr.bf16.mxu0 0
  %677 = vmatpush2.bf16.msra.mxu0 0
  %678 = vmatprep.subr.bf16.mxu0 0
  %679 = vmatpush2.bf16.msra.mxu0 0
  %680 = vmatprep.mubr.bf16.mxu0 0
  %681 = vmatmul.mubr.bf16.gmra.mxu0 %v197
  %v682 = vpop.f32.mrf.mxu0
  %v683 = vadd.f32 %v622, %v682
  %v684 = vpop.f32.mrf.mxu0
  %v685 = vpop.f32.mrf.mxu0
  %v686 = vadd.f32 %v622, %v685
  %v687 = vpop.f32.mrf.mxu0
  %688 = vdwg.mxu0
  %s689 = scalar_lea.vmem %s13, 32
  %v690 = vld [vmem:[%s689] sm:$0xf]
  %v691 = vld [vmem:[%s689 + $0x4] sm:$0xf]
  %v692 = vld [vmem:[%s689 + $0x8] sm:$0xf]
  %v693 = vld [vmem:[%s689 + $0xc] sm:$0xf]
  %v694 = vld [vmem:[%s689 + $0x10] sm:$0xf]
  %v695 = vld [vmem:[%s689 + $0x14] sm:$0xf]
  %v696 = vld [vmem:[%s689 + $0x18] sm:$0xf]
  %v697 = vld [vmem:[%s689 + $0x1c] sm:$0xf]
  %s698 = scalar_lea.vmem %s15, 1
  %v699 = vld [vmem:[%s698] sm:$0x1]
  %v701 = vlaneseq
  %v702 = vshrl.u32 %v701, 7
  %v703 = vsub.s32 0, %v702
  %v704 = vrot.slane %v699, %v703
  %v714 = vunpack.c.l.b16 %v690
  %v715 = vunpack.c.l.b16 %v691
  %v716 = vunpack.c.l.b16 %v692
  %v717 = vunpack.c.l.b16 %v693
  %v718 = vunpack.c.l.b16 %v694
  %v719 = vunpack.c.l.b16 %v695
  %v720 = vunpack.c.l.b16 %v696
  %v721 = vunpack.c.l.b16 %v697
  %v722 = vpack.c.b16 %v715, %v714
  %v723 = vpack.c.b16 %v717, %v716
  %v724 = vpack.c.b16 %v719, %v718
  %v725 = vpack.c.b16 %v721, %v720
  %730 = vmatprep.subr.bf16.mxu0 0
  %731 = vmatpush1.bf16.msra.mxu0 0
  %732 = vmatprep.subr.bf16.mxu0 0
  %733 = vmatpush1.bf16.msra.mxu0 0
  %734 = vmatprep.subr.bf16.mxu0 0
  %735 = vmatpush1.bf16.msra.mxu0 0
  %736 = vmatprep.subr.bf16.mxu0 0
  %737 = vmatpush1.bf16.msra.mxu0 0
  %738 = vmatprep.subr.bf16.mxu0 0
  %739 = vmatpush1.bf16.msra.mxu0 %v725
  %740 = vmatprep.subr.bf16.mxu0 0
  %741 = vmatpush1.bf16.msra.mxu0 %v724
  %742 = vmatprep.subr.bf16.mxu0 0
  %743 = vmatpush1.bf16.msra.mxu0 %v723
  %744 = vmatprep.subr.bf16.mxu0 0
  %745 = vmatpush1.bf16.msra.mxu0 %v722
  %746 = vmatprep.subr.bf16.mxu0 0
  %747 = vmatpush2.bf16.msra.mxu0 0
  %748 = vmatprep.subr.bf16.mxu0 0
  %749 = vmatpush2.bf16.msra.mxu0 0
  %750 = vmatprep.subr.bf16.mxu0 0
  %751 = vmatpush2.bf16.msra.mxu0 0
  %752 = vmatprep.subr.bf16.mxu0 0
  %753 = vmatpush2.bf16.msra.mxu0 0
  %754 = vmatprep.subr.bf16.mxu0 0
  %755 = vmatpush2.bf16.msra.mxu0 0
  %756 = vmatprep.subr.bf16.mxu0 0
  %757 = vmatpush2.bf16.msra.mxu0 0
  %758 = vmatprep.subr.bf16.mxu0 0
  %759 = vmatpush2.bf16.msra.mxu0 0
  %760 = vmatprep.subr.bf16.mxu0 0
  %761 = vmatpush2.bf16.msra.mxu0 0
  %762 = vmatprep.mubr.bf16.mxu0 0
  %763 = vmatmul.mubr.bf16.gmra.mxu0 %v197
  %v764 = vpop.f32.mrf.mxu0
  %v765 = vadd.f32 %v704, %v764
  %v766 = vpop.f32.mrf.mxu0
  %v767 = vpop.f32.mrf.mxu0
  %v768 = vadd.f32 %v704, %v767
  %v769 = vpop.f32.mrf.mxu0
  %770 = vdwg.mxu0
  %v771 = vpack.c.bf16 %v604, %v601
  %v772 = vpack.c.bf16 %v686, %v683
  %v774 = vsel %vm402, %v771, 0
  %v777 = vsel %vm402, %v772, 0
  %779 = vmatprep.subr.bf16.mxu0 0
  %780 = vmatpush1.bf16.xpose.msra.mxu0 0
  %781 = vmatprep.subr.bf16.mxu0 0
  %782 = vmatpush1.bf16.xpose.msra.mxu0 0
  %783 = vmatprep.subr.bf16.mxu0 0
  %784 = vmatpush1.bf16.xpose.msra.mxu0 0
  %785 = vmatprep.subr.bf16.mxu0 0
  %786 = vmatpush1.bf16.xpose.msra.mxu0 0
  %787 = vmatprep.subr.bf16.mxu0 0
  %788 = vmatpush1.bf16.xpose.msra.mxu0 0
  %789 = vmatprep.subr.bf16.mxu0 0
  %790 = vmatpush1.bf16.xpose.msra.mxu0 0
  %791 = vmatprep.subr.bf16.mxu0 0
  %792 = vmatpush1.bf16.xpose.msra.mxu0 0
  %793 = vmatprep.subr.bf16.mxu0 0
  %794 = vmatpush1.bf16.xpose.msra.mxu0 %v777
  %795 = vmatprep.subr.bf16.mxu0 0
  %796 = vmatpush2.bf16.xpose.msra.mxu0 0
  %797 = vmatprep.subr.bf16.mxu0 0
  %798 = vmatpush2.bf16.xpose.msra.mxu0 0
  %799 = vmatprep.subr.bf16.mxu0 0
  %800 = vmatpush2.bf16.xpose.msra.mxu0 0
  %801 = vmatprep.subr.bf16.mxu0 0
  %802 = vmatpush2.bf16.xpose.msra.mxu0 0
  %803 = vmatprep.subr.bf16.mxu0 0
  %804 = vmatpush2.bf16.xpose.msra.mxu0 0
  %805 = vmatprep.subr.bf16.mxu0 0
  %806 = vmatpush2.bf16.xpose.msra.mxu0 0
  %807 = vmatprep.subr.bf16.mxu0 0
  %808 = vmatpush2.bf16.xpose.msra.mxu0 0
  %809 = vmatprep.subr.bf16.mxu0 0
  %810 = vmatpush2.bf16.xpose.msra.mxu0 0
  %811 = vmatprep.mubr.bf16.mxu0 0
  %812 = vmatmul.mubr.bf16.gmra.mxu0 %v774
  %v813 = vpop.f32.mrf.mxu0
  %v814 = vadd.f32 0.0, %v813
  %v815 = vpop.f32.mrf.mxu0
  %v816 = vpop.f32.mrf.mxu0
  %v817 = vadd.f32 0.0, %v816
  %v818 = vpop.f32.mrf.mxu0
  %819 = vdwg.mxu0
  %v820 = vmul.f32 %v814, 0.25
  %v821 = vmul.f32 %v817, 0.25
  %v822 = vadd.f32 %v820, %v153
  %v823 = vadd.f32 %v821, %v154
  %v824 = vsel %vm402, %v822, -inf
  %825 = vmax.xlane.f32.xlu0 %v824
  %v826 = vpop.xlane.xlu0 %825
  %v827 = vsel %vm402, %v823, -inf
  %828 = vmax.xlane.f32.xlu0 %v827
  %v829 = vpop.xlane.xlu0 %828
  %v830 = vsub.f32 %v822, %v826
  %v831 = vsub.f32 %v823, %v829
  %v832 = vmul.f32 %v830, 1.442695
  %v833 = vpow.pop %v832
  %v834 = vmul.f32 %v831, 1.442695
  %v835 = vpow.pop %v834
  %v836 = vsel %vm402, %v833, 0.0
  %837 = vadd.xlane.f32.xlu0 %v836
  %v838 = vpop.xlane.xlu0 %837
  %v839 = vsel %vm402, %v835, 0.0
  %840 = vadd.xlane.f32.xlu0 %v839
  %v841 = vpop.xlane.xlu0 %840
  %v842 = vrcp.pop %v838
  %v843 = vrcp.pop %v841
  %v844 = vmul.f32 %v833, %v842
  %v845 = vmul.f32 %v835, %v843
  %v846 = vpack.c.bf16 %v845, %v844
  %v847 = vpack.c.bf16 %v768, %v765
  %v849 = vsel %vm402, %v846, 0
  %851 = vmatprep.subr.bf16.mxu0 0
  %852 = vmatpush1.bf16.msra.mxu0 0
  %853 = vmatprep.subr.bf16.mxu0 0
  %854 = vmatpush1.bf16.msra.mxu0 0
  %855 = vmatprep.subr.bf16.mxu0 0
  %856 = vmatpush1.bf16.msra.mxu0 0
  %857 = vmatprep.subr.bf16.mxu0 0
  %858 = vmatpush1.bf16.msra.mxu0 0
  %859 = vmatprep.subr.bf16.mxu0 0
  %860 = vmatpush1.bf16.msra.mxu0 0
  %861 = vmatprep.subr.bf16.mxu0 0
  %862 = vmatpush1.bf16.msra.mxu0 0
  %863 = vmatprep.subr.bf16.mxu0 0
  %864 = vmatpush1.bf16.msra.mxu0 0
  %865 = vmatprep.subr.bf16.mxu0 0
  %866 = vmatpush1.bf16.msra.mxu0 %v847
  %867 = vmatprep.subr.bf16.mxu0 0
  %868 = vmatpush2.bf16.msra.mxu0 0
  %869 = vmatprep.subr.bf16.mxu0 0
  %870 = vmatpush2.bf16.msra.mxu0 0
  %871 = vmatprep.subr.bf16.mxu0 0
  %872 = vmatpush2.bf16.msra.mxu0 0
  %873 = vmatprep.subr.bf16.mxu0 0
  %874 = vmatpush2.bf16.msra.mxu0 0
  %875 = vmatprep.subr.bf16.mxu0 0
  %876 = vmatpush2.bf16.msra.mxu0 0
  %877 = vmatprep.subr.bf16.mxu0 0
  %878 = vmatpush2.bf16.msra.mxu0 0
  %879 = vmatprep.subr.bf16.mxu0 0
  %880 = vmatpush2.bf16.msra.mxu0 0
  %881 = vmatprep.subr.bf16.mxu0 0
  %882 = vmatpush2.bf16.msra.mxu0 0
  %883 = vmatprep.mubr.bf16.mxu0 0
  %884 = vmatmul.mubr.bf16.gmra.mxu0 %v849
  %v885 = vpop.f32.mrf.mxu0
  %v886 = vadd.f32 0.0, %v885
  %v887 = vpop.f32.mrf.mxu0
  %v888 = vpop.f32.mrf.mxu0
  %v889 = vadd.f32 0.0, %v888
  %v890 = vpop.f32.mrf.mxu0
  %891 = vdwg.mxu0
  %v892 = vpack.c.bf16 %v889, %v886
  %s893 = scalar_lea.vmem %s17, 8
  %v894 = vld [vmem:[%s893] sm:$0xf]
  %v895 = vld [vmem:[%s893 + $0x4] sm:$0xf]
  %v898 = vunpack.c.l.b16 %v894
  %v899 = vunpack.c.l.b16 %v895
  %v900 = vpack.c.b16 %v899, %v898
  %v903 = vsel %vm402, %v892, 0
  %905 = vmatprep.subr.bf16.mxu0 0
  %906 = vmatpush1.bf16.msra.mxu0 0
  %907 = vmatprep.subr.bf16.mxu0 0
  %908 = vmatpush1.bf16.msra.mxu0 0
  %909 = vmatprep.subr.bf16.mxu0 0
  %910 = vmatpush1.bf16.msra.mxu0 0
  %911 = vmatprep.subr.bf16.mxu0 0
  %912 = vmatpush1.bf16.msra.mxu0 0
  %913 = vmatprep.subr.bf16.mxu0 0
  %914 = vmatpush1.bf16.msra.mxu0 0
  %915 = vmatprep.subr.bf16.mxu0 0
  %916 = vmatpush1.bf16.msra.mxu0 0
  %917 = vmatprep.subr.bf16.mxu0 0
  %918 = vmatpush1.bf16.msra.mxu0 0
  %919 = vmatprep.subr.bf16.mxu0 0
  %920 = vmatpush1.bf16.msra.mxu0 %v900
  %921 = vmatprep.subr.bf16.mxu0 0
  %922 = vmatpush2.bf16.msra.mxu0 0
  %923 = vmatprep.subr.bf16.mxu0 0
  %924 = vmatpush2.bf16.msra.mxu0 0
  %925 = vmatprep.subr.bf16.mxu0 0
  %926 = vmatpush2.bf16.msra.mxu0 0
  %927 = vmatprep.subr.bf16.mxu0 0
  %928 = vmatpush2.bf16.msra.mxu0 0
  %929 = vmatprep.subr.bf16.mxu0 0
  %930 = vmatpush2.bf16.msra.mxu0 0
  %931 = vmatprep.subr.bf16.mxu0 0
  %932 = vmatpush2.bf16.msra.mxu0 0
  %933 = vmatprep.subr.bf16.mxu0 0
  %934 = vmatpush2.bf16.msra.mxu0 0
  %935 = vmatprep.subr.bf16.mxu0 0
  %936 = vmatpush2.bf16.msra.mxu0 0
  %937 = vmatprep.mubr.bf16.mxu0 0
  %938 = vmatmul.mubr.bf16.gmra.mxu0 %v903
  %v939 = vpop.f32.mrf.mxu0
  %v940 = vadd.f32 0.0, %v939
  %v941 = vpop.f32.mrf.mxu0
  %v942 = vpop.f32.mrf.mxu0
  %v943 = vadd.f32 0.0, %v942
  %v944 = vpop.f32.mrf.mxu0
  %945 = vdwg.mxu0
  %v948 = vunpack.c.l.b16 %v523
  %v949 = vunpack.c.l.b16 %v524
  %v950 = vpack.c.b16 %v949, %v948
  %v953 = vsel %vm402, %v522, 0
  %955 = vmatprep.subr.bf16.mxu0 0
  %956 = vmatpush1.bf16.msra.mxu0 0
  %957 = vmatprep.subr.bf16.mxu0 0
  %958 = vmatpush1.bf16.msra.mxu0 0
  %959 = vmatprep.subr.bf16.mxu0 0
  %960 = vmatpush1.bf16.msra.mxu0 0
  %961 = vmatprep.subr.bf16.mxu0 0
  %962 = vmatpush1.bf16.msra.mxu0 0
  %963 = vmatprep.subr.bf16.mxu0 0
  %964 = vmatpush1.bf16.msra.mxu0 0
  %965 = vmatprep.subr.bf16.mxu0 0
  %966 = vmatpush1.bf16.msra.mxu0 0
  %967 = vmatprep.subr.bf16.mxu0 0
  %968 = vmatpush1.bf16.msra.mxu0 0
  %969 = vmatprep.subr.bf16.mxu0 0
  %970 = vmatpush1.bf16.msra.mxu0 %v950
  %971 = vmatprep.subr.bf16.mxu0 0
  %972 = vmatpush2.bf16.msra.mxu0 0
  %973 = vmatprep.subr.bf16.mxu0 0
  %974 = vmatpush2.bf16.msra.mxu0 0
  %975 = vmatprep.subr.bf16.mxu0 0
  %976 = vmatpush2.bf16.msra.mxu0 0
  %977 = vmatprep.subr.bf16.mxu0 0
  %978 = vmatpush2.bf16.msra.mxu0 0
  %979 = vmatprep.subr.bf16.mxu0 0
  %980 = vmatpush2.bf16.msra.mxu0 0
  %981 = vmatprep.subr.bf16.mxu0 0
  %982 = vmatpush2.bf16.msra.mxu0 0
  %983 = vmatprep.subr.bf16.mxu0 0
  %984 = vmatpush2.bf16.msra.mxu0 0
  %985 = vmatprep.subr.bf16.mxu0 0
  %986 = vmatpush2.bf16.msra.mxu0 0
  %987 = vmatprep.mubr.bf16.mxu0 0
  %988 = vmatmul.mubr.bf16.gmra.mxu0 %v953
  %v989 = vpop.f32.mrf.mxu0
  %v990 = vadd.f32 %v940, %v989
  %v991 = vpop.f32.mrf.mxu0
  %v992 = vpop.f32.mrf.mxu0
  %v993 = vadd.f32 %v943, %v992
  %v994 = vpop.f32.mrf.mxu0
  %995 = vdwg.mxu0
  %s996 = scalar_lea.vmem %s5, 64
  %v997 = vld [vmem:[%s996] sm:$0xf]
  %v998 = vld [vmem:[%s996 + $0x4] sm:$0xf]
  %v999 = vld [vmem:[%s996 + $0x8] sm:$0xf]
  %v1000 = vld [vmem:[%s996 + $0xc] sm:$0xf]
  %v1001 = vld [vmem:[%s996 + $0x10] sm:$0xf]
  %v1002 = vld [vmem:[%s996 + $0x14] sm:$0xf]
  %v1003 = vld [vmem:[%s996 + $0x18] sm:$0xf]
  %v1004 = vld [vmem:[%s996 + $0x1c] sm:$0xf]
  %s1005 = scalar_lea.vmem %s7, 2
  %v1006 = vld [vmem:[%s1005] sm:$0x1]
  %v1008 = vlaneseq
  %v1009 = vshrl.u32 %v1008, 7
  %v1010 = vsub.s32 0, %v1009
  %v1011 = vrot.slane %v1006, %v1010
  %v1021 = vunpack.c.l.b16 %v997
  %v1022 = vunpack.c.l.b16 %v998
  %v1023 = vunpack.c.l.b16 %v999
  %v1024 = vunpack.c.l.b16 %v1000
  %v1025 = vunpack.c.l.b16 %v1001
  %v1026 = vunpack.c.l.b16 %v1002
  %v1027 = vunpack.c.l.b16 %v1003
  %v1028 = vunpack.c.l.b16 %v1004
  %v1029 = vpack.c.b16 %v1022, %v1021
  %v1030 = vpack.c.b16 %v1024, %v1023
  %v1031 = vpack.c.b16 %v1026, %v1025
  %v1032 = vpack.c.b16 %v1028, %v1027
  %1037 = vmatprep.subr.bf16.mxu0 0
  %1038 = vmatpush1.bf16.msra.mxu0 0
  %1039 = vmatprep.subr.bf16.mxu0 0
  %1040 = vmatpush1.bf16.msra.mxu0 0
  %1041 = vmatprep.subr.bf16.mxu0 0
  %1042 = vmatpush1.bf16.msra.mxu0 0
  %1043 = vmatprep.subr.bf16.mxu0 0
  %1044 = vmatpush1.bf16.msra.mxu0 0
  %1045 = vmatprep.subr.bf16.mxu0 0
  %1046 = vmatpush1.bf16.msra.mxu0 %v1032
  %1047 = vmatprep.subr.bf16.mxu0 0
  %1048 = vmatpush1.bf16.msra.mxu0 %v1031
  %1049 = vmatprep.subr.bf16.mxu0 0
  %1050 = vmatpush1.bf16.msra.mxu0 %v1030
  %1051 = vmatprep.subr.bf16.mxu0 0
  %1052 = vmatpush1.bf16.msra.mxu0 %v1029
  %1053 = vmatprep.subr.bf16.mxu0 0
  %1054 = vmatpush2.bf16.msra.mxu0 0
  %1055 = vmatprep.subr.bf16.mxu0 0
  %1056 = vmatpush2.bf16.msra.mxu0 0
  %1057 = vmatprep.subr.bf16.mxu0 0
  %1058 = vmatpush2.bf16.msra.mxu0 0
  %1059 = vmatprep.subr.bf16.mxu0 0
  %1060 = vmatpush2.bf16.msra.mxu0 0
  %1061 = vmatprep.subr.bf16.mxu0 0
  %1062 = vmatpush2.bf16.msra.mxu0 0
  %1063 = vmatprep.subr.bf16.mxu0 0
  %1064 = vmatpush2.bf16.msra.mxu0 0
  %1065 = vmatprep.subr.bf16.mxu0 0
  %1066 = vmatpush2.bf16.msra.mxu0 0
  %1067 = vmatprep.subr.bf16.mxu0 0
  %1068 = vmatpush2.bf16.msra.mxu0 0
  %1069 = vmatprep.mubr.bf16.mxu0 0
  %1070 = vmatmul.mubr.bf16.gmra.mxu0 %v197
  %v1071 = vpop.f32.mrf.mxu0
  %v1072 = vadd.f32 %v1011, %v1071
  %v1073 = vpop.f32.mrf.mxu0
  %v1074 = vpop.f32.mrf.mxu0
  %v1075 = vadd.f32 %v1011, %v1074
  %v1076 = vpop.f32.mrf.mxu0
  %1077 = vdwg.mxu0
  %s1078 = scalar_lea.vmem %s9, 64
  %v1079 = vld [vmem:[%s1078] sm:$0xf]
  %v1080 = vld [vmem:[%s1078 + $0x4] sm:$0xf]
  %v1081 = vld [vmem:[%s1078 + $0x8] sm:$0xf]
  %v1082 = vld [vmem:[%s1078 + $0xc] sm:$0xf]
  %v1083 = vld [vmem:[%s1078 + $0x10] sm:$0xf]
  %v1084 = vld [vmem:[%s1078 + $0x14] sm:$0xf]
  %v1085 = vld [vmem:[%s1078 + $0x18] sm:$0xf]
  %v1086 = vld [vmem:[%s1078 + $0x1c] sm:$0xf]
  %s1087 = scalar_lea.vmem %s11, 2
  %v1088 = vld [vmem:[%s1087] sm:$0x1]
  %v1090 = vlaneseq
  %v1091 = vshrl.u32 %v1090, 7
  %v1092 = vsub.s32 0, %v1091
  %v1093 = vrot.slane %v1088, %v1092
  %v1103 = vunpack.c.l.b16 %v1079
  %v1104 = vunpack.c.l.b16 %v1080
  %v1105 = vunpack.c.l.b16 %v1081
  %v1106 = vunpack.c.l.b16 %v1082
  %v1107 = vunpack.c.l.b16 %v1083
  %v1108 = vunpack.c.l.b16 %v1084
  %v1109 = vunpack.c.l.b16 %v1085
  %v1110 = vunpack.c.l.b16 %v1086
  %v1111 = vpack.c.b16 %v1104, %v1103
  %v1112 = vpack.c.b16 %v1106, %v1105
  %v1113 = vpack.c.b16 %v1108, %v1107
  %v1114 = vpack.c.b16 %v1110, %v1109
  %1119 = vmatprep.subr.bf16.mxu0 0
  %1120 = vmatpush1.bf16.msra.mxu0 0
  %1121 = vmatprep.subr.bf16.mxu0 0
  %1122 = vmatpush1.bf16.msra.mxu0 0
  %1123 = vmatprep.subr.bf16.mxu0 0
  %1124 = vmatpush1.bf16.msra.mxu0 0
  %1125 = vmatprep.subr.bf16.mxu0 0
  %1126 = vmatpush1.bf16.msra.mxu0 0
  %1127 = vmatprep.subr.bf16.mxu0 0
  %1128 = vmatpush1.bf16.msra.mxu0 %v1114
  %1129 = vmatprep.subr.bf16.mxu0 0
  %1130 = vmatpush1.bf16.msra.mxu0 %v1113
  %1131 = vmatprep.subr.bf16.mxu0 0
  %1132 = vmatpush1.bf16.msra.mxu0 %v1112
  %1133 = vmatprep.subr.bf16.mxu0 0
  %1134 = vmatpush1.bf16.msra.mxu0 %v1111
  %1135 = vmatprep.subr.bf16.mxu0 0
  %1136 = vmatpush2.bf16.msra.mxu0 0
  %1137 = vmatprep.subr.bf16.mxu0 0
  %1138 = vmatpush2.bf16.msra.mxu0 0
  %1139 = vmatprep.subr.bf16.mxu0 0
  %1140 = vmatpush2.bf16.msra.mxu0 0
  %1141 = vmatprep.subr.bf16.mxu0 0
  %1142 = vmatpush2.bf16.msra.mxu0 0
  %1143 = vmatprep.subr.bf16.mxu0 0
  %1144 = vmatpush2.bf16.msra.mxu0 0
  %1145 = vmatprep.subr.bf16.mxu0 0
  %1146 = vmatpush2.bf16.msra.mxu0 0
  %1147 = vmatprep.subr.bf16.mxu0 0
  %1148 = vmatpush2.bf16.msra.mxu0 0
  %1149 = vmatprep.subr.bf16.mxu0 0
  %1150 = vmatpush2.bf16.msra.mxu0 0
  %1151 = vmatprep.mubr.bf16.mxu0 0
  %1152 = vmatmul.mubr.bf16.gmra.mxu0 %v197
  %v1153 = vpop.f32.mrf.mxu0
  %v1154 = vadd.f32 %v1093, %v1153
  %v1155 = vpop.f32.mrf.mxu0
  %v1156 = vpop.f32.mrf.mxu0
  %v1157 = vadd.f32 %v1093, %v1156
  %v1158 = vpop.f32.mrf.mxu0
  %1159 = vdwg.mxu0
  %s1160 = scalar_lea.vmem %s13, 64
  %v1161 = vld [vmem:[%s1160] sm:$0xf]
  %v1162 = vld [vmem:[%s1160 + $0x4] sm:$0xf]
  %v1163 = vld [vmem:[%s1160 + $0x8] sm:$0xf]
  %v1164 = vld [vmem:[%s1160 + $0xc] sm:$0xf]
  %v1165 = vld [vmem:[%s1160 + $0x10] sm:$0xf]
  %v1166 = vld [vmem:[%s1160 + $0x14] sm:$0xf]
  %v1167 = vld [vmem:[%s1160 + $0x18] sm:$0xf]
  %v1168 = vld [vmem:[%s1160 + $0x1c] sm:$0xf]
  %s1169 = scalar_lea.vmem %s15, 2
  %v1170 = vld [vmem:[%s1169] sm:$0x1]
  %v1172 = vlaneseq
  %v1173 = vshrl.u32 %v1172, 7
  %v1174 = vsub.s32 0, %v1173
  %v1175 = vrot.slane %v1170, %v1174
  %v1185 = vunpack.c.l.b16 %v1161
  %v1186 = vunpack.c.l.b16 %v1162
  %v1187 = vunpack.c.l.b16 %v1163
  %v1188 = vunpack.c.l.b16 %v1164
  %v1189 = vunpack.c.l.b16 %v1165
  %v1190 = vunpack.c.l.b16 %v1166
  %v1191 = vunpack.c.l.b16 %v1167
  %v1192 = vunpack.c.l.b16 %v1168
  %v1193 = vpack.c.b16 %v1186, %v1185
  %v1194 = vpack.c.b16 %v1188, %v1187
  %v1195 = vpack.c.b16 %v1190, %v1189
  %v1196 = vpack.c.b16 %v1192, %v1191
  %1201 = vmatprep.subr.bf16.mxu0 0
  %1202 = vmatpush1.bf16.msra.mxu0 0
  %1203 = vmatprep.subr.bf16.mxu0 0
  %1204 = vmatpush1.bf16.msra.mxu0 0
  %1205 = vmatprep.subr.bf16.mxu0 0
  %1206 = vmatpush1.bf16.msra.mxu0 0
  %1207 = vmatprep.subr.bf16.mxu0 0
  %1208 = vmatpush1.bf16.msra.mxu0 0
  %1209 = vmatprep.subr.bf16.mxu0 0
  %1210 = vmatpush1.bf16.msra.mxu0 %v1196
  %1211 = vmatprep.subr.bf16.mxu0 0
  %1212 = vmatpush1.bf16.msra.mxu0 %v1195
  %1213 = vmatprep.subr.bf16.mxu0 0
  %1214 = vmatpush1.bf16.msra.mxu0 %v1194
  %1215 = vmatprep.subr.bf16.mxu0 0
  %1216 = vmatpush1.bf16.msra.mxu0 %v1193
  %1217 = vmatprep.subr.bf16.mxu0 0
  %1218 = vmatpush2.bf16.msra.mxu0 0
  %1219 = vmatprep.subr.bf16.mxu0 0
  %1220 = vmatpush2.bf16.msra.mxu0 0
  %1221 = vmatprep.subr.bf16.mxu0 0
  %1222 = vmatpush2.bf16.msra.mxu0 0
  %1223 = vmatprep.subr.bf16.mxu0 0
  %1224 = vmatpush2.bf16.msra.mxu0 0
  %1225 = vmatprep.subr.bf16.mxu0 0
  %1226 = vmatpush2.bf16.msra.mxu0 0
  %1227 = vmatprep.subr.bf16.mxu0 0
  %1228 = vmatpush2.bf16.msra.mxu0 0
  %1229 = vmatprep.subr.bf16.mxu0 0
  %1230 = vmatpush2.bf16.msra.mxu0 0
  %1231 = vmatprep.subr.bf16.mxu0 0
  %1232 = vmatpush2.bf16.msra.mxu0 0
  %1233 = vmatprep.mubr.bf16.mxu0 0
  %1234 = vmatmul.mubr.bf16.gmra.mxu0 %v197
  %v1235 = vpop.f32.mrf.mxu0
  %v1236 = vadd.f32 %v1175, %v1235
  %v1237 = vpop.f32.mrf.mxu0
  %v1238 = vpop.f32.mrf.mxu0
  %v1239 = vadd.f32 %v1175, %v1238
  %v1240 = vpop.f32.mrf.mxu0
  %1241 = vdwg.mxu0
  %v1242 = vpack.c.bf16 %v1075, %v1072
  %v1243 = vpack.c.bf16 %v1157, %v1154
  %v1245 = vsel %vm402, %v1242, 0
  %v1248 = vsel %vm402, %v1243, 0
  %1250 = vmatprep.subr.bf16.mxu0 0
  %1251 = vmatpush1.bf16.xpose.msra.mxu0 0
  %1252 = vmatprep.subr.bf16.mxu0 0
  %1253 = vmatpush1.bf16.xpose.msra.mxu0 0
  %1254 = vmatprep.subr.bf16.mxu0 0
  %1255 = vmatpush1.bf16.xpose.msra.mxu0 0
  %1256 = vmatprep.subr.bf16.mxu0 0
  %1257 = vmatpush1.bf16.xpose.msra.mxu0 0
  %1258 = vmatprep.subr.bf16.mxu0 0
  %1259 = vmatpush1.bf16.xpose.msra.mxu0 0
  %1260 = vmatprep.subr.bf16.mxu0 0
  %1261 = vmatpush1.bf16.xpose.msra.mxu0 0
  %1262 = vmatprep.subr.bf16.mxu0 0
  %1263 = vmatpush1.bf16.xpose.msra.mxu0 0
  %1264 = vmatprep.subr.bf16.mxu0 0
  %1265 = vmatpush1.bf16.xpose.msra.mxu0 %v1248
  %1266 = vmatprep.subr.bf16.mxu0 0
  %1267 = vmatpush2.bf16.xpose.msra.mxu0 0
  %1268 = vmatprep.subr.bf16.mxu0 0
  %1269 = vmatpush2.bf16.xpose.msra.mxu0 0
  %1270 = vmatprep.subr.bf16.mxu0 0
  %1271 = vmatpush2.bf16.xpose.msra.mxu0 0
  %1272 = vmatprep.subr.bf16.mxu0 0
  %1273 = vmatpush2.bf16.xpose.msra.mxu0 0
  %1274 = vmatprep.subr.bf16.mxu0 0
  %1275 = vmatpush2.bf16.xpose.msra.mxu0 0
  %1276 = vmatprep.subr.bf16.mxu0 0
  %1277 = vmatpush2.bf16.xpose.msra.mxu0 0
  %1278 = vmatprep.subr.bf16.mxu0 0
  %1279 = vmatpush2.bf16.xpose.msra.mxu0 0
  %1280 = vmatprep.subr.bf16.mxu0 0
  %1281 = vmatpush2.bf16.xpose.msra.mxu0 0
  %1282 = vmatprep.mubr.bf16.mxu0 0
  %1283 = vmatmul.mubr.bf16.gmra.mxu0 %v1245
  %v1284 = vpop.f32.mrf.mxu0
  %v1285 = vadd.f32 0.0, %v1284
  %v1286 = vpop.f32.mrf.mxu0
  %v1287 = vpop.f32.mrf.mxu0
  %v1288 = vadd.f32 0.0, %v1287
  %v1289 = vpop.f32.mrf.mxu0
  %1290 = vdwg.mxu0
  %v1291 = vmul.f32 %v1285, 0.25
  %v1292 = vmul.f32 %v1288, 0.25
  %v1293 = vadd.f32 %v1291, %v153
  %v1294 = vadd.f32 %v1292, %v154
  %v1295 = vsel %vm402, %v1293, -inf
  %1296 = vmax.xlane.f32.xlu0 %v1295
  %v1297 = vpop.xlane.xlu0 %1296
  %v1298 = vsel %vm402, %v1294, -inf
  %1299 = vmax.xlane.f32.xlu0 %v1298
  %v1300 = vpop.xlane.xlu0 %1299
  %v1301 = vsub.f32 %v1293, %v1297
  %v1302 = vsub.f32 %v1294, %v1300
  %v1303 = vmul.f32 %v1301, 1.442695
  %v1304 = vpow.pop %v1303
  %v1305 = vmul.f32 %v1302, 1.442695
  %v1306 = vpow.pop %v1305
  %v1307 = vsel %vm402, %v1304, 0.0
  %1308 = vadd.xlane.f32.xlu0 %v1307
  %v1309 = vpop.xlane.xlu0 %1308
  %v1310 = vsel %vm402, %v1306, 0.0
  %1311 = vadd.xlane.f32.xlu0 %v1310
  %v1312 = vpop.xlane.xlu0 %1311
  %v1313 = vrcp.pop %v1309
  %v1314 = vrcp.pop %v1312
  %v1315 = vmul.f32 %v1304, %v1313
  %v1316 = vmul.f32 %v1306, %v1314
  %v1317 = vpack.c.bf16 %v1316, %v1315
  %v1318 = vpack.c.bf16 %v1239, %v1236
  %v1320 = vsel %vm402, %v1317, 0
  %1322 = vmatprep.subr.bf16.mxu0 0
  %1323 = vmatpush1.bf16.msra.mxu0 0
  %1324 = vmatprep.subr.bf16.mxu0 0
  %1325 = vmatpush1.bf16.msra.mxu0 0
  %1326 = vmatprep.subr.bf16.mxu0 0
  %1327 = vmatpush1.bf16.msra.mxu0 0
  %1328 = vmatprep.subr.bf16.mxu0 0
  %1329 = vmatpush1.bf16.msra.mxu0 0
  %1330 = vmatprep.subr.bf16.mxu0 0
  %1331 = vmatpush1.bf16.msra.mxu0 0
  %1332 = vmatprep.subr.bf16.mxu0 0
  %1333 = vmatpush1.bf16.msra.mxu0 0
  %1334 = vmatprep.subr.bf16.mxu0 0
  %1335 = vmatpush1.bf16.msra.mxu0 0
  %1336 = vmatprep.subr.bf16.mxu0 0
  %1337 = vmatpush1.bf16.msra.mxu0 %v1318
  %1338 = vmatprep.subr.bf16.mxu0 0
  %1339 = vmatpush2.bf16.msra.mxu0 0
  %1340 = vmatprep.subr.bf16.mxu0 0
  %1341 = vmatpush2.bf16.msra.mxu0 0
  %1342 = vmatprep.subr.bf16.mxu0 0
  %1343 = vmatpush2.bf16.msra.mxu0 0
  %1344 = vmatprep.subr.bf16.mxu0 0
  %1345 = vmatpush2.bf16.msra.mxu0 0
  %1346 = vmatprep.subr.bf16.mxu0 0
  %1347 = vmatpush2.bf16.msra.mxu0 0
  %1348 = vmatprep.subr.bf16.mxu0 0
  %1349 = vmatpush2.bf16.msra.mxu0 0
  %1350 = vmatprep.subr.bf16.mxu0 0
  %1351 = vmatpush2.bf16.msra.mxu0 0
  %1352 = vmatprep.subr.bf16.mxu0 0
  %1353 = vmatpush2.bf16.msra.mxu0 0
  %1354 = vmatprep.mubr.bf16.mxu0 0
  %1355 = vmatmul.mubr.bf16.gmra.mxu0 %v1320
  %v1356 = vpop.f32.mrf.mxu0
  %v1357 = vadd.f32 0.0, %v1356
  %v1358 = vpop.f32.mrf.mxu0
  %v1359 = vpop.f32.mrf.mxu0
  %v1360 = vadd.f32 0.0, %v1359
  %v1361 = vpop.f32.mrf.mxu0
  %1362 = vdwg.mxu0
  %v1363 = vpack.c.bf16 %v1360, %v1357
  %s1364 = scalar_lea.vmem %s17, 16
  %v1365 = vld [vmem:[%s1364] sm:$0xf]
  %v1366 = vld [vmem:[%s1364 + $0x4] sm:$0xf]
  %v1369 = vunpack.c.l.b16 %v1365
  %v1370 = vunpack.c.l.b16 %v1366
  %v1371 = vpack.c.b16 %v1370, %v1369
  %v1374 = vsel %vm402, %v1363, 0
  %1376 = vmatprep.subr.bf16.mxu0 0
  %1377 = vmatpush1.bf16.msra.mxu0 0
  %1378 = vmatprep.subr.bf16.mxu0 0
  %1379 = vmatpush1.bf16.msra.mxu0 0
  %1380 = vmatprep.subr.bf16.mxu0 0
  %1381 = vmatpush1.bf16.msra.mxu0 0
  %1382 = vmatprep.subr.bf16.mxu0 0
  %1383 = vmatpush1.bf16.msra.mxu0 0
  %1384 = vmatprep.subr.bf16.mxu0 0
  %1385 = vmatpush1.bf16.msra.mxu0 0
  %1386 = vmatprep.subr.bf16.mxu0 0
  %1387 = vmatpush1.bf16.msra.mxu0 0
  %1388 = vmatprep.subr.bf16.mxu0 0
  %1389 = vmatpush1.bf16.msra.mxu0 0
  %1390 = vmatprep.subr.bf16.mxu0 0
  %1391 = vmatpush1.bf16.msra.mxu0 %v1371
  %1392 = vmatprep.subr.bf16.mxu0 0
  %1393 = vmatpush2.bf16.msra.mxu0 0
  %1394 = vmatprep.subr.bf16.mxu0 0
  %1395 = vmatpush2.bf16.msra.mxu0 0
  %1396 = vmatprep.subr.bf16.mxu0 0
  %1397 = vmatpush2.bf16.msra.mxu0 0
  %1398 = vmatprep.subr.bf16.mxu0 0
  %1399 = vmatpush2.bf16.msra.mxu0 0
  %1400 = vmatprep.subr.bf16.mxu0 0
  %1401 = vmatpush2.bf16.msra.mxu0 0
  %1402 = vmatprep.subr.bf16.mxu0 0
  %1403 = vmatpush2.bf16.msra.mxu0 0
  %1404 = vmatprep.subr.bf16.mxu0 0
  %1405 = vmatpush2.bf16.msra.mxu0 0
  %1406 = vmatprep.subr.bf16.mxu0 0
  %1407 = vmatpush2.bf16.msra.mxu0 0
  %1408 = vmatprep.mubr.bf16.mxu0 0
  %1409 = vmatmul.mubr.bf16.gmra.mxu0 %v1374
  %v1410 = vpop.f32.mrf.mxu0
  %v1411 = vadd.f32 0.0, %v1410
  %v1412 = vpop.f32.mrf.mxu0
  %v1413 = vpop.f32.mrf.mxu0
  %v1414 = vadd.f32 0.0, %v1413
  %v1415 = vpop.f32.mrf.mxu0
  %1416 = vdwg.mxu0
  %v1417 = vadd.f32 %v990, %v1411
  %v1418 = vadd.f32 %v993, %v1414
  %s1419 = scalar_lea.vmem %s5, 96
  %v1420 = vld [vmem:[%s1419] sm:$0xf]
  %v1421 = vld [vmem:[%s1419 + $0x4] sm:$0xf]
  %v1422 = vld [vmem:[%s1419 + $0x8] sm:$0xf]
  %v1423 = vld [vmem:[%s1419 + $0xc] sm:$0xf]
  %v1424 = vld [vmem:[%s1419 + $0x10] sm:$0xf]
  %v1425 = vld [vmem:[%s1419 + $0x14] sm:$0xf]
  %v1426 = vld [vmem:[%s1419 + $0x18] sm:$0xf]
  %v1427 = vld [vmem:[%s1419 + $0x1c] sm:$0xf]
  %s1428 = scalar_lea.vmem %s7, 3
  %v1429 = vld [vmem:[%s1428] sm:$0x1]
  %v1431 = vlaneseq
  %v1432 = vshrl.u32 %v1431, 7
  %v1433 = vsub.s32 0, %v1432
  %v1434 = vrot.slane %v1429, %v1433
  %v1444 = vunpack.c.l.b16 %v1420
  %v1445 = vunpack.c.l.b16 %v1421
  %v1446 = vunpack.c.l.b16 %v1422
  %v1447 = vunpack.c.l.b16 %v1423
  %v1448 = vunpack.c.l.b16 %v1424
  %v1449 = vunpack.c.l.b16 %v1425
  %v1450 = vunpack.c.l.b16 %v1426
  %v1451 = vunpack.c.l.b16 %v1427
  %v1452 = vpack.c.b16 %v1445, %v1444
  %v1453 = vpack.c.b16 %v1447, %v1446
  %v1454 = vpack.c.b16 %v1449, %v1448
  %v1455 = vpack.c.b16 %v1451, %v1450
  %1460 = vmatprep.subr.bf16.mxu0 0
  %1461 = vmatpush1.bf16.msra.mxu0 0
  %1462 = vmatprep.subr.bf16.mxu0 0
  %1463 = vmatpush1.bf16.msra.mxu0 0
  %1464 = vmatprep.subr.bf16.mxu0 0
  %1465 = vmatpush1.bf16.msra.mxu0 0
  %1466 = vmatprep.subr.bf16.mxu0 0
  %1467 = vmatpush1.bf16.msra.mxu0 0
  %1468 = vmatprep.subr.bf16.mxu0 0
  %1469 = vmatpush1.bf16.msra.mxu0 %v1455
  %1470 = vmatprep.subr.bf16.mxu0 0
  %1471 = vmatpush1.bf16.msra.mxu0 %v1454
  %1472 = vmatprep.subr.bf16.mxu0 0
  %1473 = vmatpush1.bf16.msra.mxu0 %v1453
  %1474 = vmatprep.subr.bf16.mxu0 0
  %1475 = vmatpush1.bf16.msra.mxu0 %v1452
  %1476 = vmatprep.subr.bf16.mxu0 0
  %1477 = vmatpush2.bf16.msra.mxu0 0
  %1478 = vmatprep.subr.bf16.mxu0 0
  %1479 = vmatpush2.bf16.msra.mxu0 0
  %1480 = vmatprep.subr.bf16.mxu0 0
  %1481 = vmatpush2.bf16.msra.mxu0 0
  %1482 = vmatprep.subr.bf16.mxu0 0
  %1483 = vmatpush2.bf16.msra.mxu0 0
  %1484 = vmatprep.subr.bf16.mxu0 0
  %1485 = vmatpush2.bf16.msra.mxu0 0
  %1486 = vmatprep.subr.bf16.mxu0 0
  %1487 = vmatpush2.bf16.msra.mxu0 0
  %1488 = vmatprep.subr.bf16.mxu0 0
  %1489 = vmatpush2.bf16.msra.mxu0 0
  %1490 = vmatprep.subr.bf16.mxu0 0
  %1491 = vmatpush2.bf16.msra.mxu0 0
  %1492 = vmatprep.mubr.bf16.mxu0 0
  %1493 = vmatmul.mubr.bf16.gmra.mxu0 %v197
  %v1494 = vpop.f32.mrf.mxu0
  %v1495 = vadd.f32 %v1434, %v1494
  %v1496 = vpop.f32.mrf.mxu0
  %v1497 = vpop.f32.mrf.mxu0
  %v1498 = vadd.f32 %v1434, %v1497
  %v1499 = vpop.f32.mrf.mxu0
  %1500 = vdwg.mxu0
  %s1501 = scalar_lea.vmem %s9, 96
  %v1502 = vld [vmem:[%s1501] sm:$0xf]
  %v1503 = vld [vmem:[%s1501 + $0x4] sm:$0xf]
  %v1504 = vld [vmem:[%s1501 + $0x8] sm:$0xf]
  %v1505 = vld [vmem:[%s1501 + $0xc] sm:$0xf]
  %v1506 = vld [vmem:[%s1501 + $0x10] sm:$0xf]
  %v1507 = vld [vmem:[%s1501 + $0x14] sm:$0xf]
  %v1508 = vld [vmem:[%s1501 + $0x18] sm:$0xf]
  %v1509 = vld [vmem:[%s1501 + $0x1c] sm:$0xf]
  %s1510 = scalar_lea.vmem %s11, 3
  %v1511 = vld [vmem:[%s1510] sm:$0x1]
  %v1513 = vlaneseq
  %v1514 = vshrl.u32 %v1513, 7
  %v1515 = vsub.s32 0, %v1514
  %v1516 = vrot.slane %v1511, %v1515
  %v1526 = vunpack.c.l.b16 %v1502
  %v1527 = vunpack.c.l.b16 %v1503
  %v1528 = vunpack.c.l.b16 %v1504
  %v1529 = vunpack.c.l.b16 %v1505
  %v1530 = vunpack.c.l.b16 %v1506
  %v1531 = vunpack.c.l.b16 %v1507
  %v1532 = vunpack.c.l.b16 %v1508
  %v1533 = vunpack.c.l.b16 %v1509
  %v1534 = vpack.c.b16 %v1527, %v1526
  %v1535 = vpack.c.b16 %v1529, %v1528
  %v1536 = vpack.c.b16 %v1531, %v1530
  %v1537 = vpack.c.b16 %v1533, %v1532
  %1542 = vmatprep.subr.bf16.mxu0 0
  %1543 = vmatpush1.bf16.msra.mxu0 0
  %1544 = vmatprep.subr.bf16.mxu0 0
  %1545 = vmatpush1.bf16.msra.mxu0 0
  %1546 = vmatprep.subr.bf16.mxu0 0
  %1547 = vmatpush1.bf16.msra.mxu0 0
  %1548 = vmatprep.subr.bf16.mxu0 0
  %1549 = vmatpush1.bf16.msra.mxu0 0
  %1550 = vmatprep.subr.bf16.mxu0 0
  %1551 = vmatpush1.bf16.msra.mxu0 %v1537
  %1552 = vmatprep.subr.bf16.mxu0 0
  %1553 = vmatpush1.bf16.msra.mxu0 %v1536
  %1554 = vmatprep.subr.bf16.mxu0 0
  %1555 = vmatpush1.bf16.msra.mxu0 %v1535
  %1556 = vmatprep.subr.bf16.mxu0 0
  %1557 = vmatpush1.bf16.msra.mxu0 %v1534
  %1558 = vmatprep.subr.bf16.mxu0 0
  %1559 = vmatpush2.bf16.msra.mxu0 0
  %1560 = vmatprep.subr.bf16.mxu0 0
  %1561 = vmatpush2.bf16.msra.mxu0 0
  %1562 = vmatprep.subr.bf16.mxu0 0
  %1563 = vmatpush2.bf16.msra.mxu0 0
  %1564 = vmatprep.subr.bf16.mxu0 0
  %1565 = vmatpush2.bf16.msra.mxu0 0
  %1566 = vmatprep.subr.bf16.mxu0 0
  %1567 = vmatpush2.bf16.msra.mxu0 0
  %1568 = vmatprep.subr.bf16.mxu0 0
  %1569 = vmatpush2.bf16.msra.mxu0 0
  %1570 = vmatprep.subr.bf16.mxu0 0
  %1571 = vmatpush2.bf16.msra.mxu0 0
  %1572 = vmatprep.subr.bf16.mxu0 0
  %1573 = vmatpush2.bf16.msra.mxu0 0
  %1574 = vmatprep.mubr.bf16.mxu0 0
  %1575 = vmatmul.mubr.bf16.gmra.mxu0 %v197
  %v1576 = vpop.f32.mrf.mxu0
  %v1577 = vadd.f32 %v1516, %v1576
  %v1578 = vpop.f32.mrf.mxu0
  %v1579 = vpop.f32.mrf.mxu0
  %v1580 = vadd.f32 %v1516, %v1579
  %v1581 = vpop.f32.mrf.mxu0
  %1582 = vdwg.mxu0
  %s1583 = scalar_lea.vmem %s13, 96
  %v1584 = vld [vmem:[%s1583] sm:$0xf]
  %v1585 = vld [vmem:[%s1583 + $0x4] sm:$0xf]
  %v1586 = vld [vmem:[%s1583 + $0x8] sm:$0xf]
  %v1587 = vld [vmem:[%s1583 + $0xc] sm:$0xf]
  %v1588 = vld [vmem:[%s1583 + $0x10] sm:$0xf]
  %v1589 = vld [vmem:[%s1583 + $0x14] sm:$0xf]
  %v1590 = vld [vmem:[%s1583 + $0x18] sm:$0xf]
  %v1591 = vld [vmem:[%s1583 + $0x1c] sm:$0xf]
  %s1592 = scalar_lea.vmem %s15, 3
  %v1593 = vld [vmem:[%s1592] sm:$0x1]
  %v1595 = vlaneseq
  %v1596 = vshrl.u32 %v1595, 7
  %v1597 = vsub.s32 0, %v1596
  %v1598 = vrot.slane %v1593, %v1597
  %v1608 = vunpack.c.l.b16 %v1584
  %v1609 = vunpack.c.l.b16 %v1585
  %v1610 = vunpack.c.l.b16 %v1586
  %v1611 = vunpack.c.l.b16 %v1587
  %v1612 = vunpack.c.l.b16 %v1588
  %v1613 = vunpack.c.l.b16 %v1589
  %v1614 = vunpack.c.l.b16 %v1590
  %v1615 = vunpack.c.l.b16 %v1591
  %v1616 = vpack.c.b16 %v1609, %v1608
  %v1617 = vpack.c.b16 %v1611, %v1610
  %v1618 = vpack.c.b16 %v1613, %v1612
  %v1619 = vpack.c.b16 %v1615, %v1614
  %1624 = vmatprep.subr.bf16.mxu0 0
  %1625 = vmatpush1.bf16.msra.mxu0 0
  %1626 = vmatprep.subr.bf16.mxu0 0
  %1627 = vmatpush1.bf16.msra.mxu0 0
  %1628 = vmatprep.subr.bf16.mxu0 0
  %1629 = vmatpush1.bf16.msra.mxu0 0
  %1630 = vmatprep.subr.bf16.mxu0 0
  %1631 = vmatpush1.bf16.msra.mxu0 0
  %1632 = vmatprep.subr.bf16.mxu0 0
  %1633 = vmatpush1.bf16.msra.mxu0 %v1619
  %1634 = vmatprep.subr.bf16.mxu0 0
  %1635 = vmatpush1.bf16.msra.mxu0 %v1618
  %1636 = vmatprep.subr.bf16.mxu0 0
  %1637 = vmatpush1.bf16.msra.mxu0 %v1617
  %1638 = vmatprep.subr.bf16.mxu0 0
  %1639 = vmatpush1.bf16.msra.mxu0 %v1616
  %1640 = vmatprep.subr.bf16.mxu0 0
  %1641 = vmatpush2.bf16.msra.mxu0 0
  %1642 = vmatprep.subr.bf16.mxu0 0
  %1643 = vmatpush2.bf16.msra.mxu0 0
  %1644 = vmatprep.subr.bf16.mxu0 0
  %1645 = vmatpush2.bf16.msra.mxu0 0
  %1646 = vmatprep.subr.bf16.mxu0 0
  %1647 = vmatpush2.bf16.msra.mxu0 0
  %1648 = vmatprep.subr.bf16.mxu0 0
  %1649 = vmatpush2.bf16.msra.mxu0 0
  %1650 = vmatprep.subr.bf16.mxu0 0
  %1651 = vmatpush2.bf16.msra.mxu0 0
  %1652 = vmatprep.subr.bf16.mxu0 0
  %1653 = vmatpush2.bf16.msra.mxu0 0
  %1654 = vmatprep.subr.bf16.mxu0 0
  %1655 = vmatpush2.bf16.msra.mxu0 0
  %1656 = vmatprep.mubr.bf16.mxu0 0
  %1657 = vmatmul.mubr.bf16.gmra.mxu0 %v197
  %v1658 = vpop.f32.mrf.mxu0
  %v1659 = vadd.f32 %v1598, %v1658
  %v1660 = vpop.f32.mrf.mxu0
  %v1661 = vpop.f32.mrf.mxu0
  %v1662 = vadd.f32 %v1598, %v1661
  %v1663 = vpop.f32.mrf.mxu0
  %1664 = vdwg.mxu0
  %v1665 = vpack.c.bf16 %v1498, %v1495
  %v1666 = vpack.c.bf16 %v1580, %v1577
  %v1668 = vsel %vm402, %v1665, 0
  %v1671 = vsel %vm402, %v1666, 0
  %1673 = vmatprep.subr.bf16.mxu0 0
  %1674 = vmatpush1.bf16.xpose.msra.mxu0 0
  %1675 = vmatprep.subr.bf16.mxu0 0
  %1676 = vmatpush1.bf16.xpose.msra.mxu0 0
  %1677 = vmatprep.subr.bf16.mxu0 0
  %1678 = vmatpush1.bf16.xpose.msra.mxu0 0
  %1679 = vmatprep.subr.bf16.mxu0 0
  %1680 = vmatpush1.bf16.xpose.msra.mxu0 0
  %1681 = vmatprep.subr.bf16.mxu0 0
  %1682 = vmatpush1.bf16.xpose.msra.mxu0 0
  %1683 = vmatprep.subr.bf16.mxu0 0
  %1684 = vmatpush1.bf16.xpose.msra.mxu0 0
  %1685 = vmatprep.subr.bf16.mxu0 0
  %1686 = vmatpush1.bf16.xpose.msra.mxu0 0
  %1687 = vmatprep.subr.bf16.mxu0 0
  %1688 = vmatpush1.bf16.xpose.msra.mxu0 %v1671
  %1689 = vmatprep.subr.bf16.mxu0 0
  %1690 = vmatpush2.bf16.xpose.msra.mxu0 0
  %1691 = vmatprep.subr.bf16.mxu0 0
  %1692 = vmatpush2.bf16.xpose.msra.mxu0 0
  %1693 = vmatprep.subr.bf16.mxu0 0
  %1694 = vmatpush2.bf16.xpose.msra.mxu0 0
  %1695 = vmatprep.subr.bf16.mxu0 0
  %1696 = vmatpush2.bf16.xpose.msra.mxu0 0
  %1697 = vmatprep.subr.bf16.mxu0 0
  %1698 = vmatpush2.bf16.xpose.msra.mxu0 0
  %1699 = vmatprep.subr.bf16.mxu0 0
  %1700 = vmatpush2.bf16.xpose.msra.mxu0 0
  %1701 = vmatprep.subr.bf16.mxu0 0
  %1702 = vmatpush2.bf16.xpose.msra.mxu0 0
  %1703 = vmatprep.subr.bf16.mxu0 0
  %1704 = vmatpush2.bf16.xpose.msra.mxu0 0
  %1705 = vmatprep.mubr.bf16.mxu0 0
  %1706 = vmatmul.mubr.bf16.gmra.mxu0 %v1668
  %v1707 = vpop.f32.mrf.mxu0
  %v1708 = vadd.f32 0.0, %v1707
  %v1709 = vpop.f32.mrf.mxu0
  %v1710 = vpop.f32.mrf.mxu0
  %v1711 = vadd.f32 0.0, %v1710
  %v1712 = vpop.f32.mrf.mxu0
  %1713 = vdwg.mxu0
  %v1714 = vmul.f32 %v1708, 0.25
  %v1715 = vmul.f32 %v1711, 0.25
  %v1716 = vadd.f32 %v1714, %v153
  %v1717 = vadd.f32 %v1715, %v154
  %v1718 = vsel %vm402, %v1716, -inf
  %1719 = vmax.xlane.f32.xlu0 %v1718
  %v1720 = vpop.xlane.xlu0 %1719
  %v1721 = vsel %vm402, %v1717, -inf
  %1722 = vmax.xlane.f32.xlu0 %v1721
  %v1723 = vpop.xlane.xlu0 %1722
  %v1724 = vsub.f32 %v1716, %v1720
  %v1725 = vsub.f32 %v1717, %v1723
  %v1726 = vmul.f32 %v1724, 1.442695
  %v1727 = vpow.pop %v1726
  %v1728 = vmul.f32 %v1725, 1.442695
  %v1729 = vpow.pop %v1728
  %v1730 = vsel %vm402, %v1727, 0.0
  %1731 = vadd.xlane.f32.xlu0 %v1730
  %v1732 = vpop.xlane.xlu0 %1731
  %v1733 = vsel %vm402, %v1729, 0.0
  %1734 = vadd.xlane.f32.xlu0 %v1733
  %v1735 = vpop.xlane.xlu0 %1734
  %v1736 = vrcp.pop %v1732
  %v1737 = vrcp.pop %v1735
  %v1738 = vmul.f32 %v1727, %v1736
  %v1739 = vmul.f32 %v1729, %v1737
  %v1740 = vpack.c.bf16 %v1739, %v1738
  %v1741 = vpack.c.bf16 %v1662, %v1659
  %v1743 = vsel %vm402, %v1740, 0
  %1745 = vmatprep.subr.bf16.mxu0 0
  %1746 = vmatpush1.bf16.msra.mxu0 0
  %1747 = vmatprep.subr.bf16.mxu0 0
  %1748 = vmatpush1.bf16.msra.mxu0 0
  %1749 = vmatprep.subr.bf16.mxu0 0
  %1750 = vmatpush1.bf16.msra.mxu0 0
  %1751 = vmatprep.subr.bf16.mxu0 0
  %1752 = vmatpush1.bf16.msra.mxu0 0
  %1753 = vmatprep.subr.bf16.mxu0 0
  %1754 = vmatpush1.bf16.msra.mxu0 0
  %1755 = vmatprep.subr.bf16.mxu0 0
  %1756 = vmatpush1.bf16.msra.mxu0 0
  %1757 = vmatprep.subr.bf16.mxu0 0
  %1758 = vmatpush1.bf16.msra.mxu0 0
  %1759 = vmatprep.subr.bf16.mxu0 0
  %1760 = vmatpush1.bf16.msra.mxu0 %v1741
  %1761 = vmatprep.subr.bf16.mxu0 0
  %1762 = vmatpush2.bf16.msra.mxu0 0
  %1763 = vmatprep.subr.bf16.mxu0 0
  %1764 = vmatpush2.bf16.msra.mxu0 0
  %1765 = vmatprep.subr.bf16.mxu0 0
  %1766 = vmatpush2.bf16.msra.mxu0 0
  %1767 = vmatprep.subr.bf16.mxu0 0
  %1768 = vmatpush2.bf16.msra.mxu0 0
  %1769 = vmatprep.subr.bf16.mxu0 0
  %1770 = vmatpush2.bf16.msra.mxu0 0
  %1771 = vmatprep.subr.bf16.mxu0 0
  %1772 = vmatpush2.bf16.msra.mxu0 0
  %1773 = vmatprep.subr.bf16.mxu0 0
  %1774 = vmatpush2.bf16.msra.mxu0 0
  %1775 = vmatprep.subr.bf16.mxu0 0
  %1776 = vmatpush2.bf16.msra.mxu0 0
  %1777 = vmatprep.mubr.bf16.mxu0 0
  %1778 = vmatmul.mubr.bf16.gmra.mxu0 %v1743
  %v1779 = vpop.f32.mrf.mxu0
  %v1780 = vadd.f32 0.0, %v1779
  %v1781 = vpop.f32.mrf.mxu0
  %v1782 = vpop.f32.mrf.mxu0
  %v1783 = vadd.f32 0.0, %v1782
  %v1784 = vpop.f32.mrf.mxu0
  %1785 = vdwg.mxu0
  %v1786 = vpack.c.bf16 %v1783, %v1780
  %s1787 = scalar_lea.vmem %s17, 24
  %v1788 = vld [vmem:[%s1787] sm:$0xf]
  %v1789 = vld [vmem:[%s1787 + $0x4] sm:$0xf]
  %v1792 = vunpack.c.l.b16 %v1788
  %v1793 = vunpack.c.l.b16 %v1789
  %v1794 = vpack.c.b16 %v1793, %v1792
  %v1797 = vsel %vm402, %v1786, 0
  %1799 = vmatprep.subr.bf16.mxu0 0
  %1800 = vmatpush1.bf16.msra.mxu0 0
  %1801 = vmatprep.subr.bf16.mxu0 0
  %1802 = vmatpush1.bf16.msra.mxu0 0
  %1803 = vmatprep.subr.bf16.mxu0 0
  %1804 = vmatpush1.bf16.msra.mxu0 0
  %1805 = vmatprep.subr.bf16.mxu0 0
  %1806 = vmatpush1.bf16.msra.mxu0 0
  %1807 = vmatprep.subr.bf16.mxu0 0
  %1808 = vmatpush1.bf16.msra.mxu0 0
  %1809 = vmatprep.subr.bf16.mxu0 0
  %1810 = vmatpush1.bf16.msra.mxu0 0
  %1811 = vmatprep.subr.bf16.mxu0 0
  %1812 = vmatpush1.bf16.msra.mxu0 0
  %1813 = vmatprep.subr.bf16.mxu0 0
  %1814 = vmatpush1.bf16.msra.mxu0 %v1794
  %1815 = vmatprep.subr.bf16.mxu0 0
  %1816 = vmatpush2.bf16.msra.mxu0 0
  %1817 = vmatprep.subr.bf16.mxu0 0
  %1818 = vmatpush2.bf16.msra.mxu0 0
  %1819 = vmatprep.subr.bf16.mxu0 0
  %1820 = vmatpush2.bf16.msra.mxu0 0
  %1821 = vmatprep.subr.bf16.mxu0 0
  %1822 = vmatpush2.bf16.msra.mxu0 0
  %1823 = vmatprep.subr.bf16.mxu0 0
  %1824 = vmatpush2.bf16.msra.mxu0 0
  %1825 = vmatprep.subr.bf16.mxu0 0
  %1826 = vmatpush2.bf16.msra.mxu0 0
  %1827 = vmatprep.subr.bf16.mxu0 0
  %1828 = vmatpush2.bf16.msra.mxu0 0
  %1829 = vmatprep.subr.bf16.mxu0 0
  %1830 = vmatpush2.bf16.msra.mxu0 0
  %1831 = vmatprep.mubr.bf16.mxu0 0
  %1832 = vmatmul.mubr.bf16.gmra.mxu0 %v1797
  %v1833 = vpop.f32.mrf.mxu0
  %v1834 = vadd.f32 0.0, %v1833
  %v1835 = vpop.f32.mrf.mxu0
  %v1836 = vpop.f32.mrf.mxu0
  %v1837 = vadd.f32 0.0, %v1836
  %v1838 = vpop.f32.mrf.mxu0
  %1839 = vdwg.mxu0
  %v1840 = vadd.f32 %v1417, %v1834
  %v1841 = vadd.f32 %v1418, %v1837
  %v1842 = vld [vmem:[%s19] sm:$0x1]
  %v1844 = vlaneseq
  %v1845 = vshrl.u32 %v1844, 7
  %v1846 = vsub.s32 0, %v1845
  %v1847 = vrot.slane %v1842, %v1846
  %v1849 = vadd.f32 %v1840, %v1847
  %v1850 = vadd.f32 %v1841, %v1847
  %v1851 = vadd.f32 %v151, %v1849
  %v1852 = vadd.f32 %v152, %v1850
  %v1853 = vld [vmem:[%s21] sm:$0x1]
  %v1854 = vld [vmem:[%s23] sm:$0x1]
  %v1855 = vsel %vm195, %v1851, 0.0
  %1856 = vadd.xlane.f32.xlu0 %v1855
  %v1857 = vpop.xlane.xlu0 %1856
  %v1858 = vsel %vm195, %v1852, 0.0
  %1859 = vadd.xlane.f32.xlu0 %v1858
  %v1860 = vpop.xlane.xlu0 %1859
  %v1861 = vrcp.pop 64.0
  %v1862 = vmul.f32 %v1857, %v1861
  %v1863 = vmul.f32 %v1860, %v1861
  %v1864 = vsub.f32 %v1851, %v1862
  %v1865 = vsub.f32 %v1852, %v1863
  %v1866 = vmul.f32 %v1864, %v1864
  %v1867 = vmul.f32 %v1865, %v1865
  %v1868 = vsel %vm195, %v1866, 0.0
  %1869 = vadd.xlane.f32.xlu0 %v1868
  %v1870 = vpop.xlane.xlu0 %1869
  %v1871 = vsel %vm195, %v1867, 0.0
  %1872 = vadd.xlane.f32.xlu0 %v1871
  %v1873 = vpop.xlane.xlu0 %1872
  %v1874 = vmul.f32 %v1870, %v1861
  %v1875 = vmul.f32 %v1873, %v1861
  %v1876 = vadd.f32 %v1874, 1e-05
  %v1877 = vadd.f32 %v1875, 1e-05
  %v1878 = vrsqrt.pop %v1876
  %v1879 = vrsqrt.pop %v1877
  %v1880 = vmul.f32 %v1864, %v1878
  %v1881 = vmul.f32 %v1865, %v1879
  %v1883 = vlaneseq
  %v1884 = vshrl.u32 %v1883, 7
  %v1885 = vsub.s32 0, %v1884
  %v1886 = vrot.slane %v1853, %v1885
  %v1888 = vmul.f32 %v1880, %v1886
  %v1889 = vmul.f32 %v1881, %v1886
  %v1891 = vlaneseq
  %v1892 = vshrl.u32 %v1891, 7
  %v1893 = vsub.s32 0, %v1892
  %v1894 = vrot.slane %v1854, %v1893
  %v1896 = vadd.f32 %v1888, %v1894
  %v1897 = vadd.f32 %v1889, %v1894
  %v1898 = vpack.c.bf16 %v1897, %v1896
  %v1899 = vld [vmem:[%s25] sm:$0xf]
  %v1900 = vld [vmem:[%s25 + $0x4] sm:$0xf]
  %v1901 = vld [vmem:[%s25 + $0x8] sm:$0xf]
  %v1902 = vld [vmem:[%s25 + $0xc] sm:$0xf]
  %v1903 = vld [vmem:[%s25 + $0x10] sm:$0xf]
  %v1904 = vld [vmem:[%s25 + $0x14] sm:$0xf]
  %v1905 = vld [vmem:[%s25 + $0x18] sm:$0xf]
  %v1906 = vld [vmem:[%s25 + $0x1c] sm:$0xf]
  %v1907 = vld [vmem:[%s27] sm:$0x1]
  %v1909 = vlaneseq
  %v1910 = vshrl.u32 %v1909, 7
  %v1911 = vsub.s32 0, %v1910
  %v1912 = vrot.slane %v1907, %v1911
  %v1922 = vunpack.c.l.b16 %v1899
  %v1923 = vunpack.c.l.b16 %v1900
  %v1924 = vunpack.c.l.b16 %v1901
  %v1925 = vunpack.c.l.b16 %v1902
  %v1926 = vunpack.c.l.b16 %v1903
  %v1927 = vunpack.c.l.b16 %v1904
  %v1928 = vunpack.c.l.b16 %v1905
  %v1929 = vunpack.c.l.b16 %v1906
  %v1930 = vpack.c.b16 %v1923, %v1922
  %v1931 = vpack.c.b16 %v1925, %v1924
  %v1932 = vpack.c.b16 %v1927, %v1926
  %v1933 = vpack.c.b16 %v1929, %v1928
  %v1939 = vsel %vm195, %v1898, 0
  %1941 = vmatprep.subr.bf16.mxu0 0
  %1942 = vmatpush1.bf16.msra.mxu0 0
  %1943 = vmatprep.subr.bf16.mxu0 0
  %1944 = vmatpush1.bf16.msra.mxu0 0
  %1945 = vmatprep.subr.bf16.mxu0 0
  %1946 = vmatpush1.bf16.msra.mxu0 0
  %1947 = vmatprep.subr.bf16.mxu0 0
  %1948 = vmatpush1.bf16.msra.mxu0 0
  %1949 = vmatprep.subr.bf16.mxu0 0
  %1950 = vmatpush1.bf16.msra.mxu0 %v1933
  %1951 = vmatprep.subr.bf16.mxu0 0
  %1952 = vmatpush1.bf16.msra.mxu0 %v1932
  %1953 = vmatprep.subr.bf16.mxu0 0
  %1954 = vmatpush1.bf16.msra.mxu0 %v1931
  %1955 = vmatprep.subr.bf16.mxu0 0
  %1956 = vmatpush1.bf16.msra.mxu0 %v1930
  %1957 = vmatprep.subr.bf16.mxu0 0
  %1958 = vmatpush2.bf16.msra.mxu0 0
  %1959 = vmatprep.subr.bf16.mxu0 0
  %1960 = vmatpush2.bf16.msra.mxu0 0
  %1961 = vmatprep.subr.bf16.mxu0 0
  %1962 = vmatpush2.bf16.msra.mxu0 0
  %1963 = vmatprep.subr.bf16.mxu0 0
  %1964 = vmatpush2.bf16.msra.mxu0 0
  %1965 = vmatprep.subr.bf16.mxu0 0
  %1966 = vmatpush2.bf16.msra.mxu0 0
  %1967 = vmatprep.subr.bf16.mxu0 0
  %1968 = vmatpush2.bf16.msra.mxu0 0
  %1969 = vmatprep.subr.bf16.mxu0 0
  %1970 = vmatpush2.bf16.msra.mxu0 0
  %1971 = vmatprep.subr.bf16.mxu0 0
  %1972 = vmatpush2.bf16.msra.mxu0 0
  %1973 = vmatprep.mubr.bf16.mxu0 0
  %1974 = vmatmul.mubr.bf16.gmra.mxu0 %v1939
  %v1975 = vpop.f32.mrf.mxu0
  %v1976 = vadd.f32 %v1912, %v1975
  %v1977 = vpop.f32.mrf.mxu0
  %v1978 = vpop.f32.mrf.mxu0
  %v1979 = vadd.f32 %v1912, %v1978
  %v1980 = vpop.f32.mrf.mxu0
  %1981 = vdwg.mxu0
  %v1982 = vmul.f32 %v1976, %v1976
  %v1983 = vmul.f32 %v1979, %v1979
  %v1984 = vmul.f32 %v1976, %v1982
  %v1985 = vmul.f32 %v1979, %v1983
  %v1986 = vmul.f32 %v1984, 0.044715
  %v1987 = vmul.f32 %v1985, 0.044715
  %v1988 = vadd.f32 %v1976, %v1986
  %v1989 = vadd.f32 %v1979, %v1987
  %v1990 = vmul.f32 %v1988, 0.7978846
  %v1991 = vmul.f32 %v1989, 0.7978846
  %v1992 = vtanh.pop %v1990
  %v1993 = vtanh.pop %v1991
  %v1994 = vadd.f32 %v1992, 1.0
  %v1995 = vadd.f32 %v1993, 1.0
  %v1996 = vmul.f32 %v1994, 0.5
  %v1997 = vmul.f32 %v1995, 0.5
  %v1998 = vmul.f32 %v1976, %v1996
  %v1999 = vmul.f32 %v1979, %v1997
  %v2000 = vpack.c.bf16 %v1999, %v1998
  %v2001 = vld [vmem:[%s29] sm:$0xf]
  %v2002 = vld [vmem:[%s29 + $0x4] sm:$0xf]
  %v2003 = vld [vmem:[%s29 + $0x8] sm:$0xf]
  %v2004 = vld [vmem:[%s29 + $0xc] sm:$0xf]
  %v2005 = vld [vmem:[%s29 + $0x10] sm:$0xf]
  %v2006 = vld [vmem:[%s29 + $0x14] sm:$0xf]
  %v2007 = vld [vmem:[%s29 + $0x18] sm:$0xf]
  %v2008 = vld [vmem:[%s29 + $0x1c] sm:$0xf]
  %v2009 = vld [vmem:[%s29 + $0x20] sm:$0xf]
  %v2010 = vld [vmem:[%s29 + $0x24] sm:$0xf]
  %v2011 = vld [vmem:[%s29 + $0x28] sm:$0xf]
  %v2012 = vld [vmem:[%s29 + $0x2c] sm:$0xf]
  %v2013 = vld [vmem:[%s29 + $0x30] sm:$0xf]
  %v2014 = vld [vmem:[%s29 + $0x34] sm:$0xf]
  %v2015 = vld [vmem:[%s29 + $0x38] sm:$0xf]
  %v2016 = vld [vmem:[%s29 + $0x3c] sm:$0xf]
  %v2017 = vld [vmem:[%s31] sm:$0x1]
  %v2019 = vlaneseq
  %v2020 = vshrl.u32 %v2019, 7
  %v2021 = vsub.s32 0, %v2020
  %v2022 = vrot.slane %v2017, %v2021
  %v2040 = vunpack.c.l.b16 %v2001
  %v2041 = vunpack.c.l.b16 %v2002
  %v2042 = vunpack.c.l.b16 %v2003
  %v2043 = vunpack.c.l.b16 %v2004
  %v2044 = vunpack.c.l.b16 %v2005
  %v2045 = vunpack.c.l.b16 %v2006
  %v2046 = vunpack.c.l.b16 %v2007
  %v2047 = vunpack.c.l.b16 %v2008
  %v2048 = vunpack.c.l.b16 %v2009
  %v2049 = vunpack.c.l.b16 %v2010
  %v2050 = vunpack.c.l.b16 %v2011
  %v2051 = vunpack.c.l.b16 %v2012
  %v2052 = vunpack.c.l.b16 %v2013
  %v2053 = vunpack.c.l.b16 %v2014
  %v2054 = vunpack.c.l.b16 %v2015
  %v2055 = vunpack.c.l.b16 %v2016
  %v2056 = vpack.c.b16 %v2041, %v2040
  %v2057 = vpack.c.b16 %v2043, %v2042
  %v2058 = vpack.c.b16 %v2045, %v2044
  %v2059 = vpack.c.b16 %v2047, %v2046
  %v2060 = vpack.c.b16 %v2049, %v2048
  %v2061 = vpack.c.b16 %v2051, %v2050
  %v2062 = vpack.c.b16 %v2053, %v2052
  %v2063 = vpack.c.b16 %v2055, %v2054
  %2072 = vmatprep.subr.bf16.mxu0 0
  %2073 = vmatpush1.bf16.msra.mxu0 %v2063
  %2074 = vmatprep.subr.bf16.mxu0 0
  %2075 = vmatpush1.bf16.msra.mxu0 %v2062
  %2076 = vmatprep.subr.bf16.mxu0 0
  %2077 = vmatpush1.bf16.msra.mxu0 %v2061
  %2078 = vmatprep.subr.bf16.mxu0 0
  %2079 = vmatpush1.bf16.msra.mxu0 %v2060
  %2080 = vmatprep.subr.bf16.mxu0 0
  %2081 = vmatpush1.bf16.msra.mxu0 %v2059
  %2082 = vmatprep.subr.bf16.mxu0 0
  %2083 = vmatpush1.bf16.msra.mxu0 %v2058
  %2084 = vmatprep.subr.bf16.mxu0 0
  %2085 = vmatpush1.bf16.msra.mxu0 %v2057
  %2086 = vmatprep.subr.bf16.mxu0 0
  %2087 = vmatpush1.bf16.msra.mxu0 %v2056
  %2088 = vmatprep.subr.bf16.mxu0 0
  %2089 = vmatpush2.bf16.msra.mxu0 0
  %2090 = vmatprep.subr.bf16.mxu0 0
  %2091 = vmatpush2.bf16.msra.mxu0 0
  %2092 = vmatprep.subr.bf16.mxu0 0
  %2093 = vmatpush2.bf16.msra.mxu0 0
  %2094 = vmatprep.subr.bf16.mxu0 0
  %2095 = vmatpush2.bf16.msra.mxu0 0
  %2096 = vmatprep.subr.bf16.mxu0 0
  %2097 = vmatpush2.bf16.msra.mxu0 0
  %2098 = vmatprep.subr.bf16.mxu0 0
  %2099 = vmatpush2.bf16.msra.mxu0 0
  %2100 = vmatprep.subr.bf16.mxu0 0
  %2101 = vmatpush2.bf16.msra.mxu0 0
  %2102 = vmatprep.subr.bf16.mxu0 0
  %2103 = vmatpush2.bf16.msra.mxu0 0
  %2104 = vmatprep.mubr.bf16.mxu0 0
  %2105 = vmatmul.mubr.bf16.gmra.mxu0 %v2000
  %v2106 = vpop.f32.mrf.mxu0
  %v2107 = vadd.f32 %v2022, %v2106
  %v2108 = vpop.f32.mrf.mxu0
  %v2109 = vpop.f32.mrf.mxu0
  %v2110 = vadd.f32 %v2022, %v2109
  %v2111 = vpop.f32.mrf.mxu0
  %2112 = vdwg.mxu0
  %v2113 = vadd.f32 %v1896, %v2107
  %v2114 = vadd.f32 %v1897, %v2110
  %v2115 = vld [vmem:[%s33] sm:$0x1]
  %v2116 = vld [vmem:[%s35] sm:$0x1]
  %v2117 = vsel %vm195, %v2113, 0.0
  %2118 = vadd.xlane.f32.xlu0 %v2117
  %v2119 = vpop.xlane.xlu0 %2118
  %v2120 = vsel %vm195, %v2114, 0.0
  %2121 = vadd.xlane.f32.xlu0 %v2120
  %v2122 = vpop.xlane.xlu0 %2121
  %v2123 = vmul.f32 %v2119, %v1861
  %v2124 = vmul.f32 %v2122, %v1861
  %v2125 = vsub.f32 %v2113, %v2123
  %v2126 = vsub.f32 %v2114, %v2124
  %v2127 = vmul.f32 %v2125, %v2125
  %v2128 = vmul.f32 %v2126, %v2126
  %v2129 = vsel %vm195, %v2127, 0.0
  %2130 = vadd.xlane.f32.xlu0 %v2129
  %v2131 = vpop.xlane.xlu0 %2130
  %v2132 = vsel %vm195, %v2128, 0.0
  %2133 = vadd.xlane.f32.xlu0 %v2132
  %v2134 = vpop.xlane.xlu0 %2133
  %v2135 = vmul.f32 %v2131, %v1861
  %v2136 = vmul.f32 %v2134, %v1861
  %v2137 = vadd.f32 %v2135, 1e-05
  %v2138 = vadd.f32 %v2136, 1e-05
  %v2139 = vrsqrt.pop %v2137
  %v2140 = vrsqrt.pop %v2138
  %v2141 = vmul.f32 %v2125, %v2139
  %v2142 = vmul.f32 %v2126, %v2140
  %v2144 = vlaneseq
  %v2145 = vshrl.u32 %v2144, 7
  %v2146 = vsub.s32 0, %v2145
  %v2147 = vrot.slane %v2115, %v2146
  %v2149 = vmul.f32 %v2141, %v2147
  %v2150 = vmul.f32 %v2142, %v2147
  %v2152 = vlaneseq
  %v2153 = vshrl.u32 %v2152, 7
  %v2154 = vsub.s32 0, %v2153
  %v2155 = vrot.slane %v2116, %v2154
  %v2157 = vadd.f32 %v2149, %v2155
  %v2158 = vadd.f32 %v2150, %v2155
  %v2159 = vpack.c.bf16 %v2158, %v2157
  %v2160 = vld [vmem:[%s37] sm:$0xf]
  %v2161 = vld [vmem:[%s37 + $0x4] sm:$0xf]
  %v2162 = vld [vmem:[%s37 + $0x8] sm:$0xf]
  %v2163 = vld [vmem:[%s37 + $0xc] sm:$0xf]
  %v2164 = vld [vmem:[%s37 + $0x10] sm:$0xf]
  %v2165 = vld [vmem:[%s37 + $0x14] sm:$0xf]
  %v2166 = vld [vmem:[%s37 + $0x18] sm:$0xf]
  %v2167 = vld [vmem:[%s37 + $0x1c] sm:$0xf]
  %v2168 = vld [vmem:[%s39] sm:$0x1]
  %v2170 = vlaneseq
  %v2171 = vshrl.u32 %v2170, 7
  %v2172 = vsub.s32 0, %v2171
  %v2173 = vrot.slane %v2168, %v2172
  %v2183 = vunpack.c.l.b16 %v2160
  %v2184 = vunpack.c.l.b16 %v2161
  %v2185 = vunpack.c.l.b16 %v2162
  %v2186 = vunpack.c.l.b16 %v2163
  %v2187 = vunpack.c.l.b16 %v2164
  %v2188 = vunpack.c.l.b16 %v2165
  %v2189 = vunpack.c.l.b16 %v2166
  %v2190 = vunpack.c.l.b16 %v2167
  %v2191 = vpack.c.b16 %v2184, %v2183
  %v2192 = vpack.c.b16 %v2186, %v2185
  %v2193 = vpack.c.b16 %v2188, %v2187
  %v2194 = vpack.c.b16 %v2190, %v2189
  %v2200 = vsel %vm195, %v2159, 0
  %2202 = vmatprep.subr.bf16.mxu0 0
  %2203 = vmatpush1.bf16.msra.mxu0 0
  %2204 = vmatprep.subr.bf16.mxu0 0
  %2205 = vmatpush1.bf16.msra.mxu0 0
  %2206 = vmatprep.subr.bf16.mxu0 0
  %2207 = vmatpush1.bf16.msra.mxu0 0
  %2208 = vmatprep.subr.bf16.mxu0 0
  %2209 = vmatpush1.bf16.msra.mxu0 0
  %2210 = vmatprep.subr.bf16.mxu0 0
  %2211 = vmatpush1.bf16.msra.mxu0 %v2194
  %2212 = vmatprep.subr.bf16.mxu0 0
  %2213 = vmatpush1.bf16.msra.mxu0 %v2193
  %2214 = vmatprep.subr.bf16.mxu0 0
  %2215 = vmatpush1.bf16.msra.mxu0 %v2192
  %2216 = vmatprep.subr.bf16.mxu0 0
  %2217 = vmatpush1.bf16.msra.mxu0 %v2191
  %2218 = vmatprep.subr.bf16.mxu0 0
  %2219 = vmatpush2.bf16.msra.mxu0 0
  %2220 = vmatprep.subr.bf16.mxu0 0
  %2221 = vmatpush2.bf16.msra.mxu0 0
  %2222 = vmatprep.subr.bf16.mxu0 0
  %2223 = vmatpush2.bf16.msra.mxu0 0
  %2224 = vmatprep.subr.bf16.mxu0 0
  %2225 = vmatpush2.bf16.msra.mxu0 0
  %2226 = vmatprep.subr.bf16.mxu0 0
  %2227 = vmatpush2.bf16.msra.mxu0 0
  %2228 = vmatprep.subr.bf16.mxu0 0
  %2229 = vmatpush2.bf16.msra.mxu0 0
  %2230 = vmatprep.subr.bf16.mxu0 0
  %2231 = vmatpush2.bf16.msra.mxu0 0
  %2232 = vmatprep.subr.bf16.mxu0 0
  %2233 = vmatpush2.bf16.msra.mxu0 0
  %2234 = vmatprep.mubr.bf16.mxu0 0
  %2235 = vmatmul.mubr.bf16.gmra.mxu0 %v2200
  %v2236 = vpop.f32.mrf.mxu0
  %v2237 = vadd.f32 %v2173, %v2236
  %v2238 = vpop.f32.mrf.mxu0
  %v2239 = vpop.f32.mrf.mxu0
  %v2240 = vadd.f32 %v2173, %v2239
  %v2241 = vpop.f32.mrf.mxu0
  %2242 = vdwg.mxu0
  %v2243 = vld [vmem:[%s41] sm:$0xf]
  %v2244 = vld [vmem:[%s41 + $0x4] sm:$0xf]
  %v2245 = vld [vmem:[%s41 + $0x8] sm:$0xf]
  %v2246 = vld [vmem:[%s41 + $0xc] sm:$0xf]
  %v2247 = vld [vmem:[%s41 + $0x10] sm:$0xf]
  %v2248 = vld [vmem:[%s41 + $0x14] sm:$0xf]
  %v2249 = vld [vmem:[%s41 + $0x18] sm:$0xf]
  %v2250 = vld [vmem:[%s41 + $0x1c] sm:$0xf]
  %v2251 = vld [vmem:[%s43] sm:$0x1]
  %v2253 = vlaneseq
  %v2254 = vshrl.u32 %v2253, 7
  %v2255 = vsub.s32 0, %v2254
  %v2256 = vrot.slane %v2251, %v2255
  %v2266 = vunpack.c.l.b16 %v2243
  %v2267 = vunpack.c.l.b16 %v2244
  %v2268 = vunpack.c.l.b16 %v2245
  %v2269 = vunpack.c.l.b16 %v2246
  %v2270 = vunpack.c.l.b16 %v2247
  %v2271 = vunpack.c.l.b16 %v2248
  %v2272 = vunpack.c.l.b16 %v2249
  %v2273 = vunpack.c.l.b16 %v2250
  %v2274 = vpack.c.b16 %v2267, %v2266
  %v2275 = vpack.c.b16 %v2269, %v2268
  %v2276 = vpack.c.b16 %v2271, %v2270
  %v2277 = vpack.c.b16 %v2273, %v2272
  %2282 = vmatprep.subr.bf16.mxu0 0
  %2283 = vmatpush1.bf16.msra.mxu0 0
  %2284 = vmatprep.subr.bf16.mxu0 0
  %2285 = vmatpush1.bf16.msra.mxu0 0
  %2286 = vmatprep.subr.bf16.mxu0 0
  %2287 = vmatpush1.bf16.msra.mxu0 0
  %2288 = vmatprep.subr.bf16.mxu0 0
  %2289 = vmatpush1.bf16.msra.mxu0 0
  %2290 = vmatprep.subr.bf16.mxu0 0
  %2291 = vmatpush1.bf16.msra.mxu0 %v2277
  %2292 = vmatprep.subr.bf16.mxu0 0
  %2293 = vmatpush1.bf16.msra.mxu0 %v2276
  %2294 = vmatprep.subr.bf16.mxu0 0
  %2295 = vmatpush1.bf16.msra.mxu0 %v2275
  %2296 = vmatprep.subr.bf16.mxu0 0
  %2297 = vmatpush1.bf16.msra.mxu0 %v2274
  %2298 = vmatprep.subr.bf16.mxu0 0
  %2299 = vmatpush2.bf16.msra.mxu0 0
  %2300 = vmatprep.subr.bf16.mxu0 0
  %2301 = vmatpush2.bf16.msra.mxu0 0
  %2302 = vmatprep.subr.bf16.mxu0 0
  %2303 = vmatpush2.bf16.msra.mxu0 0
  %2304 = vmatprep.subr.bf16.mxu0 0
  %2305 = vmatpush2.bf16.msra.mxu0 0
  %2306 = vmatprep.subr.bf16.mxu0 0
  %2307 = vmatpush2.bf16.msra.mxu0 0
  %2308 = vmatprep.subr.bf16.mxu0 0
  %2309 = vmatpush2.bf16.msra.mxu0 0
  %2310 = vmatprep.subr.bf16.mxu0 0
  %2311 = vmatpush2.bf16.msra.mxu0 0
  %2312 = vmatprep.subr.bf16.mxu0 0
  %2313 = vmatpush2.bf16.msra.mxu0 0
  %2314 = vmatprep.mubr.bf16.mxu0 0
  %2315 = vmatmul.mubr.bf16.gmra.mxu0 %v2200
  %v2316 = vpop.f32.mrf.mxu0
  %v2317 = vadd.f32 %v2256, %v2316
  %v2318 = vpop.f32.mrf.mxu0
  %v2319 = vpop.f32.mrf.mxu0
  %v2320 = vadd.f32 %v2256, %v2319
  %v2321 = vpop.f32.mrf.mxu0
  %2322 = vdwg.mxu0
  %v2323 = vld [vmem:[%s45] sm:$0xf]
  %v2324 = vld [vmem:[%s45 + $0x4] sm:$0xf]
  %v2325 = vld [vmem:[%s45 + $0x8] sm:$0xf]
  %v2326 = vld [vmem:[%s45 + $0xc] sm:$0xf]
  %v2327 = vld [vmem:[%s45 + $0x10] sm:$0xf]
  %v2328 = vld [vmem:[%s45 + $0x14] sm:$0xf]
  %v2329 = vld [vmem:[%s45 + $0x18] sm:$0xf]
  %v2330 = vld [vmem:[%s45 + $0x1c] sm:$0xf]
  %v2331 = vld [vmem:[%s47] sm:$0x1]
  %v2333 = vlaneseq
  %v2334 = vshrl.u32 %v2333, 7
  %v2335 = vsub.s32 0, %v2334
  %v2336 = vrot.slane %v2331, %v2335
  %v2346 = vunpack.c.l.b16 %v2323
  %v2347 = vunpack.c.l.b16 %v2324
  %v2348 = vunpack.c.l.b16 %v2325
  %v2349 = vunpack.c.l.b16 %v2326
  %v2350 = vunpack.c.l.b16 %v2327
  %v2351 = vunpack.c.l.b16 %v2328
  %v2352 = vunpack.c.l.b16 %v2329
  %v2353 = vunpack.c.l.b16 %v2330
  %v2354 = vpack.c.b16 %v2347, %v2346
  %v2355 = vpack.c.b16 %v2349, %v2348
  %v2356 = vpack.c.b16 %v2351, %v2350
  %v2357 = vpack.c.b16 %v2353, %v2352
  %2362 = vmatprep.subr.bf16.mxu0 0
  %2363 = vmatpush1.bf16.msra.mxu0 0
  %2364 = vmatprep.subr.bf16.mxu0 0
  %2365 = vmatpush1.bf16.msra.mxu0 0
  %2366 = vmatprep.subr.bf16.mxu0 0
  %2367 = vmatpush1.bf16.msra.mxu0 0
  %2368 = vmatprep.subr.bf16.mxu0 0
  %2369 = vmatpush1.bf16.msra.mxu0 0
  %2370 = vmatprep.subr.bf16.mxu0 0
  %2371 = vmatpush1.bf16.msra.mxu0 %v2357
  %2372 = vmatprep.subr.bf16.mxu0 0
  %2373 = vmatpush1.bf16.msra.mxu0 %v2356
  %2374 = vmatprep.subr.bf16.mxu0 0
  %2375 = vmatpush1.bf16.msra.mxu0 %v2355
  %2376 = vmatprep.subr.bf16.mxu0 0
  %2377 = vmatpush1.bf16.msra.mxu0 %v2354
  %2378 = vmatprep.subr.bf16.mxu0 0
  %2379 = vmatpush2.bf16.msra.mxu0 0
  %2380 = vmatprep.subr.bf16.mxu0 0
  %2381 = vmatpush2.bf16.msra.mxu0 0
  %2382 = vmatprep.subr.bf16.mxu0 0
  %2383 = vmatpush2.bf16.msra.mxu0 0
  %2384 = vmatprep.subr.bf16.mxu0 0
  %2385 = vmatpush2.bf16.msra.mxu0 0
  %2386 = vmatprep.subr.bf16.mxu0 0
  %2387 = vmatpush2.bf16.msra.mxu0 0
  %2388 = vmatprep.subr.bf16.mxu0 0
  %2389 = vmatpush2.bf16.msra.mxu0 0
  %2390 = vmatprep.subr.bf16.mxu0 0
  %2391 = vmatpush2.bf16.msra.mxu0 0
  %2392 = vmatprep.subr.bf16.mxu0 0
  %2393 = vmatpush2.bf16.msra.mxu0 0
  %2394 = vmatprep.mubr.bf16.mxu0 0
  %2395 = vmatmul.mubr.bf16.gmra.mxu0 %v2200
  %v2396 = vpop.f32.mrf.mxu0
  %v2397 = vadd.f32 %v2336, %v2396
  %v2398 = vpop.f32.mrf.mxu0
  %v2399 = vpop.f32.mrf.mxu0
  %v2400 = vadd.f32 %v2336, %v2399
  %v2401 = vpop.f32.mrf.mxu0
  %2402 = vdwg.mxu0
  %v2403 = vpack.c.bf16 %v2240, %v2237
  %v2404 = vpack.c.bf16 %v2320, %v2317
  %v2406 = vsel %vm402, %v2403, 0
  %v2409 = vsel %vm402, %v2404, 0
  %2411 = vmatprep.subr.bf16.mxu0 0
  %2412 = vmatpush1.bf16.xpose.msra.mxu0 0
  %2413 = vmatprep.subr.bf16.mxu0 0
  %2414 = vmatpush1.bf16.xpose.msra.mxu0 0
  %2415 = vmatprep.subr.bf16.mxu0 0
  %2416 = vmatpush1.bf16.xpose.msra.mxu0 0
  %2417 = vmatprep.subr.bf16.mxu0 0
  %2418 = vmatpush1.bf16.xpose.msra.mxu0 0
  %2419 = vmatprep.subr.bf16.mxu0 0
  %2420 = vmatpush1.bf16.xpose.msra.mxu0 0
  %2421 = vmatprep.subr.bf16.mxu0 0
  %2422 = vmatpush1.bf16.xpose.msra.mxu0 0
  %2423 = vmatprep.subr.bf16.mxu0 0
  %2424 = vmatpush1.bf16.xpose.msra.mxu0 0
  %2425 = vmatprep.subr.bf16.mxu0 0
  %2426 = vmatpush1.bf16.xpose.msra.mxu0 %v2409
  %2427 = vmatprep.subr.bf16.mxu0 0
  %2428 = vmatpush2.bf16.xpose.msra.mxu0 0
  %2429 = vmatprep.subr.bf16.mxu0 0
  %2430 = vmatpush2.bf16.xpose.msra.mxu0 0
  %2431 = vmatprep.subr.bf16.mxu0 0
  %2432 = vmatpush2.bf16.xpose.msra.mxu0 0
  %2433 = vmatprep.subr.bf16.mxu0 0
  %2434 = vmatpush2.bf16.xpose.msra.mxu0 0
  %2435 = vmatprep.subr.bf16.mxu0 0
  %2436 = vmatpush2.bf16.xpose.msra.mxu0 0
  %2437 = vmatprep.subr.bf16.mxu0 0
  %2438 = vmatpush2.bf16.xpose.msra.mxu0 0
  %2439 = vmatprep.subr.bf16.mxu0 0
  %2440 = vmatpush2.bf16.xpose.msra.mxu0 0
  %2441 = vmatprep.subr.bf16.mxu0 0
  %2442 = vmatpush2.bf16.xpose.msra.mxu0 0
  %2443 = vmatprep.mubr.bf16.mxu0 0
  %2444 = vmatmul.mubr.bf16.gmra.mxu0 %v2406
  %v2445 = vpop.f32.mrf.mxu0
  %v2446 = vadd.f32 0.0, %v2445
  %v2447 = vpop.f32.mrf.mxu0
  %v2448 = vpop.f32.mrf.mxu0
  %v2449 = vadd.f32 0.0, %v2448
  %v2450 = vpop.f32.mrf.mxu0
  %2451 = vdwg.mxu0
  %v2452 = vmul.f32 %v2446, 0.25
  %v2453 = vmul.f32 %v2449, 0.25
  %v2454 = vadd.f32 %v2452, %v153
  %v2455 = vadd.f32 %v2453, %v154
  %v2456 = vsel %vm402, %v2454, -inf
  %2457 = vmax.xlane.f32.xlu0 %v2456
  %v2458 = vpop.xlane.xlu0 %2457
  %v2459 = vsel %vm402, %v2455, -inf
  %2460 = vmax.xlane.f32.xlu0 %v2459
  %v2461 = vpop.xlane.xlu0 %2460
  %v2462 = vsub.f32 %v2454, %v2458
  %v2463 = vsub.f32 %v2455, %v2461
  %v2464 = vmul.f32 %v2462, 1.442695
  %v2465 = vpow.pop %v2464
  %v2466 = vmul.f32 %v2463, 1.442695
  %v2467 = vpow.pop %v2466
  %v2468 = vsel %vm402, %v2465, 0.0
  %2469 = vadd.xlane.f32.xlu0 %v2468
  %v2470 = vpop.xlane.xlu0 %2469
  %v2471 = vsel %vm402, %v2467, 0.0
  %2472 = vadd.xlane.f32.xlu0 %v2471
  %v2473 = vpop.xlane.xlu0 %2472
  %v2474 = vrcp.pop %v2470
  %v2475 = vrcp.pop %v2473
  %v2476 = vmul.f32 %v2465, %v2474
  %v2477 = vmul.f32 %v2467, %v2475
  %v2478 = vpack.c.bf16 %v2477, %v2476
  %v2479 = vpack.c.bf16 %v2400, %v2397
  %v2481 = vsel %vm402, %v2478, 0
  %2483 = vmatprep.subr.bf16.mxu0 0
  %2484 = vmatpush1.bf16.msra.mxu0 0
  %2485 = vmatprep.subr.bf16.mxu0 0
  %2486 = vmatpush1.bf16.msra.mxu0 0
  %2487 = vmatprep.subr.bf16.mxu0 0
  %2488 = vmatpush1.bf16.msra.mxu0 0
  %2489 = vmatprep.subr.bf16.mxu0 0
  %2490 = vmatpush1.bf16.msra.mxu0 0
  %2491 = vmatprep.subr.bf16.mxu0 0
  %2492 = vmatpush1.bf16.msra.mxu0 0
  %2493 = vmatprep.subr.bf16.mxu0 0
  %2494 = vmatpush1.bf16.msra.mxu0 0
  %2495 = vmatprep.subr.bf16.mxu0 0
  %2496 = vmatpush1.bf16.msra.mxu0 0
  %2497 = vmatprep.subr.bf16.mxu0 0
  %2498 = vmatpush1.bf16.msra.mxu0 %v2479
  %2499 = vmatprep.subr.bf16.mxu0 0
  %2500 = vmatpush2.bf16.msra.mxu0 0
  %2501 = vmatprep.subr.bf16.mxu0 0
  %2502 = vmatpush2.bf16.msra.mxu0 0
  %2503 = vmatprep.subr.bf16.mxu0 0
  %2504 = vmatpush2.bf16.msra.mxu0 0
  %2505 = vmatprep.subr.bf16.mxu0 0
  %2506 = vmatpush2.bf16.msra.mxu0 0
  %2507 = vmatprep.subr.bf16.mxu0 0
  %2508 = vmatpush2.bf16.msra.mxu0 0
  %2509 = vmatprep.subr.bf16.mxu0 0
  %2510 = vmatpush2.bf16.msra.mxu0 0
  %2511 = vmatprep.subr.bf16.mxu0 0
  %2512 = vmatpush2.bf16.msra.mxu0 0
  %2513 = vmatprep.subr.bf16.mxu0 0
  %2514 = vmatpush2.bf16.msra.mxu0 0
  %2515 = vmatprep.mubr.bf16.mxu0 0
  %2516 = vmatmul.mubr.bf16.gmra.mxu0 %v2481
  %v2517 = vpop.f32.mrf.mxu0
  %v2518 = vadd.f32 0.0, %v2517
  %v2519 = vpop.f32.mrf.mxu0
  %v2520 = vpop.f32.mrf.mxu0
  %v2521 = vadd.f32 0.0, %v2520
  %v2522 = vpop.f32.mrf.mxu0
  %2523 = vdwg.mxu0
  %v2524 = vpack.c.bf16 %v2521, %v2518
  %v2525 = vld [vmem:[%s49] sm:$0xf]
  %v2526 = vld [vmem:[%s49 + $0x4] sm:$0xf]
  %s2527 = scalar_lea.vmem %s37, 32
  %v2528 = vld [vmem:[%s2527] sm:$0xf]
  %v2529 = vld [vmem:[%s2527 + $0x4] sm:$0xf]
  %v2530 = vld [vmem:[%s2527 + $0x8] sm:$0xf]
  %v2531 = vld [vmem:[%s2527 + $0xc] sm:$0xf]
  %v2532 = vld [vmem:[%s2527 + $0x10] sm:$0xf]
  %v2533 = vld [vmem:[%s2527 + $0x14] sm:$0xf]
  %v2534 = vld [vmem:[%s2527 + $0x18] sm:$0xf]
  %v2535 = vld [vmem:[%s2527 + $0x1c] sm:$0xf]
  %s2536 = scalar_lea.vmem %s39, 1
  %v2537 = vld [vmem:[%s2536] sm:$0x1]
  %v2539 = vlaneseq
  %v2540 = vshrl.u32 %v2539, 7
  %v2541 = vsub.s32 0, %v2540
  %v2542 = vrot.slane %v2537, %v2541
  %v2552 = vunpack.c.l.b16 %v2528
  %v2553 = vunpack.c.l.b16 %v2529
  %v2554 = vunpack.c.l.b16 %v2530
  %v2555 = vunpack.c.l.b16 %v2531
  %v2556 = vunpack.c.l.b16 %v2532
  %v2557 = vunpack.c.l.b16 %v2533
  %v2558 = vunpack.c.l.b16 %v2534
  %v2559 = vunpack.c.l.b16 %v2535
  %v2560 = vpack.c.b16 %v2553, %v2552
  %v2561 = vpack.c.b16 %v2555, %v2554
  %v2562 = vpack.c.b16 %v2557, %v2556
  %v2563 = vpack.c.b16 %v2559, %v2558
  %2568 = vmatprep.subr.bf16.mxu0 0
  %2569 = vmatpush1.bf16.msra.mxu0 0
  %2570 = vmatprep.subr.bf16.mxu0 0
  %2571 = vmatpush1.bf16.msra.mxu0 0
  %2572 = vmatprep.subr.bf16.mxu0 0
  %2573 = vmatpush1.bf16.msra.mxu0 0
  %2574 = vmatprep.subr.bf16.mxu0 0
  %2575 = vmatpush1.bf16.msra.mxu0 0
  %2576 = vmatprep.subr.bf16.mxu0 0
  %2577 = vmatpush1.bf16.msra.mxu0 %v2563
  %2578 = vmatprep.subr.bf16.mxu0 0
  %2579 = vmatpush1.bf16.msra.mxu0 %v2562
  %2580 = vmatprep.subr.bf16.mxu0 0
  %2581 = vmatpush1.bf16.msra.mxu0 %v2561
  %2582 = vmatprep.subr.bf16.mxu0 0
  %2583 = vmatpush1.bf16.msra.mxu0 %v2560
  %2584 = vmatprep.subr.bf16.mxu0 0
  %2585 = vmatpush2.bf16.msra.mxu0 0
  %2586 = vmatprep.subr.bf16.mxu0 0
  %2587 = vmatpush2.bf16.msra.mxu0 0
  %2588 = vmatprep.subr.bf16.mxu0 0
  %2589 = vmatpush2.bf16.msra.mxu0 0
  %2590 = vmatprep.subr.bf16.mxu0 0
  %2591 = vmatpush2.bf16.msra.mxu0 0
  %2592 = vmatprep.subr.bf16.mxu0 0
  %2593 = vmatpush2.bf16.msra.mxu0 0
  %2594 = vmatprep.subr.bf16.mxu0 0
  %2595 = vmatpush2.bf16.msra.mxu0 0
  %2596 = vmatprep.subr.bf16.mxu0 0
  %2597 = vmatpush2.bf16.msra.mxu0 0
  %2598 = vmatprep.subr.bf16.mxu0 0
  %2599 = vmatpush2.bf16.msra.mxu0 0
  %2600 = vmatprep.mubr.bf16.mxu0 0
  %2601 = vmatmul.mubr.bf16.gmra.mxu0 %v2200
  %v2602 = vpop.f32.mrf.mxu0
  %v2603 = vadd.f32 %v2542, %v2602
  %v2604 = vpop.f32.mrf.mxu0
  %v2605 = vpop.f32.mrf.mxu0
  %v2606 = vadd.f32 %v2542, %v2605
  %v2607 = vpop.f32.mrf.mxu0
  %2608 = vdwg.mxu0
  %s2609 = scalar_lea.vmem %s41, 32
  %v2610 = vld [vmem:[%s2609] sm:$0xf]
  %v2611 = vld [vmem:[%s2609 + $0x4] sm:$0xf]
  %v2612 = vld [vmem:[%s2609 + $0x8] sm:$0xf]
  %v2613 = vld [vmem:[%s2609 + $0xc] sm:$0xf]
  %v2614 = vld [vmem:[%s2609 + $0x10] sm:$0xf]
  %v2615 = vld [vmem:[%s2609 + $0x14] sm:$0xf]
  %v2616 = vld [vmem:[%s2609 + $0x18] sm:$0xf]
  %v2617 = vld [vmem:[%s2609 + $0x1c] sm:$0xf]
  %s2618 = scalar_lea.vmem %s43, 1
  %v2619 = vld [vmem:[%s2618] sm:$0x1]
  %v2621 = vlaneseq
  %v2622 = vshrl.u32 %v2621, 7
  %v2623 = vsub.s32 0, %v2622
  %v2624 = vrot.slane %v2619, %v2623
  %v2634 = vunpack.c.l.b16 %v2610
  %v2635 = vunpack.c.l.b16 %v2611
  %v2636 = vunpack.c.l.b16 %v2612
  %v2637 = vunpack.c.l.b16 %v2613
  %v2638 = vunpack.c.l.b16 %v2614
  %v2639 = vunpack.c.l.b16 %v2615
  %v2640 = vunpack.c.l.b16 %v2616
  %v2641 = vunpack.c.l.b16 %v2617
  %v2642 = vpack.c.b16 %v2635, %v2634
  %v2643 = vpack.c.b16 %v2637, %v2636
  %v2644 = vpack.c.b16 %v2639, %v2638
  %v2645 = vpack.c.b16 %v2641, %v2640
  %2650 = vmatprep.subr.bf16.mxu0 0
  %2651 = vmatpush1.bf16.msra.mxu0 0
  %2652 = vmatprep.subr.bf16.mxu0 0
  %2653 = vmatpush1.bf16.msra.mxu0 0
  %2654 = vmatprep.subr.bf16.mxu0 0
  %2655 = vmatpush1.bf16.msra.mxu0 0
  %2656 = vmatprep.subr.bf16.mxu0 0
  %2657 = vmatpush1.bf16.msra.mxu0 0
  %2658 = vmatprep.subr.bf16.mxu0 0
  %2659 = vmatpush1.bf16.msra.mxu0 %v2645
  %2660 = vmatprep.subr.bf16.mxu0 0
  %2661 = vmatpush1.bf16.msra.mxu0 %v2644
  %2662 = vmatprep.subr.bf16.mxu0 0
  %2663 = vmatpush1.bf16.msra.mxu0 %v2643
  %2664 = vmatprep.subr.bf16.mxu0 0
  %2665 = vmatpush1.bf16.msra.mxu0 %v2642
  %2666 = vmatprep.subr.bf16.mxu0 0
  %2667 = vmatpush2.bf16.msra.mxu0 0
  %2668 = vmatprep.subr.bf16.mxu0 0
  %2669 = vmatpush2.bf16.msra.mxu0 0
  %2670 = vmatprep.subr.bf16.mxu0 0
  %2671 = vmatpush2.bf16.msra.mxu0 0
  %2672 = vmatprep.subr.bf16.mxu0 0
  %2673 = vmatpush2.bf16.msra.mxu0 0
  %2674 = vmatprep.subr.bf16.mxu0 0
  %2675 = vmatpush2.bf16.msra.mxu0 0
  %2676 = vmatprep.subr.bf16.mxu0 0
  %2677 = vmatpush2.bf16.msra.mxu0 0
  %2678 = vmatprep.subr.bf16.mxu0 0
  %2679 = vmatpush2.bf16.msra.mxu0 0
  %2680 = vmatprep.subr.bf16.mxu0 0
  %2681 = vmatpush2.bf16.msra.mxu0 0
  %2682 = vmatprep.mubr.bf16.mxu0 0
  %2683 = vmatmul.mubr.bf16.gmra.mxu0 %v2200
  %v2684 = vpop.f32.mrf.mxu0
  %v2685 = vadd.f32 %v2624, %v2684
  %v2686 = vpop.f32.mrf.mxu0
  %v2687 = vpop.f32.mrf.mxu0
  %v2688 = vadd.f32 %v2624, %v2687
  %v2689 = vpop.f32.mrf.mxu0
  %2690 = vdwg.mxu0
  %s2691 = scalar_lea.vmem %s45, 32
  %v2692 = vld [vmem:[%s2691] sm:$0xf]
  %v2693 = vld [vmem:[%s2691 + $0x4] sm:$0xf]
  %v2694 = vld [vmem:[%s2691 + $0x8] sm:$0xf]
  %v2695 = vld [vmem:[%s2691 + $0xc] sm:$0xf]
  %v2696 = vld [vmem:[%s2691 + $0x10] sm:$0xf]
  %v2697 = vld [vmem:[%s2691 + $0x14] sm:$0xf]
  %v2698 = vld [vmem:[%s2691 + $0x18] sm:$0xf]
  %v2699 = vld [vmem:[%s2691 + $0x1c] sm:$0xf]
  %s2700 = scalar_lea.vmem %s47, 1
  %v2701 = vld [vmem:[%s2700] sm:$0x1]
  %v2703 = vlaneseq
  %v2704 = vshrl.u32 %v2703, 7
  %v2705 = vsub.s32 0, %v2704
  %v2706 = vrot.slane %v2701, %v2705
  %v2716 = vunpack.c.l.b16 %v2692
  %v2717 = vunpack.c.l.b16 %v2693
  %v2718 = vunpack.c.l.b16 %v2694
  %v2719 = vunpack.c.l.b16 %v2695
  %v2720 = vunpack.c.l.b16 %v2696
  %v2721 = vunpack.c.l.b16 %v2697
  %v2722 = vunpack.c.l.b16 %v2698
  %v2723 = vunpack.c.l.b16 %v2699
  %v2724 = vpack.c.b16 %v2717, %v2716
  %v2725 = vpack.c.b16 %v2719, %v2718
  %v2726 = vpack.c.b16 %v2721, %v2720
  %v2727 = vpack.c.b16 %v2723, %v2722
  %2732 = vmatprep.subr.bf16.mxu0 0
  %2733 = vmatpush1.bf16.msra.mxu0 0
  %2734 = vmatprep.subr.bf16.mxu0 0
  %2735 = vmatpush1.bf16.msra.mxu0 0
  %2736 = vmatprep.subr.bf16.mxu0 0
  %2737 = vmatpush1.bf16.msra.mxu0 0
  %2738 = vmatprep.subr.bf16.mxu0 0
  %2739 = vmatpush1.bf16.msra.mxu0 0
  %2740 = vmatprep.subr.bf16.mxu0 0
  %2741 = vmatpush1.bf16.msra.mxu0 %v2727
  %2742 = vmatprep.subr.bf16.mxu0 0
  %2743 = vmatpush1.bf16.msra.mxu0 %v2726
  %2744 = vmatprep.subr.bf16.mxu0 0
  %2745 = vmatpush1.bf16.msra.mxu0 %v2725
  %2746 = vmatprep.subr.bf16.mxu0 0
  %2747 = vmatpush1.bf16.msra.mxu0 %v2724
  %2748 = vmatprep.subr.bf16.mxu0 0
  %2749 = vmatpush2.bf16.msra.mxu0 0
  %2750 = vmatprep.subr.bf16.mxu0 0
  %2751 = vmatpush2.bf16.msra.mxu0 0
  %2752 = vmatprep.subr.bf16.mxu0 0
  %2753 = vmatpush2.bf16.msra.mxu0 0
  %2754 = vmatprep.subr.bf16.mxu0 0
  %2755 = vmatpush2.bf16.msra.mxu0 0
  %2756 = vmatprep.subr.bf16.mxu0 0
  %2757 = vmatpush2.bf16.msra.mxu0 0
  %2758 = vmatprep.subr.bf16.mxu0 0
  %2759 = vmatpush2.bf16.msra.mxu0 0
  %2760 = vmatprep.subr.bf16.mxu0 0
  %2761 = vmatpush2.bf16.msra.mxu0 0
  %2762 = vmatprep.subr.bf16.mxu0 0
  %2763 = vmatpush2.bf16.msra.mxu0 0
  %2764 = vmatprep.mubr.bf16.mxu0 0
  %2765 = vmatmul.mubr.bf16.gmra.mxu0 %v2200
  %v2766 = vpop.f32.mrf.mxu0
  %v2767 = vadd.f32 %v2706, %v2766
  %v2768 = vpop.f32.mrf.mxu0
  %v2769 = vpop.f32.mrf.mxu0
  %v2770 = vadd.f32 %v2706, %v2769
  %v2771 = vpop.f32.mrf.mxu0
  %2772 = vdwg.mxu0
  %v2773 = vpack.c.bf16 %v2606, %v2603
  %v2774 = vpack.c.bf16 %v2688, %v2685
  %v2776 = vsel %vm402, %v2773, 0
  %v2779 = vsel %vm402, %v2774, 0
  %2781 = vmatprep.subr.bf16.mxu0 0
  %2782 = vmatpush1.bf16.xpose.msra.mxu0 0
  %2783 = vmatprep.subr.bf16.mxu0 0
  %2784 = vmatpush1.bf16.xpose.msra.mxu0 0
  %2785 = vmatprep.subr.bf16.mxu0 0
  %2786 = vmatpush1.bf16.xpose.msra.mxu0 0
  %2787 = vmatprep.subr.bf16.mxu0 0
  %2788 = vmatpush1.bf16.xpose.msra.mxu0 0
  %2789 = vmatprep.subr.bf16.mxu0 0
  %2790 = vmatpush1.bf16.xpose.msra.mxu0 0
  %2791 = vmatprep.subr.bf16.mxu0 0
  %2792 = vmatpush1.bf16.xpose.msra.mxu0 0
  %2793 = vmatprep.subr.bf16.mxu0 0
  %2794 = vmatpush1.bf16.xpose.msra.mxu0 0
  %2795 = vmatprep.subr.bf16.mxu0 0
  %2796 = vmatpush1.bf16.xpose.msra.mxu0 %v2779
  %2797 = vmatprep.subr.bf16.mxu0 0
  %2798 = vmatpush2.bf16.xpose.msra.mxu0 0
  %2799 = vmatprep.subr.bf16.mxu0 0
  %2800 = vmatpush2.bf16.xpose.msra.mxu0 0
  %2801 = vmatprep.subr.bf16.mxu0 0
  %2802 = vmatpush2.bf16.xpose.msra.mxu0 0
  %2803 = vmatprep.subr.bf16.mxu0 0
  %2804 = vmatpush2.bf16.xpose.msra.mxu0 0
  %2805 = vmatprep.subr.bf16.mxu0 0
  %2806 = vmatpush2.bf16.xpose.msra.mxu0 0
  %2807 = vmatprep.subr.bf16.mxu0 0
  %2808 = vmatpush2.bf16.xpose.msra.mxu0 0
  %2809 = vmatprep.subr.bf16.mxu0 0
  %2810 = vmatpush2.bf16.xpose.msra.mxu0 0
  %2811 = vmatprep.subr.bf16.mxu0 0
  %2812 = vmatpush2.bf16.xpose.msra.mxu0 0
  %2813 = vmatprep.mubr.bf16.mxu0 0
  %2814 = vmatmul.mubr.bf16.gmra.mxu0 %v2776
  %v2815 = vpop.f32.mrf.mxu0
  %v2816 = vadd.f32 0.0, %v2815
  %v2817 = vpop.f32.mrf.mxu0
  %v2818 = vpop.f32.mrf.mxu0
  %v2819 = vadd.f32 0.0, %v2818
  %v2820 = vpop.f32.mrf.mxu0
  %2821 = vdwg.mxu0
  %v2822 = vmul.f32 %v2816, 0.25
  %v2823 = vmul.f32 %v2819, 0.25
  %v2824 = vadd.f32 %v2822, %v153
  %v2825 = vadd.f32 %v2823, %v154
  %v2826 = vsel %vm402, %v2824, -inf
  %2827 = vmax.xlane.f32.xlu0 %v2826
  %v2828 = vpop.xlane.xlu0 %2827
  %v2829 = vsel %vm402, %v2825, -inf
  %2830 = vmax.xlane.f32.xlu0 %v2829
  %v2831 = vpop.xlane.xlu0 %2830
  %v2832 = vsub.f32 %v2824, %v2828
  %v2833 = vsub.f32 %v2825, %v2831
  %v2834 = vmul.f32 %v2832, 1.442695
  %v2835 = vpow.pop %v2834
  %v2836 = vmul.f32 %v2833, 1.442695
  %v2837 = vpow.pop %v2836
  %v2838 = vsel %vm402, %v2835, 0.0
  %2839 = vadd.xlane.f32.xlu0 %v2838
  %v2840 = vpop.xlane.xlu0 %2839
  %v2841 = vsel %vm402, %v2837, 0.0
  %2842 = vadd.xlane.f32.xlu0 %v2841
  %v2843 = vpop.xlane.xlu0 %2842
  %v2844 = vrcp.pop %v2840
  %v2845 = vrcp.pop %v2843
  %v2846 = vmul.f32 %v2835, %v2844
  %v2847 = vmul.f32 %v2837, %v2845
  %v2848 = vpack.c.bf16 %v2847, %v2846
  %v2849 = vpack.c.bf16 %v2770, %v2767
  %v2851 = vsel %vm402, %v2848, 0
  %2853 = vmatprep.subr.bf16.mxu0 0
  %2854 = vmatpush1.bf16.msra.mxu0 0
  %2855 = vmatprep.subr.bf16.mxu0 0
  %2856 = vmatpush1.bf16.msra.mxu0 0
  %2857 = vmatprep.subr.bf16.mxu0 0
  %2858 = vmatpush1.bf16.msra.mxu0 0
  %2859 = vmatprep.subr.bf16.mxu0 0
  %2860 = vmatpush1.bf16.msra.mxu0 0
  %2861 = vmatprep.subr.bf16.mxu0 0
  %2862 = vmatpush1.bf16.msra.mxu0 0
  %2863 = vmatprep.subr.bf16.mxu0 0
  %2864 = vmatpush1.bf16.msra.mxu0 0
  %2865 = vmatprep.subr.bf16.mxu0 0
  %2866 = vmatpush1.bf16.msra.mxu0 0
  %2867 = vmatprep.subr.bf16.mxu0 0
  %2868 = vmatpush1.bf16.msra.mxu0 %v2849
  %2869 = vmatprep.subr.bf16.mxu0 0
  %2870 = vmatpush2.bf16.msra.mxu0 0
  %2871 = vmatprep.subr.bf16.mxu0 0
  %2872 = vmatpush2.bf16.msra.mxu0 0
  %2873 = vmatprep.subr.bf16.mxu0 0
  %2874 = vmatpush2.bf16.msra.mxu0 0
  %2875 = vmatprep.subr.bf16.mxu0 0
  %2876 = vmatpush2.bf16.msra.mxu0 0
  %2877 = vmatprep.subr.bf16.mxu0 0
  %2878 = vmatpush2.bf16.msra.mxu0 0
  %2879 = vmatprep.subr.bf16.mxu0 0
  %2880 = vmatpush2.bf16.msra.mxu0 0
  %2881 = vmatprep.subr.bf16.mxu0 0
  %2882 = vmatpush2.bf16.msra.mxu0 0
  %2883 = vmatprep.subr.bf16.mxu0 0
  %2884 = vmatpush2.bf16.msra.mxu0 0
  %2885 = vmatprep.mubr.bf16.mxu0 0
  %2886 = vmatmul.mubr.bf16.gmra.mxu0 %v2851
  %v2887 = vpop.f32.mrf.mxu0
  %v2888 = vadd.f32 0.0, %v2887
  %v2889 = vpop.f32.mrf.mxu0
  %v2890 = vpop.f32.mrf.mxu0
  %v2891 = vadd.f32 0.0, %v2890
  %v2892 = vpop.f32.mrf.mxu0
  %2893 = vdwg.mxu0
  %v2894 = vpack.c.bf16 %v2891, %v2888
  %s2895 = scalar_lea.vmem %s49, 8
  %v2896 = vld [vmem:[%s2895] sm:$0xf]
  %v2897 = vld [vmem:[%s2895 + $0x4] sm:$0xf]
  %v2900 = vunpack.c.l.b16 %v2896
  %v2901 = vunpack.c.l.b16 %v2897
  %v2902 = vpack.c.b16 %v2901, %v2900
  %v2905 = vsel %vm402, %v2894, 0
  %2907 = vmatprep.subr.bf16.mxu0 0
  %2908 = vmatpush1.bf16.msra.mxu0 0
  %2909 = vmatprep.subr.bf16.mxu0 0
  %2910 = vmatpush1.bf16.msra.mxu0 0
  %2911 = vmatprep.subr.bf16.mxu0 0
  %2912 = vmatpush1.bf16.msra.mxu0 0
  %2913 = vmatprep.subr.bf16.mxu0 0
  %2914 = vmatpush1.bf16.msra.mxu0 0
  %2915 = vmatprep.subr.bf16.mxu0 0
  %2916 = vmatpush1.bf16.msra.mxu0 0
  %2917 = vmatprep.subr.bf16.mxu0 0
  %2918 = vmatpush1.bf16.msra.mxu0 0
  %2919 = vmatprep.subr.bf16.mxu0 0
  %2920 = vmatpush1.bf16.msra.mxu0 0
  %2921 = vmatprep.subr.bf16.mxu0 0
  %2922 = vmatpush1.bf16.msra.mxu0 %v2902
  %2923 = vmatprep.subr.bf16.mxu0 0
  %2924 = vmatpush2.bf16.msra.mxu0 0
  %2925 = vmatprep.subr.bf16.mxu0 0
  %2926 = vmatpush2.bf16.msra.mxu0 0
  %2927 = vmatprep.subr.bf16.mxu0 0
  %2928 = vmatpush2.bf16.msra.mxu0 0
  %2929 = vmatprep.subr.bf16.mxu0 0
  %2930 = vmatpush2.bf16.msra.mxu0 0
  %2931 = vmatprep.subr.bf16.mxu0 0
  %2932 = vmatpush2.bf16.msra.mxu0 0
  %2933 = vmatprep.subr.bf16.mxu0 0
  %2934 = vmatpush2.bf16.msra.mxu0 0
  %2935 = vmatprep.subr.bf16.mxu0 0
  %2936 = vmatpush2.bf16.msra.mxu0 0
  %2937 = vmatprep.subr.bf16.mxu0 0
  %2938 = vmatpush2.bf16.msra.mxu0 0
  %2939 = vmatprep.mubr.bf16.mxu0 0
  %2940 = vmatmul.mubr.bf16.gmra.mxu0 %v2905
  %v2941 = vpop.f32.mrf.mxu0
  %v2942 = vadd.f32 0.0, %v2941
  %v2943 = vpop.f32.mrf.mxu0
  %v2944 = vpop.f32.mrf.mxu0
  %v2945 = vadd.f32 0.0, %v2944
  %v2946 = vpop.f32.mrf.mxu0
  %2947 = vdwg.mxu0
  %v2950 = vunpack.c.l.b16 %v2525
  %v2951 = vunpack.c.l.b16 %v2526
  %v2952 = vpack.c.b16 %v2951, %v2950
  %v2955 = vsel %vm402, %v2524, 0
  %2957 = vmatprep.subr.bf16.mxu0 0
  %2958 = vmatpush1.bf16.msra.mxu0 0
  %2959 = vmatprep.subr.bf16.mxu0 0
  %2960 = vmatpush1.bf16.msra.mxu0 0
  %2961 = vmatprep.subr.bf16.mxu0 0
  %2962 = vmatpush1.bf16.msra.mxu0 0
  %2963 = vmatprep.subr.bf16.mxu0 0
  %2964 = vmatpush1.bf16.msra.mxu0 0
  %2965 = vmatprep.subr.bf16.mxu0 0
  %2966 = vmatpush1.bf16.msra.mxu0 0
  %2967 = vmatprep.subr.bf16.mxu0 0
  %2968 = vmatpush1.bf16.msra.mxu0 0
  %2969 = vmatprep.subr.bf16.mxu0 0
  %2970 = vmatpush1.bf16.msra.mxu0 0
  %2971 = vmatprep.subr.bf16.mxu0 0
  %2972 = vmatpush1.bf16.msra.mxu0 %v2952
  %2973 = vmatprep.subr.bf16.mxu0 0
  %2974 = vmatpush2.bf16.msra.mxu0 0
  %2975 = vmatprep.subr.bf16.mxu0 0
  %2976 = vmatpush2.bf16.msra.mxu0 0
  %2977 = vmatprep.subr.bf16.mxu0 0
  %2978 = vmatpush2.bf16.msra.mxu0 0
  %2979 = vmatprep.subr.bf16.mxu0 0
  %2980 = vmatpush2.bf16.msra.mxu0 0
  %2981 = vmatprep.subr.bf16.mxu0 0
  %2982 = vmatpush2.bf16.msra.mxu0 0
  %2983 = vmatprep.subr.bf16.mxu0 0
  %2984 = vmatpush2.bf16.msra.mxu0 0
  %2985 = vmatprep.subr.bf16.mxu0 0
  %2986 = vmatpush2.bf16.msra.mxu0 0
  %2987 = vmatprep.subr.bf16.mxu0 0
  %2988 = vmatpush2.bf16.msra.mxu0 0
  %2989 = vmatprep.mubr.bf16.mxu0 0
  %2990 = vmatmul.mubr.bf16.gmra.mxu0 %v2955
  %v2991 = vpop.f32.mrf.mxu0
  %v2992 = vadd.f32 %v2942, %v2991
  %v2993 = vpop.f32.mrf.mxu0
  %v2994 = vpop.f32.mrf.mxu0
  %v2995 = vadd.f32 %v2945, %v2994
  %v2996 = vpop.f32.mrf.mxu0
  %2997 = vdwg.mxu0
  %s2998 = scalar_lea.vmem %s37, 64
  %v2999 = vld [vmem:[%s2998] sm:$0xf]
  %v3000 = vld [vmem:[%s2998 + $0x4] sm:$0xf]
  %v3001 = vld [vmem:[%s2998 + $0x8] sm:$0xf]
  %v3002 = vld [vmem:[%s2998 + $0xc] sm:$0xf]
  %v3003 = vld [vmem:[%s2998 + $0x10] sm:$0xf]
  %v3004 = vld [vmem:[%s2998 + $0x14] sm:$0xf]
  %v3005 = vld [vmem:[%s2998 + $0x18] sm:$0xf]
  %v3006 = vld [vmem:[%s2998 + $0x1c] sm:$0xf]
  %s3007 = scalar_lea.vmem %s39, 2
  %v3008 = vld [vmem:[%s3007] sm:$0x1]
  %v3010 = vlaneseq
  %v3011 = vshrl.u32 %v3010, 7
  %v3012 = vsub.s32 0, %v3011
  %v3013 = vrot.slane %v3008, %v3012
  %v3023 = vunpack.c.l.b16 %v2999
  %v3024 = vunpack.c.l.b16 %v3000
  %v3025 = vunpack.c.l.b16 %v3001
  %v3026 = vunpack.c.l.b16 %v3002
  %v3027 = vunpack.c.l.b16 %v3003
  %v3028 = vunpack.c.l.b16 %v3004
  %v3029 = vunpack.c.l.b16 %v3005
  %v3030 = vunpack.c.l.b16 %v3006
  %v3031 = vpack.c.b16 %v3024, %v3023
  %v3032 = vpack.c.b16 %v3026, %v3025
  %v3033 = vpack.c.b16 %v3028, %v3027
  %v3034 = vpack.c.b16 %v3030, %v3029
  %3039 = vmatprep.subr.bf16.mxu0 0
  %3040 = vmatpush1.bf16.msra.mxu0 0
  %3041 = vmatprep.subr.bf16.mxu0 0
  %3042 = vmatpush1.bf16.msra.mxu0 0
  %3043 = vmatprep.subr.bf16.mxu0 0
  %3044 = vmatpush1.bf16.msra.mxu0 0
  %3045 = vmatprep.subr.bf16.mxu0 0
  %3046 = vmatpush1.bf16.msra.mxu0 0
  %3047 = vmatprep.subr.bf16.mxu0 0
  %3048 = vmatpush1.bf16.msra.mxu0 %v3034
  %3049 = vmatprep.subr.bf16.mxu0 0
  %3050 = vmatpush1.bf16.msra.mxu0 %v3033
  %3051 = vmatprep.subr.bf16.mxu0 0
  %3052 = vmatpush1.bf16.msra.mxu0 %v3032
  %3053 = vmatprep.subr.bf16.mxu0 0
  %3054 = vmatpush1.bf16.msra.mxu0 %v3031
  %3055 = vmatprep.subr.bf16.mxu0 0
  %3056 = vmatpush2.bf16.msra.mxu0 0
  %3057 = vmatprep.subr.bf16.mxu0 0
  %3058 = vmatpush2.bf16.msra.mxu0 0
  %3059 = vmatprep.subr.bf16.mxu0 0
  %3060 = vmatpush2.bf16.msra.mxu0 0
  %3061 = vmatprep.subr.bf16.mxu0 0
  %3062 = vmatpush2.bf16.msra.mxu0 0
  %3063 = vmatprep.subr.bf16.mxu0 0
  %3064 = vmatpush2.bf16.msra.mxu0 0
  %3065 = vmatprep.subr.bf16.mxu0 0
  %3066 = vmatpush2.bf16.msra.mxu0 0
  %3067 = vmatprep.subr.bf16.mxu0 0
  %3068 = vmatpush2.bf16.msra.mxu0 0
  %3069 = vmatprep.subr.bf16.mxu0 0
  %3070 = vmatpush2.bf16.msra.mxu0 0
  %3071 = vmatprep.mubr.bf16.mxu0 0
  %3072 = vmatmul.mubr.bf16.gmra.mxu0 %v2200
  %v3073 = vpop.f32.mrf.mxu0
  %v3074 = vadd.f32 %v3013, %v3073
  %v3075 = vpop.f32.mrf.mxu0
  %v3076 = vpop.f32.mrf.mxu0
  %v3077 = vadd.f32 %v3013, %v3076
  %v3078 = vpop.f32.mrf.mxu0
  %3079 = vdwg.mxu0
  %s3080 = scalar_lea.vmem %s41, 64
  %v3081 = vld [vmem:[%s3080] sm:$0xf]
  %v3082 = vld [vmem:[%s3080 + $0x4] sm:$0xf]
  %v3083 = vld [vmem:[%s3080 + $0x8] sm:$0xf]
  %v3084 = vld [vmem:[%s3080 + $0xc] sm:$0xf]
  %v3085 = vld [vmem:[%s3080 + $0x10] sm:$0xf]
  %v3086 = vld [vmem:[%s3080 + $0x14] sm:$0xf]
  %v3087 = vld [vmem:[%s3080 + $0x18] sm:$0xf]
  %v3088 = vld [vmem:[%s3080 + $0x1c] sm:$0xf]
  %s3089 = scalar_lea.vmem %s43, 2
  %v3090 = vld [vmem:[%s3089] sm:$0x1]
  %v3092 = vlaneseq
  %v3093 = vshrl.u32 %v3092, 7
  %v3094 = vsub.s32 0, %v3093
  %v3095 = vrot.slane %v3090, %v3094
  %v3105 = vunpack.c.l.b16 %v3081
  %v3106 = vunpack.c.l.b16 %v3082
  %v3107 = vunpack.c.l.b16 %v3083
  %v3108 = vunpack.c.l.b16 %v3084
  %v3109 = vunpack.c.l.b16 %v3085
  %v3110 = vunpack.c.l.b16 %v3086
  %v3111 = vunpack.c.l.b16 %v3087
  %v3112 = vunpack.c.l.b16 %v3088
  %v3113 = vpack.c.b16 %v3106, %v3105
  %v3114 = vpack.c.b16 %v3108, %v3107
  %v3115 = vpack.c.b16 %v3110, %v3109
  %v3116 = vpack.c.b16 %v3112, %v3111
  %3121 = vmatprep.subr.bf16.mxu0 0
  %3122 = vmatpush1.bf16.msra.mxu0 0
  %3123 = vmatprep.subr.bf16.mxu0 0
  %3124 = vmatpush1.bf16.msra.mxu0 0
  %3125 = vmatprep.subr.bf16.mxu0 0
  %3126 = vmatpush1.bf16.msra.mxu0 0
  %3127 = vmatprep.subr.bf16.mxu0 0
  %3128 = vmatpush1.bf16.msra.mxu0 0
  %3129 = vmatprep.subr.bf16.mxu0 0
  %3130 = vmatpush1.bf16.msra.mxu0 %v3116
  %3131 = vmatprep.subr.bf16.mxu0 0
  %3132 = vmatpush1.bf16.msra.mxu0 %v3115
  %3133 = vmatprep.subr.bf16.mxu0 0
  %3134 = vmatpush1.bf16.msra.mxu0 %v3114
  %3135 = vmatprep.subr.bf16.mxu0 0
  %3136 = vmatpush1.bf16.msra.mxu0 %v3113
  %3137 = vmatprep.subr.bf16.mxu0 0
  %3138 = vmatpush2.bf16.msra.mxu0 0
  %3139 = vmatprep.subr.bf16.mxu0 0
  %3140 = vmatpush2.bf16.msra.mxu0 0
  %3141 = vmatprep.subr.bf16.mxu0 0
  %3142 = vmatpush2.bf16.msra.mxu0 0
  %3143 = vmatprep.subr.bf16.mxu0 0
  %3144 = vmatpush2.bf16.msra.mxu0 0
  %3145 = vmatprep.subr.bf16.mxu0 0
  %3146 = vmatpush2.bf16.msra.mxu0 0
  %3147 = vmatprep.subr.bf16.mxu0 0
  %3148 = vmatpush2.bf16.msra.mxu0 0
  %3149 = vmatprep.subr.bf16.mxu0 0
  %3150 = vmatpush2.bf16.msra.mxu0 0
  %3151 = vmatprep.subr.bf16.mxu0 0
  %3152 = vmatpush2.bf16.msra.mxu0 0
  %3153 = vmatprep.mubr.bf16.mxu0 0
  %3154 = vmatmul.mubr.bf16.gmra.mxu0 %v2200
  %v3155 = vpop.f32.mrf.mxu0
  %v3156 = vadd.f32 %v3095, %v3155
  %v3157 = vpop.f32.mrf.mxu0
  %v3158 = vpop.f32.mrf.mxu0
  %v3159 = vadd.f32 %v3095, %v3158
  %v3160 = vpop.f32.mrf.mxu0
  %3161 = vdwg.mxu0
  %s3162 = scalar_lea.vmem %s45, 64
  %v3163 = vld [vmem:[%s3162] sm:$0xf]
  %v3164 = vld [vmem:[%s3162 + $0x4] sm:$0xf]
  %v3165 = vld [vmem:[%s3162 + $0x8] sm:$0xf]
  %v3166 = vld [vmem:[%s3162 + $0xc] sm:$0xf]
  %v3167 = vld [vmem:[%s3162 + $0x10] sm:$0xf]
  %v3168 = vld [vmem:[%s3162 + $0x14] sm:$0xf]
  %v3169 = vld [vmem:[%s3162 + $0x18] sm:$0xf]
  %v3170 = vld [vmem:[%s3162 + $0x1c] sm:$0xf]
  %s3171 = scalar_lea.vmem %s47, 2
  %v3172 = vld [vmem:[%s3171] sm:$0x1]
  %v3174 = vlaneseq
  %v3175 = vshrl.u32 %v3174, 7
  %v3176 = vsub.s32 0, %v3175
  %v3177 = vrot.slane %v3172, %v3176
  %v3187 = vunpack.c.l.b16 %v3163
  %v3188 = vunpack.c.l.b16 %v3164
  %v3189 = vunpack.c.l.b16 %v3165
  %v3190 = vunpack.c.l.b16 %v3166
  %v3191 = vunpack.c.l.b16 %v3167
  %v3192 = vunpack.c.l.b16 %v3168
  %v3193 = vunpack.c.l.b16 %v3169
  %v3194 = vunpack.c.l.b16 %v3170
  %v3195 = vpack.c.b16 %v3188, %v3187
  %v3196 = vpack.c.b16 %v3190, %v3189
  %v3197 = vpack.c.b16 %v3192, %v3191
  %v3198 = vpack.c.b16 %v3194, %v3193
  %3203 = vmatprep.subr.bf16.mxu0 0
  %3204 = vmatpush1.bf16.msra.mxu0 0
  %3205 = vmatprep.subr.bf16.mxu0 0
  %3206 = vmatpush1.bf16.msra.mxu0 0
  %3207 = vmatprep.subr.bf16.mxu0 0
  %3208 = vmatpush1.bf16.msra.mxu0 0
  %3209 = vmatprep.subr.bf16.mxu0 0
  %3210 = vmatpush1.bf16.msra.mxu0 0
  %3211 = vmatprep.subr.bf16.mxu0 0
  %3212 = vmatpush1.bf16.msra.mxu0 %v3198
  %3213 = vmatprep.subr.bf16.mxu0 0
  %3214 = vmatpush1.bf16.msra.mxu0 %v3197
  %3215 = vmatprep.subr.bf16.mxu0 0
  %3216 = vmatpush1.bf16.msra.mxu0 %v3196
  %3217 = vmatprep.subr.bf16.mxu0 0
  %3218 = vmatpush1.bf16.msra.mxu0 %v3195
  %3219 = vmatprep.subr.bf16.mxu0 0
  %3220 = vmatpush2.bf16.msra.mxu0 0
  %3221 = vmatprep.subr.bf16.mxu0 0
  %3222 = vmatpush2.bf16.msra.mxu0 0
  %3223 = vmatprep.subr.bf16.mxu0 0
  %3224 = vmatpush2.bf16.msra.mxu0 0
  %3225 = vmatprep.subr.bf16.mxu0 0
  %3226 = vmatpush2.bf16.msra.mxu0 0
  %3227 = vmatprep.subr.bf16.mxu0 0
  %3228 = vmatpush2.bf16.msra.mxu0 0
  %3229 = vmatprep.subr.bf16.mxu0 0
  %3230 = vmatpush2.bf16.msra.mxu0 0
  %3231 = vmatprep.subr.bf16.mxu0 0
  %3232 = vmatpush2.bf16.msra.mxu0 0
  %3233 = vmatprep.subr.bf16.mxu0 0
  %3234 = vmatpush2.bf16.msra.mxu0 0
  %3235 = vmatprep.mubr.bf16.mxu0 0
  %3236 = vmatmul.mubr.bf16.gmra.mxu0 %v2200
  %v3237 = vpop.f32.mrf.mxu0
  %v3238 = vadd.f32 %v3177, %v3237
  %v3239 = vpop.f32.mrf.mxu0
  %v3240 = vpop.f32.mrf.mxu0
  %v3241 = vadd.f32 %v3177, %v3240
  %v3242 = vpop.f32.mrf.mxu0
  %3243 = vdwg.mxu0
  %v3244 = vpack.c.bf16 %v3077, %v3074
  %v3245 = vpack.c.bf16 %v3159, %v3156
  %v3247 = vsel %vm402, %v3244, 0
  %v3250 = vsel %vm402, %v3245, 0
  %3252 = vmatprep.subr.bf16.mxu0 0
  %3253 = vmatpush1.bf16.xpose.msra.mxu0 0
  %3254 = vmatprep.subr.bf16.mxu0 0
  %3255 = vmatpush1.bf16.xpose.msra.mxu0 0
  %3256 = vmatprep.subr.bf16.mxu0 0
  %3257 = vmatpush1.bf16.xpose.msra.mxu0 0
  %3258 = vmatprep.subr.bf16.mxu0 0
  %3259 = vmatpush1.bf16.xpose.msra.mxu0 0
  %3260 = vmatprep.subr.bf16.mxu0 0
  %3261 = vmatpush1.bf16.xpose.msra.mxu0 0
  %3262 = vmatprep.subr.bf16.mxu0 0
  %3263 = vmatpush1.bf16.xpose.msra.mxu0 0
  %3264 = vmatprep.subr.bf16.mxu0 0
  %3265 = vmatpush1.bf16.xpose.msra.mxu0 0
  %3266 = vmatprep.subr.bf16.mxu0 0
  %3267 = vmatpush1.bf16.xpose.msra.mxu0 %v3250
  %3268 = vmatprep.subr.bf16.mxu0 0
  %3269 = vmatpush2.bf16.xpose.msra.mxu0 0
  %3270 = vmatprep.subr.bf16.mxu0 0
  %3271 = vmatpush2.bf16.xpose.msra.mxu0 0
  %3272 = vmatprep.subr.bf16.mxu0 0
  %3273 = vmatpush2.bf16.xpose.msra.mxu0 0
  %3274 = vmatprep.subr.bf16.mxu0 0
  %3275 = vmatpush2.bf16.xpose.msra.mxu0 0
  %3276 = vmatprep.subr.bf16.mxu0 0
  %3277 = vmatpush2.bf16.xpose.msra.mxu0 0
  %3278 = vmatprep.subr.bf16.mxu0 0
  %3279 = vmatpush2.bf16.xpose.msra.mxu0 0
  %3280 = vmatprep.subr.bf16.mxu0 0
  %3281 = vmatpush2.bf16.xpose.msra.mxu0 0
  %3282 = vmatprep.subr.bf16.mxu0 0
  %3283 = vmatpush2.bf16.xpose.msra.mxu0 0
  %3284 = vmatprep.mubr.bf16.mxu0 0
  %3285 = vmatmul.mubr.bf16.gmra.mxu0 %v3247
  %v3286 = vpop.f32.mrf.mxu0
  %v3287 = vadd.f32 0.0, %v3286
  %v3288 = vpop.f32.mrf.mxu0
  %v3289 = vpop.f32.mrf.mxu0
  %v3290 = vadd.f32 0.0, %v3289
  %v3291 = vpop.f32.mrf.mxu0
  %3292 = vdwg.mxu0
  %v3293 = vmul.f32 %v3287, 0.25
  %v3294 = vmul.f32 %v3290, 0.25
  %v3295 = vadd.f32 %v3293, %v153
  %v3296 = vadd.f32 %v3294, %v154
  %v3297 = vsel %vm402, %v3295, -inf
  %3298 = vmax.xlane.f32.xlu0 %v3297
  %v3299 = vpop.xlane.xlu0 %3298
  %v3300 = vsel %vm402, %v3296, -inf
  %3301 = vmax.xlane.f32.xlu0 %v3300
  %v3302 = vpop.xlane.xlu0 %3301
  %v3303 = vsub.f32 %v3295, %v3299
  %v3304 = vsub.f32 %v3296, %v3302
  %v3305 = vmul.f32 %v3303, 1.442695
  %v3306 = vpow.pop %v3305
  %v3307 = vmul.f32 %v3304, 1.442695
  %v3308 = vpow.pop %v3307
  %v3309 = vsel %vm402, %v3306, 0.0
  %3310 = vadd.xlane.f32.xlu0 %v3309
  %v3311 = vpop.xlane.xlu0 %3310
  %v3312 = vsel %vm402, %v3308, 0.0
  %3313 = vadd.xlane.f32.xlu0 %v3312
  %v3314 = vpop.xlane.xlu0 %3313
  %v3315 = vrcp.pop %v3311
  %v3316 = vrcp.pop %v3314
  %v3317 = vmul.f32 %v3306, %v3315
  %v3318 = vmul.f32 %v3308, %v3316
  %v3319 = vpack.c.bf16 %v3318, %v3317
  %v3320 = vpack.c.bf16 %v3241, %v3238
  %v3322 = vsel %vm402, %v3319, 0
  %3324 = vmatprep.subr.bf16.mxu0 0
  %3325 = vmatpush1.bf16.msra.mxu0 0
  %3326 = vmatprep.subr.bf16.mxu0 0
  %3327 = vmatpush1.bf16.msra.mxu0 0
  %3328 = vmatprep.subr.bf16.mxu0 0
  %3329 = vmatpush1.bf16.msra.mxu0 0
  %3330 = vmatprep.subr.bf16.mxu0 0
  %3331 = vmatpush1.bf16.msra.mxu0 0
  %3332 = vmatprep.subr.bf16.mxu0 0
  %3333 = vmatpush1.bf16.msra.mxu0 0
  %3334 = vmatprep.subr.bf16.mxu0 0
  %3335 = vmatpush1.bf16.msra.mxu0 0
  %3336 = vmatprep.subr.bf16.mxu0 0
  %3337 = vmatpush1.bf16.msra.mxu0 0
  %3338 = vmatprep.subr.bf16.mxu0 0
  %3339 = vmatpush1.bf16.msra.mxu0 %v3320
  %3340 = vmatprep.subr.bf16.mxu0 0
  %3341 = vmatpush2.bf16.msra.mxu0 0
  %3342 = vmatprep.subr.bf16.mxu0 0
  %3343 = vmatpush2.bf16.msra.mxu0 0
  %3344 = vmatprep.subr.bf16.mxu0 0
  %3345 = vmatpush2.bf16.msra.mxu0 0
  %3346 = vmatprep.subr.bf16.mxu0 0
  %3347 = vmatpush2.bf16.msra.mxu0 0
  %3348 = vmatprep.subr.bf16.mxu0 0
  %3349 = vmatpush2.bf16.msra.mxu0 0
  %3350 = vmatprep.subr.bf16.mxu0 0
  %3351 = vmatpush2.bf16.msra.mxu0 0
  %3352 = vmatprep.subr.bf16.mxu0 0
  %3353 = vmatpush2.bf16.msra.mxu0 0
  %3354 = vmatprep.subr.bf16.mxu0 0
  %3355 = vmatpush2.bf16.msra.mxu0 0
  %3356 = vmatprep.mubr.bf16.mxu0 0
  %3357 = vmatmul.mubr.bf16.gmra.mxu0 %v3322
  %v3358 = vpop.f32.mrf.mxu0
  %v3359 = vadd.f32 0.0, %v3358
  %v3360 = vpop.f32.mrf.mxu0
  %v3361 = vpop.f32.mrf.mxu0
  %v3362 = vadd.f32 0.0, %v3361
  %v3363 = vpop.f32.mrf.mxu0
  %3364 = vdwg.mxu0
  %v3365 = vpack.c.bf16 %v3362, %v3359
  %s3366 = scalar_lea.vmem %s49, 16
  %v3367 = vld [vmem:[%s3366] sm:$0xf]
  %v3368 = vld [vmem:[%s3366 + $0x4] sm:$0xf]
  %v3371 = vunpack.c.l.b16 %v3367
  %v3372 = vunpack.c.l.b16 %v3368
  %v3373 = vpack.c.b16 %v3372, %v3371
  %v3376 = vsel %vm402, %v3365, 0
  %3378 = vmatprep.subr.bf16.mxu0 0
  %3379 = vmatpush1.bf16.msra.mxu0 0
  %3380 = vmatprep.subr.bf16.mxu0 0
  %3381 = vmatpush1.bf16.msra.mxu0 0
  %3382 = vmatprep.subr.bf16.mxu0 0
  %3383 = vmatpush1.bf16.msra.mxu0 0
  %3384 = vmatprep.subr.bf16.mxu0 0
  %3385 = vmatpush1.bf16.msra.mxu0 0
  %3386 = vmatprep.subr.bf16.mxu0 0
  %3387 = vmatpush1.bf16.msra.mxu0 0
  %3388 = vmatprep.subr.bf16.mxu0 0
  %3389 = vmatpush1.bf16.msra.mxu0 0
  %3390 = vmatprep.subr.bf16.mxu0 0
  %3391 = vmatpush1.bf16.msra.mxu0 0
  %3392 = vmatprep.subr.bf16.mxu0 0
  %3393 = vmatpush1.bf16.msra.mxu0 %v3373
  %3394 = vmatprep.subr.bf16.mxu0 0
  %3395 = vmatpush2.bf16.msra.mxu0 0
  %3396 = vmatprep.subr.bf16.mxu0 0
  %3397 = vmatpush2.bf16.msra.mxu0 0
  %3398 = vmatprep.subr.bf16.mxu0 0
  %3399 = vmatpush2.bf16.msra.mxu0 0
  %3400 = vmatprep.subr.bf16.mxu0 0
  %3401 = vmatpush2.bf16.msra.mxu0 0
  %3402 = vmatprep.subr.bf16.mxu0 0
  %3403 = vmatpush2.bf16.msra.mxu0 0
  %3404 = vmatprep.subr.bf16.mxu0 0
  %3405 = vmatpush2.bf16.msra.mxu0 0
  %3406 = vmatprep.subr.bf16.mxu0 0
  %3407 = vmatpush2.bf16.msra.mxu0 0
  %3408 = vmatprep.subr.bf16.mxu0 0
  %3409 = vmatpush2.bf16.msra.mxu0 0
  %3410 = vmatprep.mubr.bf16.mxu0 0
  %3411 = vmatmul.mubr.bf16.gmra.mxu0 %v3376
  %v3412 = vpop.f32.mrf.mxu0
  %v3413 = vadd.f32 0.0, %v3412
  %v3414 = vpop.f32.mrf.mxu0
  %v3415 = vpop.f32.mrf.mxu0
  %v3416 = vadd.f32 0.0, %v3415
  %v3417 = vpop.f32.mrf.mxu0
  %3418 = vdwg.mxu0
  %v3419 = vadd.f32 %v2992, %v3413
  %v3420 = vadd.f32 %v2995, %v3416
  %s3421 = scalar_lea.vmem %s37, 96
  %v3422 = vld [vmem:[%s3421] sm:$0xf]
  %v3423 = vld [vmem:[%s3421 + $0x4] sm:$0xf]
  %v3424 = vld [vmem:[%s3421 + $0x8] sm:$0xf]
  %v3425 = vld [vmem:[%s3421 + $0xc] sm:$0xf]
  %v3426 = vld [vmem:[%s3421 + $0x10] sm:$0xf]
  %v3427 = vld [vmem:[%s3421 + $0x14] sm:$0xf]
  %v3428 = vld [vmem:[%s3421 + $0x18] sm:$0xf]
  %v3429 = vld [vmem:[%s3421 + $0x1c] sm:$0xf]
  %s3430 = scalar_lea.vmem %s39, 3
  %v3431 = vld [vmem:[%s3430] sm:$0x1]
  %v3433 = vlaneseq
  %v3434 = vshrl.u32 %v3433, 7
  %v3435 = vsub.s32 0, %v3434
  %v3436 = vrot.slane %v3431, %v3435
  %v3446 = vunpack.c.l.b16 %v3422
  %v3447 = vunpack.c.l.b16 %v3423
  %v3448 = vunpack.c.l.b16 %v3424
  %v3449 = vunpack.c.l.b16 %v3425
  %v3450 = vunpack.c.l.b16 %v3426
  %v3451 = vunpack.c.l.b16 %v3427
  %v3452 = vunpack.c.l.b16 %v3428
  %v3453 = vunpack.c.l.b16 %v3429
  %v3454 = vpack.c.b16 %v3447, %v3446
  %v3455 = vpack.c.b16 %v3449, %v3448
  %v3456 = vpack.c.b16 %v3451, %v3450
  %v3457 = vpack.c.b16 %v3453, %v3452
  %3462 = vmatprep.subr.bf16.mxu0 0
  %3463 = vmatpush1.bf16.msra.mxu0 0
  %3464 = vmatprep.subr.bf16.mxu0 0
  %3465 = vmatpush1.bf16.msra.mxu0 0
  %3466 = vmatprep.subr.bf16.mxu0 0
  %3467 = vmatpush1.bf16.msra.mxu0 0
  %3468 = vmatprep.subr.bf16.mxu0 0
  %3469 = vmatpush1.bf16.msra.mxu0 0
  %3470 = vmatprep.subr.bf16.mxu0 0
  %3471 = vmatpush1.bf16.msra.mxu0 %v3457
  %3472 = vmatprep.subr.bf16.mxu0 0
  %3473 = vmatpush1.bf16.msra.mxu0 %v3456
  %3474 = vmatprep.subr.bf16.mxu0 0
  %3475 = vmatpush1.bf16.msra.mxu0 %v3455
  %3476 = vmatprep.subr.bf16.mxu0 0
  %3477 = vmatpush1.bf16.msra.mxu0 %v3454
  %3478 = vmatprep.subr.bf16.mxu0 0
  %3479 = vmatpush2.bf16.msra.mxu0 0
  %3480 = vmatprep.subr.bf16.mxu0 0
  %3481 = vmatpush2.bf16.msra.mxu0 0
  %3482 = vmatprep.subr.bf16.mxu0 0
  %3483 = vmatpush2.bf16.msra.mxu0 0
  %3484 = vmatprep.subr.bf16.mxu0 0
  %3485 = vmatpush2.bf16.msra.mxu0 0
  %3486 = vmatprep.subr.bf16.mxu0 0
  %3487 = vmatpush2.bf16.msra.mxu0 0
  %3488 = vmatprep.subr.bf16.mxu0 0
  %3489 = vmatpush2.bf16.msra.mxu0 0
  %3490 = vmatprep.subr.bf16.mxu0 0
  %3491 = vmatpush2.bf16.msra.mxu0 0
  %3492 = vmatprep.subr.bf16.mxu0 0
  %3493 = vmatpush2.bf16.msra.mxu0 0
  %3494 = vmatprep.mubr.bf16.mxu0 0
  %3495 = vmatmul.mubr.bf16.gmra.mxu0 %v2200
  %v3496 = vpop.f32.mrf.mxu0
  %v3497 = vadd.f32 %v3436, %v3496
  %v3498 = vpop.f32.mrf.mxu0
  %v3499 = vpop.f32.mrf.mxu0
  %v3500 = vadd.f32 %v3436, %v3499
  %v3501 = vpop.f32.mrf.mxu0
  %3502 = vdwg.mxu0
  %s3503 = scalar_lea.vmem %s41, 96
  %v3504 = vld [vmem:[%s3503] sm:$0xf]
  %v3505 = vld [vmem:[%s3503 + $0x4] sm:$0xf]
  %v3506 = vld [vmem:[%s3503 + $0x8] sm:$0xf]
  %v3507 = vld [vmem:[%s3503 + $0xc] sm:$0xf]
  %v3508 = vld [vmem:[%s3503 + $0x10] sm:$0xf]
  %v3509 = vld [vmem:[%s3503 + $0x14] sm:$0xf]
  %v3510 = vld [vmem:[%s3503 + $0x18] sm:$0xf]
  %v3511 = vld [vmem:[%s3503 + $0x1c] sm:$0xf]
  %s3512 = scalar_lea.vmem %s43, 3
  %v3513 = vld [vmem:[%s3512] sm:$0x1]
  %v3515 = vlaneseq
  %v3516 = vshrl.u32 %v3515, 7
  %v3517 = vsub.s32 0, %v3516
  %v3518 = vrot.slane %v3513, %v3517
  %v3528 = vunpack.c.l.b16 %v3504
  %v3529 = vunpack.c.l.b16 %v3505
  %v3530 = vunpack.c.l.b16 %v3506
  %v3531 = vunpack.c.l.b16 %v3507
  %v3532 = vunpack.c.l.b16 %v3508
  %v3533 = vunpack.c.l.b16 %v3509
  %v3534 = vunpack.c.l.b16 %v3510
  %v3535 = vunpack.c.l.b16 %v3511
  %v3536 = vpack.c.b16 %v3529, %v3528
  %v3537 = vpack.c.b16 %v3531, %v3530
  %v3538 = vpack.c.b16 %v3533, %v3532
  %v3539 = vpack.c.b16 %v3535, %v3534
  %3544 = vmatprep.subr.bf16.mxu0 0
  %3545 = vmatpush1.bf16.msra.mxu0 0
  %3546 = vmatprep.subr.bf16.mxu0 0
  %3547 = vmatpush1.bf16.msra.mxu0 0
  %3548 = vmatprep.subr.bf16.mxu0 0
  %3549 = vmatpush1.bf16.msra.mxu0 0
  %3550 = vmatprep.subr.bf16.mxu0 0
  %3551 = vmatpush1.bf16.msra.mxu0 0
  %3552 = vmatprep.subr.bf16.mxu0 0
  %3553 = vmatpush1.bf16.msra.mxu0 %v3539
  %3554 = vmatprep.subr.bf16.mxu0 0
  %3555 = vmatpush1.bf16.msra.mxu0 %v3538
  %3556 = vmatprep.subr.bf16.mxu0 0
  %3557 = vmatpush1.bf16.msra.mxu0 %v3537
  %3558 = vmatprep.subr.bf16.mxu0 0
  %3559 = vmatpush1.bf16.msra.mxu0 %v3536
  %3560 = vmatprep.subr.bf16.mxu0 0
  %3561 = vmatpush2.bf16.msra.mxu0 0
  %3562 = vmatprep.subr.bf16.mxu0 0
  %3563 = vmatpush2.bf16.msra.mxu0 0
  %3564 = vmatprep.subr.bf16.mxu0 0
  %3565 = vmatpush2.bf16.msra.mxu0 0
  %3566 = vmatprep.subr.bf16.mxu0 0
  %3567 = vmatpush2.bf16.msra.mxu0 0
  %3568 = vmatprep.subr.bf16.mxu0 0
  %3569 = vmatpush2.bf16.msra.mxu0 0
  %3570 = vmatprep.subr.bf16.mxu0 0
  %3571 = vmatpush2.bf16.msra.mxu0 0
  %3572 = vmatprep.subr.bf16.mxu0 0
  %3573 = vmatpush2.bf16.msra.mxu0 0
  %3574 = vmatprep.subr.bf16.mxu0 0
  %3575 = vmatpush2.bf16.msra.mxu0 0
  %3576 = vmatprep.mubr.bf16.mxu0 0
  %3577 = vmatmul.mubr.bf16.gmra.mxu0 %v2200
  %v3578 = vpop.f32.mrf.mxu0
  %v3579 = vadd.f32 %v3518, %v3578
  %v3580 = vpop.f32.mrf.mxu0
  %v3581 = vpop.f32.mrf.mxu0
  %v3582 = vadd.f32 %v3518, %v3581
  %v3583 = vpop.f32.mrf.mxu0
  %3584 = vdwg.mxu0
  %s3585 = scalar_lea.vmem %s45, 96
  %v3586 = vld [vmem:[%s3585] sm:$0xf]
  %v3587 = vld [vmem:[%s3585 + $0x4] sm:$0xf]
  %v3588 = vld [vmem:[%s3585 + $0x8] sm:$0xf]
  %v3589 = vld [vmem:[%s3585 + $0xc] sm:$0xf]
  %v3590 = vld [vmem:[%s3585 + $0x10] sm:$0xf]
  %v3591 = vld [vmem:[%s3585 + $0x14] sm:$0xf]
  %v3592 = vld [vmem:[%s3585 + $0x18] sm:$0xf]
  %v3593 = vld [vmem:[%s3585 + $0x1c] sm:$0xf]
  %s3594 = scalar_lea.vmem %s47, 3
  %v3595 = vld [vmem:[%s3594] sm:$0x1]
  %v3597 = vlaneseq
  %v3598 = vshrl.u32 %v3597, 7
  %v3599 = vsub.s32 0, %v3598
  %v3600 = vrot.slane %v3595, %v3599
  %v3610 = vunpack.c.l.b16 %v3586
  %v3611 = vunpack.c.l.b16 %v3587
  %v3612 = vunpack.c.l.b16 %v3588
  %v3613 = vunpack.c.l.b16 %v3589
  %v3614 = vunpack.c.l.b16 %v3590
  %v3615 = vunpack.c.l.b16 %v3591
  %v3616 = vunpack.c.l.b16 %v3592
  %v3617 = vunpack.c.l.b16 %v3593
  %v3618 = vpack.c.b16 %v3611, %v3610
  %v3619 = vpack.c.b16 %v3613, %v3612
  %v3620 = vpack.c.b16 %v3615, %v3614
  %v3621 = vpack.c.b16 %v3617, %v3616
  %3626 = vmatprep.subr.bf16.mxu0 0
  %3627 = vmatpush1.bf16.msra.mxu0 0
  %3628 = vmatprep.subr.bf16.mxu0 0
  %3629 = vmatpush1.bf16.msra.mxu0 0
  %3630 = vmatprep.subr.bf16.mxu0 0
  %3631 = vmatpush1.bf16.msra.mxu0 0
  %3632 = vmatprep.subr.bf16.mxu0 0
  %3633 = vmatpush1.bf16.msra.mxu0 0
  %3634 = vmatprep.subr.bf16.mxu0 0
  %3635 = vmatpush1.bf16.msra.mxu0 %v3621
  %3636 = vmatprep.subr.bf16.mxu0 0
  %3637 = vmatpush1.bf16.msra.mxu0 %v3620
  %3638 = vmatprep.subr.bf16.mxu0 0
  %3639 = vmatpush1.bf16.msra.mxu0 %v3619
  %3640 = vmatprep.subr.bf16.mxu0 0
  %3641 = vmatpush1.bf16.msra.mxu0 %v3618
  %3642 = vmatprep.subr.bf16.mxu0 0
  %3643 = vmatpush2.bf16.msra.mxu0 0
  %3644 = vmatprep.subr.bf16.mxu0 0
  %3645 = vmatpush2.bf16.msra.mxu0 0
  %3646 = vmatprep.subr.bf16.mxu0 0
  %3647 = vmatpush2.bf16.msra.mxu0 0
  %3648 = vmatprep.subr.bf16.mxu0 0
  %3649 = vmatpush2.bf16.msra.mxu0 0
  %3650 = vmatprep.subr.bf16.mxu0 0
  %3651 = vmatpush2.bf16.msra.mxu0 0
  %3652 = vmatprep.subr.bf16.mxu0 0
  %3653 = vmatpush2.bf16.msra.mxu0 0
  %3654 = vmatprep.subr.bf16.mxu0 0
  %3655 = vmatpush2.bf16.msra.mxu0 0
  %3656 = vmatprep.subr.bf16.mxu0 0
  %3657 = vmatpush2.bf16.msra.mxu0 0
  %3658 = vmatprep.mubr.bf16.mxu0 0
  %3659 = vmatmul.mubr.bf16.gmra.mxu0 %v2200
  %v3660 = vpop.f32.mrf.mxu0
  %v3661 = vadd.f32 %v3600, %v3660
  %v3662 = vpop.f32.mrf.mxu0
  %v3663 = vpop.f32.mrf.mxu0
  %v3664 = vadd.f32 %v3600, %v3663
  %v3665 = vpop.f32.mrf.mxu0
  %3666 = vdwg.mxu0
  %v3667 = vpack.c.bf16 %v3500, %v3497
  %v3668 = vpack.c.bf16 %v3582, %v3579
  %v3670 = vsel %vm402, %v3667, 0
  %v3673 = vsel %vm402, %v3668, 0
  %3675 = vmatprep.subr.bf16.mxu0 0
  %3676 = vmatpush1.bf16.xpose.msra.mxu0 0
  %3677 = vmatprep.subr.bf16.mxu0 0
  %3678 = vmatpush1.bf16.xpose.msra.mxu0 0
  %3679 = vmatprep.subr.bf16.mxu0 0
  %3680 = vmatpush1.bf16.xpose.msra.mxu0 0
  %3681 = vmatprep.subr.bf16.mxu0 0
  %3682 = vmatpush1.bf16.xpose.msra.mxu0 0
  %3683 = vmatprep.subr.bf16.mxu0 0
  %3684 = vmatpush1.bf16.xpose.msra.mxu0 0
  %3685 = vmatprep.subr.bf16.mxu0 0
  %3686 = vmatpush1.bf16.xpose.msra.mxu0 0
  %3687 = vmatprep.subr.bf16.mxu0 0
  %3688 = vmatpush1.bf16.xpose.msra.mxu0 0
  %3689 = vmatprep.subr.bf16.mxu0 0
  %3690 = vmatpush1.bf16.xpose.msra.mxu0 %v3673
  %3691 = vmatprep.subr.bf16.mxu0 0
  %3692 = vmatpush2.bf16.xpose.msra.mxu0 0
  %3693 = vmatprep.subr.bf16.mxu0 0
  %3694 = vmatpush2.bf16.xpose.msra.mxu0 0
  %3695 = vmatprep.subr.bf16.mxu0 0
  %3696 = vmatpush2.bf16.xpose.msra.mxu0 0
  %3697 = vmatprep.subr.bf16.mxu0 0
  %3698 = vmatpush2.bf16.xpose.msra.mxu0 0
  %3699 = vmatprep.subr.bf16.mxu0 0
  %3700 = vmatpush2.bf16.xpose.msra.mxu0 0
  %3701 = vmatprep.subr.bf16.mxu0 0
  %3702 = vmatpush2.bf16.xpose.msra.mxu0 0
  %3703 = vmatprep.subr.bf16.mxu0 0
  %3704 = vmatpush2.bf16.xpose.msra.mxu0 0
  %3705 = vmatprep.subr.bf16.mxu0 0
  %3706 = vmatpush2.bf16.xpose.msra.mxu0 0
  %3707 = vmatprep.mubr.bf16.mxu0 0
  %3708 = vmatmul.mubr.bf16.gmra.mxu0 %v3670
  %v3709 = vpop.f32.mrf.mxu0
  %v3710 = vadd.f32 0.0, %v3709
  %v3711 = vpop.f32.mrf.mxu0
  %v3712 = vpop.f32.mrf.mxu0
  %v3713 = vadd.f32 0.0, %v3712
  %v3714 = vpop.f32.mrf.mxu0
  %3715 = vdwg.mxu0
  %v3716 = vmul.f32 %v3710, 0.25
  %v3717 = vmul.f32 %v3713, 0.25
  %v3718 = vadd.f32 %v3716, %v153
  %v3719 = vadd.f32 %v3717, %v154
  %v3720 = vsel %vm402, %v3718, -inf
  %3721 = vmax.xlane.f32.xlu0 %v3720
  %v3722 = vpop.xlane.xlu0 %3721
  %v3723 = vsel %vm402, %v3719, -inf
  %3724 = vmax.xlane.f32.xlu0 %v3723
  %v3725 = vpop.xlane.xlu0 %3724
  %v3726 = vsub.f32 %v3718, %v3722
  %v3727 = vsub.f32 %v3719, %v3725
  %v3728 = vmul.f32 %v3726, 1.442695
  %v3729 = vpow.pop %v3728
  %v3730 = vmul.f32 %v3727, 1.442695
  %v3731 = vpow.pop %v3730
  %v3732 = vsel %vm402, %v3729, 0.0
  %3733 = vadd.xlane.f32.xlu0 %v3732
  %v3734 = vpop.xlane.xlu0 %3733
  %v3735 = vsel %vm402, %v3731, 0.0
  %3736 = vadd.xlane.f32.xlu0 %v3735
  %v3737 = vpop.xlane.xlu0 %3736
  %v3738 = vrcp.pop %v3734
  %v3739 = vrcp.pop %v3737
  %v3740 = vmul.f32 %v3729, %v3738
  %v3741 = vmul.f32 %v3731, %v3739
  %v3742 = vpack.c.bf16 %v3741, %v3740
  %v3743 = vpack.c.bf16 %v3664, %v3661
  %v3745 = vsel %vm402, %v3742, 0
  %3747 = vmatprep.subr.bf16.mxu0 0
  %3748 = vmatpush1.bf16.msra.mxu0 0
  %3749 = vmatprep.subr.bf16.mxu0 0
  %3750 = vmatpush1.bf16.msra.mxu0 0
  %3751 = vmatprep.subr.bf16.mxu0 0
  %3752 = vmatpush1.bf16.msra.mxu0 0
  %3753 = vmatprep.subr.bf16.mxu0 0
  %3754 = vmatpush1.bf16.msra.mxu0 0
  %3755 = vmatprep.subr.bf16.mxu0 0
  %3756 = vmatpush1.bf16.msra.mxu0 0
  %3757 = vmatprep.subr.bf16.mxu0 0
  %3758 = vmatpush1.bf16.msra.mxu0 0
  %3759 = vmatprep.subr.bf16.mxu0 0
  %3760 = vmatpush1.bf16.msra.mxu0 0
  %3761 = vmatprep.subr.bf16.mxu0 0
  %3762 = vmatpush1.bf16.msra.mxu0 %v3743
  %3763 = vmatprep.subr.bf16.mxu0 0
  %3764 = vmatpush2.bf16.msra.mxu0 0
  %3765 = vmatprep.subr.bf16.mxu0 0
  %3766 = vmatpush2.bf16.msra.mxu0 0
  %3767 = vmatprep.subr.bf16.mxu0 0
  %3768 = vmatpush2.bf16.msra.mxu0 0
  %3769 = vmatprep.subr.bf16.mxu0 0
  %3770 = vmatpush2.bf16.msra.mxu0 0
  %3771 = vmatprep.subr.bf16.mxu0 0
  %3772 = vmatpush2.bf16.msra.mxu0 0
  %3773 = vmatprep.subr.bf16.mxu0 0
  %3774 = vmatpush2.bf16.msra.mxu0 0
  %3775 = vmatprep.subr.bf16.mxu0 0
  %3776 = vmatpush2.bf16.msra.mxu0 0
  %3777 = vmatprep.subr.bf16.mxu0 0
  %3778 = vmatpush2.bf16.msra.mxu0 0
  %3779 = vmatprep.mubr.bf16.mxu0 0
  %3780 = vmatmul.mubr.bf16.gmra.mxu0 %v3745
  %v3781 = vpop.f32.mrf.mxu0
  %v3782 = vadd.f32 0.0, %v3781
  %v3783 = vpop.f32.mrf.mxu0
  %v3784 = vpop.f32.mrf.mxu0
  %v3785 = vadd.f32 0.0, %v3784
  %v3786 = vpop.f32.mrf.mxu0
  %3787 = vdwg.mxu0
  %v3788 = vpack.c.bf16 %v3785, %v3782
  %s3789 = scalar_lea.vmem %s49, 24
  %v3790 = vld [vmem:[%s3789] sm:$0xf]
  %v3791 = vld [vmem:[%s3789 + $0x4] sm:$0xf]
  %v3794 = vunpack.c.l.b16 %v3790
  %v3795 = vunpack.c.l.b16 %v3791
  %v3796 = vpack.c.b16 %v3795, %v3794
  %v3799 = vsel %vm402, %v3788, 0
  %3801 = vmatprep.subr.bf16.mxu0 0
  %3802 = vmatpush1.bf16.msra.mxu0 0
  %3803 = vmatprep.subr.bf16.mxu0 0
  %3804 = vmatpush1.bf16.msra.mxu0 0
  %3805 = vmatprep.subr.bf16.mxu0 0
  %3806 = vmatpush1.bf16.msra.mxu0 0
  %3807 = vmatprep.subr.bf16.mxu0 0
  %3808 = vmatpush1.bf16.msra.mxu0 0
  %3809 = vmatprep.subr.bf16.mxu0 0
  %3810 = vmatpush1.bf16.msra.mxu0 0
  %3811 = vmatprep.subr.bf16.mxu0 0
  %3812 = vmatpush1.bf16.msra.mxu0 0
  %3813 = vmatprep.subr.bf16.mxu0 0
  %3814 = vmatpush1.bf16.msra.mxu0 0
  %3815 = vmatprep.subr.bf16.mxu0 0
  %3816 = vmatpush1.bf16.msra.mxu0 %v3796
  %3817 = vmatprep.subr.bf16.mxu0 0
  %3818 = vmatpush2.bf16.msra.mxu0 0
  %3819 = vmatprep.subr.bf16.mxu0 0
  %3820 = vmatpush2.bf16.msra.mxu0 0
  %3821 = vmatprep.subr.bf16.mxu0 0
  %3822 = vmatpush2.bf16.msra.mxu0 0
  %3823 = vmatprep.subr.bf16.mxu0 0
  %3824 = vmatpush2.bf16.msra.mxu0 0
  %3825 = vmatprep.subr.bf16.mxu0 0
  %3826 = vmatpush2.bf16.msra.mxu0 0
  %3827 = vmatprep.subr.bf16.mxu0 0
  %3828 = vmatpush2.bf16.msra.mxu0 0
  %3829 = vmatprep.subr.bf16.mxu0 0
  %3830 = vmatpush2.bf16.msra.mxu0 0
  %3831 = vmatprep.subr.bf16.mxu0 0
  %3832 = vmatpush2.bf16.msra.mxu0 0
  %3833 = vmatprep.mubr.bf16.mxu0 0
  %3834 = vmatmul.mubr.bf16.gmra.mxu0 %v3799
  %v3835 = vpop.f32.mrf.mxu0
  %v3836 = vadd.f32 0.0, %v3835
  %v3837 = vpop.f32.mrf.mxu0
  %v3838 = vpop.f32.mrf.mxu0
  %v3839 = vadd.f32 0.0, %v3838
  %v3840 = vpop.f32.mrf.mxu0
  %3841 = vdwg.mxu0
  %v3842 = vadd.f32 %v3419, %v3836
  %v3843 = vadd.f32 %v3420, %v3839
  %v3844 = vld [vmem:[%s51] sm:$0x1]
  %v3846 = vlaneseq
  %v3847 = vshrl.u32 %v3846, 7
  %v3848 = vsub.s32 0, %v3847
  %v3849 = vrot.slane %v3844, %v3848
  %v3851 = vadd.f32 %v3842, %v3849
  %v3852 = vadd.f32 %v3843, %v3849
  %v3853 = vadd.f32 %v2157, %v3851
  %v3854 = vadd.f32 %v2158, %v3852
  %v3855 = vld [vmem:[%s53] sm:$0x1]
  %v3856 = vld [vmem:[%s55] sm:$0x1]
  %v3857 = vsel %vm195, %v3853, 0.0
  %3858 = vadd.xlane.f32.xlu0 %v3857
  %v3859 = vpop.xlane.xlu0 %3858
  %v3860 = vsel %vm195, %v3854, 0.0
  %3861 = vadd.xlane.f32.xlu0 %v3860
  %v3862 = vpop.xlane.xlu0 %3861
  %v3863 = vmul.f32 %v3859, %v1861
  %v3864 = vmul.f32 %v3862, %v1861
  %v3865 = vsub.f32 %v3853, %v3863
  %v3866 = vsub.f32 %v3854, %v3864
  %v3867 = vmul.f32 %v3865, %v3865
  %v3868 = vmul.f32 %v3866, %v3866
  %v3869 = vsel %vm195, %v3867, 0.0
  %3870 = vadd.xlane.f32.xlu0 %v3869
  %v3871 = vpop.xlane.xlu0 %3870
  %v3872 = vsel %vm195, %v3868, 0.0
  %3873 = vadd.xlane.f32.xlu0 %v3872
  %v3874 = vpop.xlane.xlu0 %3873
  %v3875 = vmul.f32 %v3871, %v1861
  %v3876 = vmul.f32 %v3874, %v1861
  %v3877 = vadd.f32 %v3875, 1e-05
  %v3878 = vadd.f32 %v3876, 1e-05
  %v3879 = vrsqrt.pop %v3877
  %v3880 = vrsqrt.pop %v3878
  %v3881 = vmul.f32 %v3865, %v3879
  %v3882 = vmul.f32 %v3866, %v3880
  %v3884 = vlaneseq
  %v3885 = vshrl.u32 %v3884, 7
  %v3886 = vsub.s32 0, %v3885
  %v3887 = vrot.slane %v3855, %v3886
  %v3889 = vmul.f32 %v3881, %v3887
  %v3890 = vmul.f32 %v3882, %v3887
  %v3892 = vlaneseq
  %v3893 = vshrl.u32 %v3892, 7
  %v3894 = vsub.s32 0, %v3893
  %v3895 = vrot.slane %v3856, %v3894
  %v3897 = vadd.f32 %v3889, %v3895
  %v3898 = vadd.f32 %v3890, %v3895
  %v3899 = vpack.c.bf16 %v3898, %v3897
  %v3900 = vld [vmem:[%s57] sm:$0xf]
  %v3901 = vld [vmem:[%s57 + $0x4] sm:$0xf]
  %v3902 = vld [vmem:[%s57 + $0x8] sm:$0xf]
  %v3903 = vld [vmem:[%s57 + $0xc] sm:$0xf]
  %v3904 = vld [vmem:[%s57 + $0x10] sm:$0xf]
  %v3905 = vld [vmem:[%s57 + $0x14] sm:$0xf]
  %v3906 = vld [vmem:[%s57 + $0x18] sm:$0xf]
  %v3907 = vld [vmem:[%s57 + $0x1c] sm:$0xf]
  %v3908 = vld [vmem:[%s59] sm:$0x1]
  %v3910 = vlaneseq
  %v3911 = vshrl.u32 %v3910, 7
  %v3912 = vsub.s32 0, %v3911
  %v3913 = vrot.slane %v3908, %v3912
  %v3923 = vunpack.c.l.b16 %v3900
  %v3924 = vunpack.c.l.b16 %v3901
  %v3925 = vunpack.c.l.b16 %v3902
  %v3926 = vunpack.c.l.b16 %v3903
  %v3927 = vunpack.c.l.b16 %v3904
  %v3928 = vunpack.c.l.b16 %v3905
  %v3929 = vunpack.c.l.b16 %v3906
  %v3930 = vunpack.c.l.b16 %v3907
  %v3931 = vpack.c.b16 %v3924, %v3923
  %v3932 = vpack.c.b16 %v3926, %v3925
  %v3933 = vpack.c.b16 %v3928, %v3927
  %v3934 = vpack.c.b16 %v3930, %v3929
  %v3940 = vsel %vm195, %v3899, 0
  %3942 = vmatprep.subr.bf16.mxu0 0
  %3943 = vmatpush1.bf16.msra.mxu0 0
  %3944 = vmatprep.subr.bf16.mxu0 0
  %3945 = vmatpush1.bf16.msra.mxu0 0
  %3946 = vmatprep.subr.bf16.mxu0 0
  %3947 = vmatpush1.bf16.msra.mxu0 0
  %3948 = vmatprep.subr.bf16.mxu0 0
  %3949 = vmatpush1.bf16.msra.mxu0 0
  %3950 = vmatprep.subr.bf16.mxu0 0
  %3951 = vmatpush1.bf16.msra.mxu0 %v3934
  %3952 = vmatprep.subr.bf16.mxu0 0
  %3953 = vmatpush1.bf16.msra.mxu0 %v3933
  %3954 = vmatprep.subr.bf16.mxu0 0
  %3955 = vmatpush1.bf16.msra.mxu0 %v3932
  %3956 = vmatprep.subr.bf16.mxu0 0
  %3957 = vmatpush1.bf16.msra.mxu0 %v3931
  %3958 = vmatprep.subr.bf16.mxu0 0
  %3959 = vmatpush2.bf16.msra.mxu0 0
  %3960 = vmatprep.subr.bf16.mxu0 0
  %3961 = vmatpush2.bf16.msra.mxu0 0
  %3962 = vmatprep.subr.bf16.mxu0 0
  %3963 = vmatpush2.bf16.msra.mxu0 0
  %3964 = vmatprep.subr.bf16.mxu0 0
  %3965 = vmatpush2.bf16.msra.mxu0 0
  %3966 = vmatprep.subr.bf16.mxu0 0
  %3967 = vmatpush2.bf16.msra.mxu0 0
  %3968 = vmatprep.subr.bf16.mxu0 0
  %3969 = vmatpush2.bf16.msra.mxu0 0
  %3970 = vmatprep.subr.bf16.mxu0 0
  %3971 = vmatpush2.bf16.msra.mxu0 0
  %3972 = vmatprep.subr.bf16.mxu0 0
  %3973 = vmatpush2.bf16.msra.mxu0 0
  %3974 = vmatprep.mubr.bf16.mxu0 0
  %3975 = vmatmul.mubr.bf16.gmra.mxu0 %v3940
  %v3976 = vpop.f32.mrf.mxu0
  %v3977 = vadd.f32 %v3913, %v3976
  %v3978 = vpop.f32.mrf.mxu0
  %v3979 = vpop.f32.mrf.mxu0
  %v3980 = vadd.f32 %v3913, %v3979
  %v3981 = vpop.f32.mrf.mxu0
  %3982 = vdwg.mxu0
  %v3983 = vmul.f32 %v3977, %v3977
  %v3984 = vmul.f32 %v3980, %v3980
  %v3985 = vmul.f32 %v3977, %v3983
  %v3986 = vmul.f32 %v3980, %v3984
  %v3987 = vmul.f32 %v3985, 0.044715
  %v3988 = vmul.f32 %v3986, 0.044715
  %v3989 = vadd.f32 %v3977, %v3987
  %v3990 = vadd.f32 %v3980, %v3988
  %v3991 = vmul.f32 %v3989, 0.7978846
  %v3992 = vmul.f32 %v3990, 0.7978846
  %v3993 = vtanh.pop %v3991
  %v3994 = vtanh.pop %v3992
  %v3995 = vadd.f32 %v3993, 1.0
  %v3996 = vadd.f32 %v3994, 1.0
  %v3997 = vmul.f32 %v3995, 0.5
  %v3998 = vmul.f32 %v3996, 0.5
  %v3999 = vmul.f32 %v3977, %v3997
  %v4000 = vmul.f32 %v3980, %v3998
  %v4001 = vpack.c.bf16 %v4000, %v3999
  %v4002 = vld [vmem:[%s61] sm:$0xf]
  %v4003 = vld [vmem:[%s61 + $0x4] sm:$0xf]
  %v4004 = vld [vmem:[%s61 + $0x8] sm:$0xf]
  %v4005 = vld [vmem:[%s61 + $0xc] sm:$0xf]
  %v4006 = vld [vmem:[%s61 + $0x10] sm:$0xf]
  %v4007 = vld [vmem:[%s61 + $0x14] sm:$0xf]
  %v4008 = vld [vmem:[%s61 + $0x18] sm:$0xf]
  %v4009 = vld [vmem:[%s61 + $0x1c] sm:$0xf]
  %v4010 = vld [vmem:[%s61 + $0x20] sm:$0xf]
  %v4011 = vld [vmem:[%s61 + $0x24] sm:$0xf]
  %v4012 = vld [vmem:[%s61 + $0x28] sm:$0xf]
  %v4013 = vld [vmem:[%s61 + $0x2c] sm:$0xf]
  %v4014 = vld [vmem:[%s61 + $0x30] sm:$0xf]
  %v4015 = vld [vmem:[%s61 + $0x34] sm:$0xf]
  %v4016 = vld [vmem:[%s61 + $0x38] sm:$0xf]
  %v4017 = vld [vmem:[%s61 + $0x3c] sm:$0xf]
  %v4018 = vld [vmem:[%s63] sm:$0x1]
  %v4020 = vlaneseq
  %v4021 = vshrl.u32 %v4020, 7
  %v4022 = vsub.s32 0, %v4021
  %v4023 = vrot.slane %v4018, %v4022
  %v4041 = vunpack.c.l.b16 %v4002
  %v4042 = vunpack.c.l.b16 %v4003
  %v4043 = vunpack.c.l.b16 %v4004
  %v4044 = vunpack.c.l.b16 %v4005
  %v4045 = vunpack.c.l.b16 %v4006
  %v4046 = vunpack.c.l.b16 %v4007
  %v4047 = vunpack.c.l.b16 %v4008
  %v4048 = vunpack.c.l.b16 %v4009
  %v4049 = vunpack.c.l.b16 %v4010
  %v4050 = vunpack.c.l.b16 %v4011
  %v4051 = vunpack.c.l.b16 %v4012
  %v4052 = vunpack.c.l.b16 %v4013
  %v4053 = vunpack.c.l.b16 %v4014
  %v4054 = vunpack.c.l.b16 %v4015
  %v4055 = vunpack.c.l.b16 %v4016
  %v4056 = vunpack.c.l.b16 %v4017
  %v4057 = vpack.c.b16 %v4042, %v4041
  %v4058 = vpack.c.b16 %v4044, %v4043
  %v4059 = vpack.c.b16 %v4046, %v4045
  %v4060 = vpack.c.b16 %v4048, %v4047
  %v4061 = vpack.c.b16 %v4050, %v4049
  %v4062 = vpack.c.b16 %v4052, %v4051
  %v4063 = vpack.c.b16 %v4054, %v4053
  %v4064 = vpack.c.b16 %v4056, %v4055
  %4073 = vmatprep.subr.bf16.mxu0 0
  %4074 = vmatpush1.bf16.msra.mxu0 %v4064
  %4075 = vmatprep.subr.bf16.mxu0 0
  %4076 = vmatpush1.bf16.msra.mxu0 %v4063
  %4077 = vmatprep.subr.bf16.mxu0 0
  %4078 = vmatpush1.bf16.msra.mxu0 %v4062
  %4079 = vmatprep.subr.bf16.mxu0 0
  %4080 = vmatpush1.bf16.msra.mxu0 %v4061
  %4081 = vmatprep.subr.bf16.mxu0 0
  %4082 = vmatpush1.bf16.msra.mxu0 %v4060
  %4083 = vmatprep.subr.bf16.mxu0 0
  %4084 = vmatpush1.bf16.msra.mxu0 %v4059
  %4085 = vmatprep.subr.bf16.mxu0 0
  %4086 = vmatpush1.bf16.msra.mxu0 %v4058
  %4087 = vmatprep.subr.bf16.mxu0 0
  %4088 = vmatpush1.bf16.msra.mxu0 %v4057
  %4089 = vmatprep.subr.bf16.mxu0 0
  %4090 = vmatpush2.bf16.msra.mxu0 0
  %4091 = vmatprep.subr.bf16.mxu0 0
  %4092 = vmatpush2.bf16.msra.mxu0 0
  %4093 = vmatprep.subr.bf16.mxu0 0
  %4094 = vmatpush2.bf16.msra.mxu0 0
  %4095 = vmatprep.subr.bf16.mxu0 0
  %4096 = vmatpush2.bf16.msra.mxu0 0
  %4097 = vmatprep.subr.bf16.mxu0 0
  %4098 = vmatpush2.bf16.msra.mxu0 0
  %4099 = vmatprep.subr.bf16.mxu0 0
  %4100 = vmatpush2.bf16.msra.mxu0 0
  %4101 = vmatprep.subr.bf16.mxu0 0
  %4102 = vmatpush2.bf16.msra.mxu0 0
  %4103 = vmatprep.subr.bf16.mxu0 0
  %4104 = vmatpush2.bf16.msra.mxu0 0
  %4105 = vmatprep.mubr.bf16.mxu0 0
  %4106 = vmatmul.mubr.bf16.gmra.mxu0 %v4001
  %v4107 = vpop.f32.mrf.mxu0
  %v4108 = vadd.f32 %v4023, %v4107
  %v4109 = vpop.f32.mrf.mxu0
  %v4110 = vpop.f32.mrf.mxu0
  %v4111 = vadd.f32 %v4023, %v4110
  %v4112 = vpop.f32.mrf.mxu0
  %4113 = vdwg.mxu0
  %v4114 = vadd.f32 %v3897, %v4108
  %v4115 = vadd.f32 %v3898, %v4111
  %v4116 = vld [vmem:[%s65] sm:$0x1]
  %v4117 = vld [vmem:[%s67] sm:$0x1]
  %v4118 = vsel %vm195, %v4114, 0.0
  %4119 = vadd.xlane.f32.xlu0 %v4118
  %v4120 = vpop.xlane.xlu0 %4119
  %v4121 = vsel %vm195, %v4115, 0.0
  %4122 = vadd.xlane.f32.xlu0 %v4121
  %v4123 = vpop.xlane.xlu0 %4122
  %v4124 = vmul.f32 %v4120, %v1861
  %v4125 = vmul.f32 %v4123, %v1861
  %v4126 = vsub.f32 %v4114, %v4124
  %v4127 = vsub.f32 %v4115, %v4125
  %v4128 = vmul.f32 %v4126, %v4126
  %v4129 = vmul.f32 %v4127, %v4127
  %v4130 = vsel %vm195, %v4128, 0.0
  %4131 = vadd.xlane.f32.xlu0 %v4130
  %v4132 = vpop.xlane.xlu0 %4131
  %v4133 = vsel %vm195, %v4129, 0.0
  %4134 = vadd.xlane.f32.xlu0 %v4133
  %v4135 = vpop.xlane.xlu0 %4134
  %v4136 = vmul.f32 %v4132, %v1861
  %v4137 = vmul.f32 %v4135, %v1861
  %v4138 = vadd.f32 %v4136, 1e-05
  %v4139 = vadd.f32 %v4137, 1e-05
  %v4140 = vrsqrt.pop %v4138
  %v4141 = vrsqrt.pop %v4139
  %v4142 = vmul.f32 %v4126, %v4140
  %v4143 = vmul.f32 %v4127, %v4141
  %v4145 = vlaneseq
  %v4146 = vshrl.u32 %v4145, 7
  %v4147 = vsub.s32 0, %v4146
  %v4148 = vrot.slane %v4116, %v4147
  %v4150 = vmul.f32 %v4142, %v4148
  %v4151 = vmul.f32 %v4143, %v4148
  %v4153 = vlaneseq
  %v4154 = vshrl.u32 %v4153, 7
  %v4155 = vsub.s32 0, %v4154
  %v4156 = vrot.slane %v4117, %v4155
  %v4158 = vadd.f32 %v4150, %v4156
  %v4159 = vadd.f32 %v4151, %v4156
  %v4160 = vpack.c.bf16 %v4159, %v4158
  %v4161 = vld [vmem:[%s69] sm:$0xf]
  %v4162 = vld [vmem:[%s69 + $0x4] sm:$0xf]
  %v4163 = vld [vmem:[%s69 + $0x8] sm:$0xf]
  %v4164 = vld [vmem:[%s69 + $0xc] sm:$0xf]
  %v4165 = vld [vmem:[%s69 + $0x10] sm:$0xf]
  %v4166 = vld [vmem:[%s69 + $0x14] sm:$0xf]
  %v4167 = vld [vmem:[%s69 + $0x18] sm:$0xf]
  %v4168 = vld [vmem:[%s69 + $0x1c] sm:$0xf]
  %v4169 = vld [vmem:[%s71] sm:$0x1]
  %v4171 = vlaneseq
  %v4172 = vshrl.u32 %v4171, 7
  %v4173 = vsub.s32 0, %v4172
  %v4174 = vrot.slane %v4169, %v4173
  %v4184 = vunpack.c.l.b16 %v4161
  %v4185 = vunpack.c.l.b16 %v4162
  %v4186 = vunpack.c.l.b16 %v4163
  %v4187 = vunpack.c.l.b16 %v4164
  %v4188 = vunpack.c.l.b16 %v4165
  %v4189 = vunpack.c.l.b16 %v4166
  %v4190 = vunpack.c.l.b16 %v4167
  %v4191 = vunpack.c.l.b16 %v4168
  %v4192 = vpack.c.b16 %v4185, %v4184
  %v4193 = vpack.c.b16 %v4187, %v4186
  %v4194 = vpack.c.b16 %v4189, %v4188
  %v4195 = vpack.c.b16 %v4191, %v4190
  %v4201 = vsel %vm195, %v4160, 0
  %4203 = vmatprep.subr.bf16.mxu0 0
  %4204 = vmatpush1.bf16.msra.mxu0 0
  %4205 = vmatprep.subr.bf16.mxu0 0
  %4206 = vmatpush1.bf16.msra.mxu0 0
  %4207 = vmatprep.subr.bf16.mxu0 0
  %4208 = vmatpush1.bf16.msra.mxu0 0
  %4209 = vmatprep.subr.bf16.mxu0 0
  %4210 = vmatpush1.bf16.msra.mxu0 0
  %4211 = vmatprep.subr.bf16.mxu0 0
  %4212 = vmatpush1.bf16.msra.mxu0 %v4195
  %4213 = vmatprep.subr.bf16.mxu0 0
  %4214 = vmatpush1.bf16.msra.mxu0 %v4194
  %4215 = vmatprep.subr.bf16.mxu0 0
  %4216 = vmatpush1.bf16.msra.mxu0 %v4193
  %4217 = vmatprep.subr.bf16.mxu0 0
  %4218 = vmatpush1.bf16.msra.mxu0 %v4192
  %4219 = vmatprep.subr.bf16.mxu0 0
  %4220 = vmatpush2.bf16.msra.mxu0 0
  %4221 = vmatprep.subr.bf16.mxu0 0
  %4222 = vmatpush2.bf16.msra.mxu0 0
  %4223 = vmatprep.subr.bf16.mxu0 0
  %4224 = vmatpush2.bf16.msra.mxu0 0
  %4225 = vmatprep.subr.bf16.mxu0 0
  %4226 = vmatpush2.bf16.msra.mxu0 0
  %4227 = vmatprep.subr.bf16.mxu0 0
  %4228 = vmatpush2.bf16.msra.mxu0 0
  %4229 = vmatprep.subr.bf16.mxu0 0
  %4230 = vmatpush2.bf16.msra.mxu0 0
  %4231 = vmatprep.subr.bf16.mxu0 0
  %4232 = vmatpush2.bf16.msra.mxu0 0
  %4233 = vmatprep.subr.bf16.mxu0 0
  %4234 = vmatpush2.bf16.msra.mxu0 0
  %4235 = vmatprep.mubr.bf16.mxu0 0
  %4236 = vmatmul.mubr.bf16.gmra.mxu0 %v4201
  %v4237 = vpop.f32.mrf.mxu0
  %v4238 = vadd.f32 %v4174, %v4237
  %v4239 = vpop.f32.mrf.mxu0
  %v4240 = vpop.f32.mrf.mxu0
  %v4241 = vadd.f32 %v4174, %v4240
  %v4242 = vpop.f32.mrf.mxu0
  %4243 = vdwg.mxu0
  %4244 = vst [vmem:[%s73] sm:$0xff] %v4238
  %4245 = vst [vmem:[%s73 + $0x8] sm:$0xff] %v4241
  // Predicated region
  $region146: #{absa_forward.1} parent=0 // pred_check
    _
  $region147: #{absa_forward.1} parent=0 // pred_check_branch
    %4247 = sbr.rel (0) target = $region149
  $region148: #{absa_forward.1} parent=0 // pred_region
    _
  $region149: #{absa_forward.1} parent=0 // pred_fallthru
    _
  // Predicated region
  $region150: #{absa_forward.1} parent=0 // pred_check
    _
  $region151: #{absa_forward.1} parent=0 // pred_check_branch
    %4249 = sbr.rel (0) target = $region153
  $region152: #{absa_forward.1} parent=0 // pred_region
    _
  $region153: #{absa_forward.1} parent=0 // pred_fallthru
    _

</llo_original>
